<compile_context>
chip_gen: v7x
topology: tpu7x:2x2x1
jax: 0.10.0
libtpu: 0.0.40
codegen_flags: <defaults>
</compile_context>

<pallas_src>
import functools

import jax
import jax.numpy as jnp
from jax.experimental import pallas as pl
from jax.experimental.pallas import tpu as pltpu

NORM_EPS = 1e-5


def _round_up(x, m):
    return (x + m - 1) // m * m


def _vmem_capacity_bytes():
    try:
        return int(pltpu.get_tpu_info().vmem_capacity_bytes)
    except Exception:
        return 64 * 1024 * 1024  # v7x-safe fallback


def _is_v5():
    try:
        return "v5" in jax.devices()[0].device_kind.lower()
    except Exception:
        return False


def _pick_row_tile(oh, ow, max_rows=None, target_m=2048):
    """Largest divisor R of oh with R*ow <= target_m and R*ow % 8 == 0.

    The alignment requirement is waived when R == oh (single tile: the block
    second-to-last dim equals the full array dim, which is always legal).
    """
    cap = oh if max_rows is None else max(1, min(max_rows, oh))
    best = None
    for r in range(1, oh + 1):
        if oh % r or r > cap:
            continue
        if r * ow > target_m:
            continue
        if (r * ow) % 8 != 0 and r != oh:
            continue
        best = r
    return best if best is not None else oh


# ---------------------------------------------------------------------------
# Pallas kernel: hoisted-relayout tap matmuls -> scratch accumulate -> bias+ReLU
# ---------------------------------------------------------------------------
def _conv_bn_relu_kernel(x_ref, w_ref, b_ref, o_ref, buf_ref, acc_ref, *,
                         taps, buf_keys, stride, rows, ow, a_halo, cin):
    # x_ref  : (n_phase, PH, PW, Cin)      bf16  resident phase-decomposed planes
    # w_ref  : (KH*KW, Cin, TCout)         bf16  BN-scale-folded weights
    # b_ref  : (1, TCout)                  f32   BN bias
    # o_ref  : (1, rows*ow, TCout)         bf16  output row tile
    # buf_ref: (n_buf, (rows+a_halo)*ow, Cin) bf16  hoisted shifted LHS operands
    # acc_ref: (rows*ow, TCout)            f32   accumulator
    r = pl.program_id(2)                   # row-tile index (axis 2 in both orderings)
    row0 = r * rows
    if rows % 8 == 0:
        row0 = pl.multiple_of(row0, 8)
    m = rows * ow
    src_rows = rows + a_halo

    # Hoisted dj/phase relayout: build each shifted, reshaped 2-D operand once
    # per grid step instead of once per tap.
    buf_index = {}
    for bi, (p, b0) in enumerate(buf_keys):
        win = x_ref[p, pl.ds(row0, src_rows), pl.ds(b0, ow), :]   # (src_rows, ow, cin)
        buf_ref[bi] = win.reshape(src_rows * ow, cin)
        buf_index[(p, b0)] = bi

    # Per-tap MXU matmuls accumulated in VMEM scratch; first tap writes (no
    # zero-fill + extra full-tile add).
    # TODO(synk): for cin % 128 == 0 concatenate horizontal taps (K=3*cin) to fill
    #             the 256-deep MXU contraction on v6e/v7x.
    for t, (di, dj) in enumerate(taps):
        p = (di % stride) * stride + (dj % stride)
        a0 = di // stride
        b0 = dj // stride
        bi = buf_index[(p, b0)]
        lhs = buf_ref[bi, a0 * ow:a0 * ow + m, :]                 # (m, cin) bf16
        part = jnp.dot(lhs, w_ref[t], preferred_element_type=jnp.float32)
        if t == 0:
            acc_ref[...] = part
        else:
            acc_ref[...] += part

    # Epilogue in f32, store bf16 (halves HBM writeback).
    o_ref[0] = jnp.maximum(acc_ref[...] + b_ref[...], 0.0).astype(o_ref.dtype)


# ---------------------------------------------------------------------------
# XLA fallback: grouped convs and tiny-Cin stem convs
# ---------------------------------------------------------------------------
def _conv_bn_relu_xla_nhwc(x_nhwc, conv_weight, gamma, beta, mean, var, *,
                           stride, groups, out_dtype):
    scale = gamma / jnp.sqrt(var + NORM_EPS)
    bias = beta - mean * scale
    w_hwio = jnp.transpose(conv_weight, (2, 3, 1, 0)).astype(jnp.float32)
    y = jax.lax.conv_general_dilated(
        x_nhwc.astype(jnp.float32), w_hwio,
        window_strides=(stride, stride), padding=((1, 1), (1, 1)),
        dimension_numbers=("NHWC", "HWIO", "NHWC"),
        feature_group_count=groups)
    y = jnp.maximum(y * scale + bias, 0.0)
    return y.astype(out_dtype)


# ---------------------------------------------------------------------------
# NHWC core (preferred entry point when chaining MedViT blocks)
# ---------------------------------------------------------------------------
def conv_bn_relu_nhwc(x_nhwc, conv_weight, gamma, beta, running_mean, running_var,
                      *, stride, groups=1, out_dtype=jnp.bfloat16,
                      keep_padded_channels=False, max_tile_rows=None):
    N, H, W, Cin = x_nhwc.shape
    Cout, Cin_w, KH, KW = conv_weight.shape
    s = int(stride)
    pad = 1  # ConvBNReLU hard-codes padding=1

    # Tiny-Cin stem conv or grouped conv -> XLA path.
    if groups != 1 or Cin < 16:
        return _conv_bn_relu_xla_nhwc(x_nhwc, conv_weight, gamma, beta,
                                      running_mean, running_var, stride=s,
                                      groups=groups, out_dtype=out_dtype)
    assert Cin_w == Cin, "unexpected weight shape for groups=1"

    Hp, Wp = H + 2 * pad, W + 2 * pad
    OH = (Hp - KH) // s + 1
    OW = (Wp - KW) // s + 1

    # ---- BN fold (eval mode): scale into weights, bias kept separate ----------
    scale = gamma / jnp.sqrt(running_var + NORM_EPS)              # (Cout,)
    bias = beta - running_mean * scale                            # (Cout,)

    # ---- lane-dense, device-aware Cout tiling ---------------------------------
    cout_pad = max(_round_up(Cout, 128), 128)
    if (not _is_v5()) and cout_pad % 256 == 0:
        tcout = 256                     # 256-wide MXU on v6e/v7x
    else:
        tcout = 128                     # v5e MXU is 128 wide
    n_ct = cout_pad // tcout

    w_sc = conv_weight * scale[:, None, None, None]
    w_t = jnp.transpose(w_sc, (2, 3, 1, 0)).reshape(KH * KW, Cin, Cout)
    w_t = jnp.pad(w_t, ((0, 0), (0, 0), (0, cout_pad - Cout))).astype(jnp.bfloat16)
    b_pad = jnp.pad(bias, (0, cout_pad - Cout)).reshape(1, cout_pad).astype(jnp.float32)

    # ---- spatial pad + stride-phase decomposition (no HBM im2col) -------------
    A = (KH - 1) // s
    B = (KW - 1) // s
    PH = OH + A
    PW = OW + B
    xpad = jnp.pad(x_nhwc, ((0, 0), (pad, pad), (pad, pad), (0, 0)))
    planes = []
    for p in range(s):
        for q in range(s):
            xpq = xpad[:, p::s, q::s, :][:, :PH, :PW, :]
            dh, dw = PH - xpq.shape[1], PW - xpq.shape[2]
            if dh or dw:
                xpq = jnp.pad(xpq, ((0, 0), (0, dh), (0, dw), (0, 0)))
            planes.append(xpq)
    n_phase = s * s
    x_ph = jnp.stack(planes, axis=1).astype(jnp.bfloat16).reshape(
        N * n_phase, PH, PW, Cin)

    # ---- output-row tiling -----------------------------------------------------
    R = _pick_row_tile(OH, OW, max_rows=max_tile_rows)
    n_row = OH // R
    M = R * OW

    taps = tuple((di, dj) for di in range(KH) for dj in range(KW))
    buf_keys = []
    for di, dj in taps:
        k2 = ((di % s) * s + (dj % s), dj // s)
        if k2 not in buf_keys:
            buf_keys.append(k2)
    buf_keys = tuple(buf_keys)
    n_buf = len(buf_keys)

    kernel = functools.partial(
        _conv_bn_relu_kernel, taps=taps, buf_keys=buf_keys, stride=s,
        rows=R, ow=OW, a_halo=A, cin=Cin)

    # ---- grid-axis order: keep whichever operand dominates HBM traffic resident
    plane_bytes = n_phase * PH * PW * Cin * 2
    w_full_bytes = KH * KW * Cin * cout_pad * 2
    ord_act = N * (plane_bytes + w_full_bytes)        # (N, ct, row): W streamed per image
    ord_wgt = n_ct * N * plane_bytes + w_full_bytes   # (ct, N, row): planes streamed per ct
    weight_outer = ord_wgt < ord_act

    if weight_outer:
        grid = (n_ct, N, n_row)
        x_map = lambda j, n, r: (n, 0, 0, 0)
        w_map = lambda j, n, r: (0, 0, j)
        b_map = lambda j, n, r: (0, j)
        o_map = lambda j, n, r: (n, r, j)
    else:
        grid = (N, n_ct, n_row)
        x_map = lambda n, j, r: (n, 0, 0, 0)
        w_map = lambda n, j, r: (0, 0, j)
        b_map = lambda n, j, r: (0, j)
        o_map = lambda n, j, r: (n, r, j)

    # ---- device-aware VMEM budget (already includes 2x buffering; no re-doubling)
    vmem_need = (2 * plane_bytes                       # plane block, double-buffered
                 + 2 * KH * KW * Cin * tcout * 2       # weight tile, double-buffered
                 + 2 * tcout * 4                       # bias tile
                 + 2 * M * tcout * 2                   # bf16 out tile, double-buffered
                 + M * tcout * 4                       # f32 accumulator scratch
                 + n_buf * (R + A) * OW * Cin * 2)     # hoisted LHS scratch
    vmem_cap = _vmem_capacity_bytes()
    vmem_limit = int(min(0.87 * vmem_cap, max(32 * 1024 * 1024, 1.3 * vmem_need)))

    flops = 2 * N * OH * OW * KH * KW * Cin * cout_pad
    bytes_accessed = int(x_ph.size * 2 + w_t.size * 2 + b_pad.size * 4
                         + N * OH * OW * cout_pad * 2)

    out = pl.pallas_call(
        kernel,
        out_shape=jax.ShapeDtypeStruct((N, OH * OW, cout_pad), jnp.bfloat16),
        grid_spec=pltpu.PrefetchScalarGridSpec(
            num_scalar_prefetch=0,
            grid=grid,
            in_specs=[
                # full phase planes of image n: resident across the inner axes
                pl.BlockSpec((n_phase, PH, PW, Cin), x_map),
                pl.BlockSpec((KH * KW, Cin, tcout), w_map),
                pl.BlockSpec((1, tcout), b_map),
            ],
            out_specs=pl.BlockSpec((1, M, tcout), o_map),
            scratch_shapes=[
                pltpu.VMEM((n_buf, (R + A) * OW, Cin), jnp.bfloat16),
                pltpu.VMEM((M, tcout), jnp.float32),
            ],
        ),
        compiler_params=pltpu.CompilerParams(
            dimension_semantics=("parallel", "parallel", "parallel"),
            vmem_limit_bytes=vmem_limit,
        ),
        cost_estimate=pl.CostEstimate(flops=flops, transcendentals=0,
                                      bytes_accessed=bytes_accessed),
    )(x_ph, w_t, b_pad)

    out = out.reshape(N, OH, OW, cout_pad)
    if not keep_padded_channels:
        # For a chain of MedViT blocks prefer keep_padded_channels=True (and bf16)
        # so the padded lanes are consumed/masked by the next layer instead of an
        # extra HBM round-trip here.
        out = out[..., :Cout]
    return out.astype(out_dtype)


# ---------------------------------------------------------------------------
# NCHW wrapper matching the PyTorch module boundary
# ---------------------------------------------------------------------------
def conv_bn_relu(x_nchw, conv_weight, gamma, beta, running_mean, running_var,
                 *, kernel_size, stride, groups=1, out_dtype=jnp.bfloat16,
                 max_tile_rows=None):
    """ConvBNReLU.forward (eval-mode BN), PyTorch NCHW layout.

    Prefer conv_bn_relu_nhwc when chaining MedViT blocks (avoids per-layer
    NCHW<->NHWC transposes and channel-slice copies).
    """
    del kernel_size  # taken from the weight shape
    x_nhwc = jnp.transpose(x_nchw, (0, 2, 3, 1))
    y = conv_bn_relu_nhwc(x_nhwc, conv_weight, gamma, beta, running_mean,
                          running_var, stride=stride, groups=groups,
                          out_dtype=out_dtype, max_tile_rows=max_tile_rows)
    return jnp.transpose(y, (0, 3, 1, 2))


# ---------------------------------------------------------------------------
# Pure-JAX reference (for sanity check)
# ---------------------------------------------------------------------------
def _reference(x_nchw, conv_weight, gamma, beta, mean, var, *, stride):
    y = jax.lax.conv_general_dilated(
        x_nchw, conv_weight,
        window_strides=(stride, stride),
        padding=((1, 1), (1, 1)),
        dimension_numbers=("NCHW", "OIHW", "NCHW"),
    )
    sc = (gamma / jnp.sqrt(var + NORM_EPS)).reshape(1, -1, 1, 1)
    b = (beta - mean * gamma / jnp.sqrt(var + NORM_EPS)).reshape(1, -1, 1, 1)
    return jnp.maximum(y * sc + b, 0.0)


if __name__ == "__main__":
    key = jax.random.PRNGKey(0)

    # (N, Cin, H, W, Cout, stride, max_tile_rows)
    configs = [
        (2, 32, 16, 16, 48, 1, None),   # Pallas path, single row tile
        (2, 32, 16, 16, 48, 2, None),   # Pallas path, stride-2 phase decomposition
        (2, 32, 16, 16, 64, 1, 4),      # Pallas path, forced row tiling (halo slices)
        (2, 3, 16, 16, 16, 2, None),    # stem-like Cin=3 -> XLA fallback path
    ]
    for (n, cin, h, w, cout, stride, mtr) in configs:
        key, *ks = jax.random.split(key, 7)
        x = jax.random.normal(ks[0], (n, cin, h, w), dtype=jnp.float32)
        conv_w = jax.random.normal(ks[1], (cout, cin, 3, 3), dtype=jnp.float32) * 0.1
        gamma = 1.0 + 0.1 * jax.random.normal(ks[2], (cout,), dtype=jnp.float32)
        beta = 0.1 * jax.random.normal(ks[3], (cout,), dtype=jnp.float32)
        mean = 0.1 * jax.random.normal(ks[4], (cout,), dtype=jnp.float32)
        var = jnp.abs(1.0 + 0.1 * jax.random.normal(ks[5], (cout,), dtype=jnp.float32))

        out = conv_bn_relu(x, conv_w, gamma, beta, mean, var,
                           kernel_size=3, stride=stride, max_tile_rows=mtr)
        out = jax.block_until_ready(out)

        ref = _reference(x, conv_w, gamma, beta, mean, var, stride=stride)
        oh = (h + 2 - 3) // stride + 1
        assert out.shape == (n, cout, oh, oh), out.shape
        # bf16 MXU operands + bf16 output with f32 accumulation -> bf16-level tol.
        err = jnp.abs(out.astype(jnp.float32) - ref)
        tol = 5e-2 + 5e-2 * jnp.abs(ref)
        assert bool(jnp.all(err <= tol)), float(jnp.max(err - tol))

    print("KERNEL_OK")
</pallas_src>

<mosaic_0001>
module attributes {stable_mosaic.version = 11 : i64} {
  func.func @_conv_bn_relu_kernel(%arg0: i32, %arg1: i32, %arg2: i32, %arg3: memref<1x18x18x32xbf16, #tpu.memory_space<vmem>>, %arg4: memref<9x32x128xbf16, #tpu.memory_space<vmem>>, %arg5: memref<1x128xf32, #tpu.memory_space<vmem>>, %arg6: memref<1x256x128xbf16, #tpu.memory_space<vmem>>, %arg7: memref<3x288x32xbf16, #tpu.memory_space<vmem>>, %arg8: memref<256x128xf32, #tpu.memory_space<vmem>>) attributes {dimension_semantics = [#tpu.dimension_semantics<parallel>, #tpu.dimension_semantics<parallel>, #tpu.dimension_semantics<parallel>], iteration_bounds = array<i64: 1, 2, 1>, scalar_prefetch = 0 : i64, scratch_operands = 2 : i64, tpu.core_type = #tpu.core_type<tc>, window_params = [{transform_indices = @transform_0, window_bounds = array<i64: 1, 18, 18, 32>}, {transform_indices = @transform_1, window_bounds = array<i64: 9, 32, 128>}, {transform_indices = @transform_2, window_bounds = array<i64: 1, 128>}, {transform_indices = @transform_3, window_bounds = array<i64: 1, 256, 128>}]} {
    %c16_i32 = arith.constant 16 : i32
    %0 = arith.muli %arg2, %c16_i32 : i32
    %1 = tpu.assume_multiple %0, 8 : i32
    %c0 = arith.constant 0 : index
    %2 = arith.index_cast %1 : i32 to index
    %c0_0 = arith.constant 0 : index
    %c0_1 = arith.constant 0 : index
    %3 = vector.load %arg3[%c0, %2, %c0_0, %c0_1] : memref<1x18x18x32xbf16, #tpu.memory_space<vmem>>, vector<1x18x16x32xbf16>
    %4 = vector.shape_cast %3 : vector<1x18x16x32xbf16> to vector<18x16x32xbf16>
    %5 = vector.shape_cast %4 : vector<18x16x32xbf16> to vector<288x32xbf16>
    %c0_2 = arith.constant 0 : index
    %c0_3 = arith.constant 0 : index
    %c0_4 = arith.constant 0 : index
    %6 = vector.load %arg7[%c0_2, %c0_3, %c0_4] : memref<3x288x32xbf16, #tpu.memory_space<vmem>>, vector<1x288x32xbf16>
    %7 = vector.shape_cast %6 : vector<1x288x32xbf16> to vector<288x32xbf16>
    %8 = vector.shape_cast %5 : vector<288x32xbf16> to vector<1x288x32xbf16>
    tpu.vector_store %arg7[%c0_2, %c0_3, %c0_4], %8 {strides = array<i32>} : memref<3x288x32xbf16, #tpu.memory_space<vmem>>, vector<1x288x32xbf16>,
    %c0_5 = arith.constant 0 : index
    %9 = arith.index_cast %1 : i32 to index
    %c1 = arith.constant 1 : index
    %c0_6 = arith.constant 0 : index
    %10 = vector.load %arg3[%c0_5, %9, %c1, %c0_6] : memref<1x18x18x32xbf16, #tpu.memory_space<vmem>>, vector<1x18x16x32xbf16>
    %11 = vector.shape_cast %10 : vector<1x18x16x32xbf16> to vector<18x16x32xbf16>
    %12 = vector.shape_cast %11 : vector<18x16x32xbf16> to vector<288x32xbf16>
    %c1_7 = arith.constant 1 : index
    %c0_8 = arith.constant 0 : index
    %c0_9 = arith.constant 0 : index
    %13 = vector.load %arg7[%c1_7, %c0_8, %c0_9] : memref<3x288x32xbf16, #tpu.memory_space<vmem>>, vector<1x288x32xbf16>
    %14 = vector.shape_cast %13 : vector<1x288x32xbf16> to vector<288x32xbf16>
    %15 = vector.shape_cast %12 : vector<288x32xbf16> to vector<1x288x32xbf16>
    tpu.vector_store %arg7[%c1_7, %c0_8, %c0_9], %15 {strides = array<i32>} : memref<3x288x32xbf16, #tpu.memory_space<vmem>>, vector<1x288x32xbf16>,
    %c0_10 = arith.constant 0 : index
    %16 = arith.index_cast %1 : i32 to index
    %c2 = arith.constant 2 : index
    %c0_11 = arith.constant 0 : index
    %17 = vector.load %arg3[%c0_10, %16, %c2, %c0_11] : memref<1x18x18x32xbf16, #tpu.memory_space<vmem>>, vector<1x18x16x32xbf16>
    %18 = vector.shape_cast %17 : vector<1x18x16x32xbf16> to vector<18x16x32xbf16>
    %19 = vector.shape_cast %18 : vector<18x16x32xbf16> to vector<288x32xbf16>
    %c2_12 = arith.constant 2 : index
    %c0_13 = arith.constant 0 : index
    %c0_14 = arith.constant 0 : index
    %20 = vector.load %arg7[%c2_12, %c0_13, %c0_14] : memref<3x288x32xbf16, #tpu.memory_space<vmem>>, vector<1x288x32xbf16>
    %21 = vector.shape_cast %20 : vector<1x288x32xbf16> to vector<288x32xbf16>
    %22 = vector.shape_cast %19 : vector<288x32xbf16> to vector<1x288x32xbf16>
    tpu.vector_store %arg7[%c2_12, %c0_13, %c0_14], %22 {strides = array<i32>} : memref<3x288x32xbf16, #tpu.memory_space<vmem>>, vector<1x288x32xbf16>,
    %c0_15 = arith.constant 0 : index
    %c0_16 = arith.constant 0 : index
    %c0_17 = arith.constant 0 : index
    %23 = vector.load %arg7[%c0_15, %c0_16, %c0_17] : memref<3x288x32xbf16, #tpu.memory_space<vmem>>, vector<1x256x32xbf16>
    %24 = vector.shape_cast %23 : vector<1x256x32xbf16> to vector<256x32xbf16>
    %c0_18 = arith.constant 0 : index
    %c0_19 = arith.constant 0 : index
    %c0_20 = arith.constant 0 : index
    %25 = vector.load %arg4[%c0_18, %c0_19, %c0_20] : memref<9x32x128xbf16, #tpu.memory_space<vmem>>, vector<1x32x128xbf16>
    %26 = vector.shape_cast %25 : vector<1x32x128xbf16> to vector<32x128xbf16>
    %cst = arith.constant dense<0.000000e+00> : vector<256x128xf32>
    %27 = tpu.matmul %24, %26, %cst {dimension_numbers = #tpu.dot_dimension_numbers<[1], [0], [0], [1], [0, 0, 1, 1], [], []>} : vector<256x32xbf16>, vector<32x128xbf16>, vector<256x128xf32> -> vector<256x128xf32>
    %c0_21 = arith.constant 0 : index
    %c0_22 = arith.constant 0 : index
    %28 = vector.load %arg8[%c0_21, %c0_22] : memref<256x128xf32, #tpu.memory_space<vmem>>, vector<256x128xf32>
    tpu.vector_store %arg8[%c0_21, %c0_22], %27 {strides = array<i32>} : memref<256x128xf32, #tpu.memory_space<vmem>>, vector<256x128xf32>,
    %c1_23 = arith.constant 1 : index
    %c0_24 = arith.constant 0 : index
    %c0_25 = arith.constant 0 : index
    %29 = vector.load %arg7[%c1_23, %c0_24, %c0_25] : memref<3x288x32xbf16, #tpu.memory_space<vmem>>, vector<1x256x32xbf16>
    %30 = vector.shape_cast %29 : vector<1x256x32xbf16> to vector<256x32xbf16>
    %c1_26 = arith.constant 1 : index
    %c0_27 = arith.constant 0 : index
    %c0_28 = arith.constant 0 : index
    %31 = vector.load %arg4[%c1_26, %c0_27, %c0_28] : memref<9x32x128xbf16, #tpu.memory_space<vmem>>, vector<1x32x128xbf16>
    %32 = vector.shape_cast %31 : vector<1x32x128xbf16> to vector<32x128xbf16>
    %cst_29 = arith.constant dense<0.000000e+00> : vector<256x128xf32>
    %33 = tpu.matmul %30, %32, %cst_29 {dimension_numbers = #tpu.dot_dimension_numbers<[1], [0], [0], [1], [0, 0, 1, 1], [], []>} : vector<256x32xbf16>, vector<32x128xbf16>, vector<256x128xf32> -> vector<256x128xf32>
    %c0_30 = arith.constant 0 : index
    %c0_31 = arith.constant 0 : index
    %34 = vector.load %arg8[%c0_30, %c0_31] : memref<256x128xf32, #tpu.memory_space<vmem>>, vector<256x128xf32>
    %35 = arith.addf %34, %33 : vector<256x128xf32>
    %c0_32 = arith.constant 0 : index
    %c0_33 = arith.constant 0 : index
    %36 = vector.load %arg8[%c0_32, %c0_33] : memref<256x128xf32, #tpu.memory_space<vmem>>, vector<256x128xf32>
    tpu.vector_store %arg8[%c0_32, %c0_33], %35 {strides = array<i32>} : memref<256x128xf32, #tpu.memory_space<vmem>>, vector<256x128xf32>,
    %c2_34 = arith.constant 2 : index
    %c0_35 = arith.constant 0 : index
    %c0_36 = arith.constant 0 : index
    %37 = vector.load %arg7[%c2_34, %c0_35, %c0_36] : memref<3x288x32xbf16, #tpu.memory_space<vmem>>, vector<1x256x32xbf16>
    %38 = vector.shape_cast %37 : vector<1x256x32xbf16> to vector<256x32xbf16>
    %c2_37 = arith.constant 2 : index
    %c0_38 = arith.constant 0 : index
    %c0_39 = arith.constant 0 : index
    %39 = vector.load %arg4[%c2_37, %c0_38, %c0_39] : memref<9x32x128xbf16, #tpu.memory_space<vmem>>, vector<1x32x128xbf16>
    %40 = vector.shape_cast %39 : vector<1x32x128xbf16> to vector<32x128xbf16>
    %cst_40 = arith.constant dense<0.000000e+00> : vector<256x128xf32>
    %41 = tpu.matmul %38, %40, %cst_40 {dimension_numbers = #tpu.dot_dimension_numbers<[1], [0], [0], [1], [0, 0, 1, 1], [], []>} : vector<256x32xbf16>, vector<32x128xbf16>, vector<256x128xf32> -> vector<256x128xf32>
    %c0_41 = arith.constant 0 : index
    %c0_42 = arith.constant 0 : index
    %42 = vector.load %arg8[%c0_41, %c0_42] : memref<256x128xf32, #tpu.memory_space<vmem>>, vector<256x128xf32>
    %43 = arith.addf %42, %41 : vector<256x128xf32>
    %c0_43 = arith.constant 0 : index
    %c0_44 = arith.constant 0 : index
    %44 = vector.load %arg8[%c0_43, %c0_44] : memref<256x128xf32, #tpu.memory_space<vmem>>, vector<256x128xf32>
    tpu.vector_store %arg8[%c0_43, %c0_44], %43 {strides = array<i32>} : memref<256x128xf32, #tpu.memory_space<vmem>>, vector<256x128xf32>,
    %c0_45 = arith.constant 0 : index
    %c16 = arith.constant 16 : index
    %c0_46 = arith.constant 0 : index
    %45 = vector.load %arg7[%c0_45, %c16, %c0_46] : memref<3x288x32xbf16, #tpu.memory_space<vmem>>, vector<1x256x32xbf16>
    %46 = vector.shape_cast %45 : vector<1x256x32xbf16> to vector<256x32xbf16>
    %c3 = arith.constant 3 : index
    %c0_47 = arith.constant 0 : index
    %c0_48 = arith.constant 0 : index
    %47 = vector.load %arg4[%c3, %c0_47, %c0_48] : memref<9x32x128xbf16, #tpu.memory_space<vmem>>, vector<1x32x128xbf16>
    %48 = vector.shape_cast %47 : vector<1x32x128xbf16> to vector<32x128xbf16>
    %cst_49 = arith.constant dense<0.000000e+00> : vector<256x128xf32>
    %49 = tpu.matmul %46, %48, %cst_49 {dimension_numbers = #tpu.dot_dimension_numbers<[1], [0], [0], [1], [0, 0, 1, 1], [], []>} : vector<256x32xbf16>, vector<32x128xbf16>, vector<256x128xf32> -> vector<256x128xf32>
    %c0_50 = arith.constant 0 : index
    %c0_51 = arith.constant 0 : index
    %50 = vector.load %arg8[%c0_50, %c0_51] : memref<256x128xf32, #tpu.memory_space<vmem>>, vector<256x128xf32>
    %51 = arith.addf %50, %49 : vector<256x128xf32>
    %c0_52 = arith.constant 0 : index
    %c0_53 = arith.constant 0 : index
    %52 = vector.load %arg8[%c0_52, %c0_53] : memref<256x128xf32, #tpu.memory_space<vmem>>, vector<256x128xf32>
    tpu.vector_store %arg8[%c0_52, %c0_53], %51 {strides = array<i32>} : memref<256x128xf32, #tpu.memory_space<vmem>>, vector<256x128xf32>,
    %c1_54 = arith.constant 1 : index
    %c16_55 = arith.constant 16 : index
    %c0_56 = arith.constant 0 : index
    %53 = vector.load %arg7[%c1_54, %c16_55, %c0_56] : memref<3x288x32xbf16, #tpu.memory_space<vmem>>, vector<1x256x32xbf16>
    %54 = vector.shape_cast %53 : vector<1x256x32xbf16> to vector<256x32xbf16>
    %c4 = arith.constant 4 : index
    %c0_57 = arith.constant 0 : index
    %c0_58 = arith.constant 0 : index
    %55 = vector.load %arg4[%c4, %c0_57, %c0_58] : memref<9x32x128xbf16, #tpu.memory_space<vmem>>, vector<1x32x128xbf16>
    %56 = vector.shape_cast %55 : vector<1x32x128xbf16> to vector<32x128xbf16>
    %cst_59 = arith.constant dense<0.000000e+00> : vector<256x128xf32>
    %57 = tpu.matmul %54, %56, %cst_59 {dimension_numbers = #tpu.dot_dimension_numbers<[1], [0], [0], [1], [0, 0, 1, 1], [], []>} : vector<256x32xbf16>, vector<32x128xbf16>, vector<256x128xf32> -> vector<256x128xf32>
    %c0_60 = arith.constant 0 : index
    %c0_61 = arith.constant 0 : index
    %58 = vector.load %arg8[%c0_60, %c0_61] : memref<256x128xf32, #tpu.memory_space<vmem>>, vector<256x128xf32>
    %59 = arith.addf %58, %57 : vector<256x128xf32>
    %c0_62 = arith.constant 0 : index
    %c0_63 = arith.constant 0 : index
    %60 = vector.load %arg8[%c0_62, %c0_63] : memref<256x128xf32, #tpu.memory_space<vmem>>, vector<256x128xf32>
    tpu.vector_store %arg8[%c0_62, %c0_63], %59 {strides = array<i32>} : memref<256x128xf32, #tpu.memory_space<vmem>>, vector<256x128xf32>,
    %c2_64 = arith.constant 2 : index
    %c16_65 = arith.constant 16 : index
    %c0_66 = arith.constant 0 : index
    %61 = vector.load %arg7[%c2_64, %c16_65, %c0_66] : memref<3x288x32xbf16, #tpu.memory_space<vmem>>, vector<1x256x32xbf16>
    %62 = vector.shape_cast %61 : vector<1x256x32xbf16> to vector<256x32xbf16>
    %c5 = arith.constant 5 : index
    %c0_67 = arith.constant 0 : index
    %c0_68 = arith.constant 0 : index
    %63 = vector.load %arg4[%c5, %c0_67, %c0_68] : memref<9x32x128xbf16, #tpu.memory_space<vmem>>, vector<1x32x128xbf16>
    %64 = vector.shape_cast %63 : vector<1x32x128xbf16> to vector<32x128xbf16>
    %cst_69 = arith.constant dense<0.000000e+00> : vector<256x128xf32>
    %65 = tpu.matmul %62, %64, %cst_69 {dimension_numbers = #tpu.dot_dimension_numbers<[1], [0], [0], [1], [0, 0, 1, 1], [], []>} : vector<256x32xbf16>, vector<32x128xbf16>, vector<256x128xf32> -> vector<256x128xf32>
    %c0_70 = arith.constant 0 : index
    %c0_71 = arith.constant 0 : index
    %66 = vector.load %arg8[%c0_70, %c0_71] : memref<256x128xf32, #tpu.memory_space<vmem>>, vector<256x128xf32>
    %67 = arith.addf %66, %65 : vector<256x128xf32>
    %c0_72 = arith.constant 0 : index
    %c0_73 = arith.constant 0 : index
    %68 = vector.load %arg8[%c0_72, %c0_73] : memref<256x128xf32, #tpu.memory_space<vmem>>, vector<256x128xf32>
    tpu.vector_store %arg8[%c0_72, %c0_73], %67 {strides = array<i32>} : memref<256x128xf32, #tpu.memory_space<vmem>>, vector<256x128xf32>,
    %c0_74 = arith.constant 0 : index
    %c32 = arith.constant 32 : index
    %c0_75 = arith.constant 0 : index
    %69 = vector.load %arg7[%c0_74, %c32, %c0_75] : memref<3x288x32xbf16, #tpu.memory_space<vmem>>, vector<1x256x32xbf16>
    %70 = vector.shape_cast %69 : vector<1x256x32xbf16> to vector<256x32xbf16>
    %c6 = arith.constant 6 : index
    %c0_76 = arith.constant 0 : index
    %c0_77 = arith.constant 0 : index
    %71 = vector.load %arg4[%c6, %c0_76, %c0_77] : memref<9x32x128xbf16, #tpu.memory_space<vmem>>, vector<1x32x128xbf16>
    %72 = vector.shape_cast %71 : vector<1x32x128xbf16> to vector<32x128xbf16>
    %cst_78 = arith.constant dense<0.000000e+00> : vector<256x128xf32>
    %73 = tpu.matmul %70, %72, %cst_78 {dimension_numbers = #tpu.dot_dimension_numbers<[1], [0], [0], [1], [0, 0, 1, 1], [], []>} : vector<256x32xbf16>, vector<32x128xbf16>, vector<256x128xf32> -> vector<256x128xf32>
    %c0_79 = arith.constant 0 : index
    %c0_80 = arith.constant 0 : index
    %74 = vector.load %arg8[%c0_79, %c0_80] : memref<256x128xf32, #tpu.memory_space<vmem>>, vector<256x128xf32>
    %75 = arith.addf %74, %73 : vector<256x128xf32>
    %c0_81 = arith.constant 0 : index
    %c0_82 = arith.constant 0 : index
    %76 = vector.load %arg8[%c0_81, %c0_82] : memref<256x128xf32, #tpu.memory_space<vmem>>, vector<256x128xf32>
    tpu.vector_store %arg8[%c0_81, %c0_82], %75 {strides = array<i32>} : memref<256x128xf32, #tpu.memory_space<vmem>>, vector<256x128xf32>,
    %c1_83 = arith.constant 1 : index
    %c32_84 = arith.constant 32 : index
    %c0_85 = arith.constant 0 : index
    %77 = vector.load %arg7[%c1_83, %c32_84, %c0_85] : memref<3x288x32xbf16, #tpu.memory_space<vmem>>, vector<1x256x32xbf16>
    %78 = vector.shape_cast %77 : vector<1x256x32xbf16> to vector<256x32xbf16>
    %c7 = arith.constant 7 : index
    %c0_86 = arith.constant 0 : index
    %c0_87 = arith.constant 0 : index
    %79 = vector.load %arg4[%c7, %c0_86, %c0_87] : memref<9x32x128xbf16, #tpu.memory_space<vmem>>, vector<1x32x128xbf16>
    %80 = vector.shape_cast %79 : vector<1x32x128xbf16> to vector<32x128xbf16>
    %cst_88 = arith.constant dense<0.000000e+00> : vector<256x128xf32>
    %81 = tpu.matmul %78, %80, %cst_88 {dimension_numbers = #tpu.dot_dimension_numbers<[1], [0], [0], [1], [0, 0, 1, 1], [], []>} : vector<256x32xbf16>, vector<32x128xbf16>, vector<256x128xf32> -> vector<256x128xf32>
    %c0_89 = arith.constant 0 : index
    %c0_90 = arith.constant 0 : index
    %82 = vector.load %arg8[%c0_89, %c0_90] : memref<256x128xf32, #tpu.memory_space<vmem>>, vector<256x128xf32>
    %83 = arith.addf %82, %81 : vector<256x128xf32>
    %c0_91 = arith.constant 0 : index
    %c0_92 = arith.constant 0 : index
    %84 = vector.load %arg8[%c0_91, %c0_92] : memref<256x128xf32, #tpu.memory_space<vmem>>, vector<256x128xf32>
    tpu.vector_store %arg8[%c0_91, %c0_92], %83 {strides = array<i32>} : memref<256x128xf32, #tpu.memory_space<vmem>>, vector<256x128xf32>,
    %c2_93 = arith.constant 2 : index
    %c32_94 = arith.constant 32 : index
    %c0_95 = arith.constant 0 : index
    %85 = vector.load %arg7[%c2_93, %c32_94, %c0_95] : memref<3x288x32xbf16, #tpu.memory_space<vmem>>, vector<1x256x32xbf16>
    %86 = vector.shape_cast %85 : vector<1x256x32xbf16> to vector<256x32xbf16>
    %c8 = arith.constant 8 : index
    %c0_96 = arith.constant 0 : index
    %c0_97 = arith.constant 0 : index
    %87 = vector.load %arg4[%c8, %c0_96, %c0_97] : memref<9x32x128xbf16, #tpu.memory_space<vmem>>, vector<1x32x128xbf16>
    %88 = vector.shape_cast %87 : vector<1x32x128xbf16> to vector<32x128xbf16>
    %cst_98 = arith.constant dense<0.000000e+00> : vector<256x128xf32>
    %89 = tpu.matmul %86, %88, %cst_98 {dimension_numbers = #tpu.dot_dimension_numbers<[1], [0], [0], [1], [0, 0, 1, 1], [], []>} : vector<256x32xbf16>, vector<32x128xbf16>, vector<256x128xf32> -> vector<256x128xf32>
    %c0_99 = arith.constant 0 : index
    %c0_100 = arith.constant 0 : index
    %90 = vector.load %arg8[%c0_99, %c0_100] : memref<256x128xf32, #tpu.memory_space<vmem>>, vector<256x128xf32>
    %91 = arith.addf %90, %89 : vector<256x128xf32>
    %c0_101 = arith.constant 0 : index
    %c0_102 = arith.constant 0 : index
    %92 = vector.load %arg8[%c0_101, %c0_102] : memref<256x128xf32, #tpu.memory_space<vmem>>, vector<256x128xf32>
    tpu.vector_store %arg8[%c0_101, %c0_102], %91 {strides = array<i32>} : memref<256x128xf32, #tpu.memory_space<vmem>>, vector<256x128xf32>,
    %c0_103 = arith.constant 0 : index
    %c0_104 = arith.constant 0 : index
    %93 = vector.load %arg8[%c0_103, %c0_104] : memref<256x128xf32, #tpu.memory_space<vmem>>, vector<256x128xf32>
    %c0_105 = arith.constant 0 : index
    %c0_106 = arith.constant 0 : index
    %94 = vector.load %arg5[%c0_105, %c0_106] : memref<1x128xf32, #tpu.memory_space<vmem>>, vector<1x128xf32>
    %95 = vector.broadcast %94 : vector<1x128xf32> to vector<256x128xf32>
    %96 = arith.addf %93, %95 : vector<256x128xf32>
    %cst_107 = arith.constant 0.000000e+00 : f32
    %97 = vector.broadcast %cst_107 : f32 to vector<256x128xf32>
    %98 = arith.maximumf %96, %97 : vector<256x128xf32>
    %99 = arith.truncf %98 : vector<256x128xf32> to vector<256x128xbf16>
    %c0_108 = arith.constant 0 : index
    %c0_109 = arith.constant 0 : index
    %c0_110 = arith.constant 0 : index
    %100 = vector.load %arg6[%c0_108, %c0_109, %c0_110] : memref<1x256x128xbf16, #tpu.memory_space<vmem>>, vector<1x256x128xbf16>
    %101 = vector.shape_cast %100 : vector<1x256x128xbf16> to vector<256x128xbf16>
    %102 = vector.shape_cast %99 : vector<256x128xbf16> to vector<1x256x128xbf16>
    tpu.vector_store %arg6[%c0_108, %c0_109, %c0_110], %102 {strides = array<i32>} : memref<1x256x128xbf16, #tpu.memory_space<vmem>>, vector<1x256x128xbf16>,
    return
  }
  func.func @transform_0(%arg0: i32, %arg1: i32, %arg2: i32) -> (i32, i32, i32, i32) {
    %c0_i32 = arith.constant 0 : i32
    %c0_i32_0 = arith.constant 0 : i32
    %c0_i32_1 = arith.constant 0 : i32
    %c0_i32_2 = arith.constant 0 : i32
    return %arg1, %c0_i32, %c0_i32_0, %c0_i32_1 : i32, i32, i32, i32
  }
  func.func @transform_1(%arg0: i32, %arg1: i32, %arg2: i32) -> (i32, i32, i32) {
    %c0_i32 = arith.constant 0 : i32
    %c0_i32_0 = arith.constant 0 : i32
    %c0_i32_1 = arith.constant 0 : i32
    return %c0_i32, %c0_i32_0, %arg0 : i32, i32, i32
  }
  func.func @transform_2(%arg0: i32, %arg1: i32, %arg2: i32) -> (i32, i32) {
    %c0_i32 = arith.constant 0 : i32
    %c0_i32_0 = arith.constant 0 : i32
    return %c0_i32, %arg0 : i32, i32
  }
  func.func @transform_3(%arg0: i32, %arg1: i32, %arg2: i32) -> (i32, i32, i32) {
    %c0_i32 = arith.constant 0 : i32
    return %arg1, %arg2, %arg0 : i32, i32, i32
  }
}

</mosaic_0001>

<llo_original>
// kernel: tpu_custom_call.1
$region0: #{tpu_custom_call.1}
  #allocation0 [shape = 'u32[]', space=smem, size = 0x4, offset = 0x4, fixed_abs, tag = 'smem constant byte address 0x4 - core index']
  #allocation1 [shape = 'u32[144,128]{1,0:T(1,128)}', space=vmem, size = 0x12000, scoped, tag = 'internal scratch']
  #allocation2 [shape = 'bf16[3,288,32]{2,1,0:T(16,128)(2,1)}', space=vmem, size = 0x36000, scoped, tag = 'scratch operand']
  #allocation3 [shape = 'f32[256,128]{1,0:T(8,128)}', space=vmem, size = 0x20000, scoped, tag = 'scratch operand']
  %s0 = inlined_call_operand.vmem [shape: bf16[2,18,18,32], index: 0, kind: input, shape index: {}]
  %s1 = inlined_call_operand.vmem [shape: bf16[9,32,128], index: 1, kind: input, shape index: {}]
  %s2 = inlined_call_operand.vmem [shape: f32[1,128], index: 2, kind: input, shape index: {}]
  %s3 = inlined_call_operand.hbm [shape: bf16[2,256,128], index: 3, kind: output, shape index: {}]
  %s4 = sld [smem:[#allocation0]]
  $region45: #{tpu_custom_call.1} parent=0
    _
  %s6 = ssub.s32 1, %s4
  %s7 = scalar_select 0, %s6, %s4
  $region1: #{tpu_custom_call.1} parent=0
    #allocation4 [shape = 'u8[131072]{0}', space=vmem, size = 0x20000, scoped, tag = 'output window, operand 0']
    #allocation5 [shape = 's32[2]{0}', space=sflag, size = 0x8, scoped, tag = 'scoped memory for tpu_custom_call.1']
    %8 = vsyncpa [#allocation5], 0
    %s9 = scalar_lea.sflag [#allocation5], 1
    %10 = vsyncpa %s9, 0
    loop: start=0, step=1, limit=4
    $region2: #{tpu_custom_call.1} parent=1 // loop_pre_header
      _
    $region3: #{tpu_custom_call.1} parent=1 // loop_header
      %s12 = sphi 0, %s16
      %p13 = scmp.ge.s32.totalorder %s12, 4
      %s19 = sphi 0, %s38
      %s20 = sphi 0, %s34
      %s21 = sphi 0, %s30
      %s22 = sphi 0, %s19
      %s23 = sphi 0, %s20
      %s24 = sphi 0, %s21
      %s25 = sphi 0, %s22
      %s26 = sphi 0, %s23
      %s27 = sphi 0, %s24
      %s41 = sphi 0, %s43
      %s44 = sphi 0, %s41
      %s45 = sphi 0, %s44
      %s61 = sphi 0, %s45
      %s67 = sphi 0, %s69
      %s70 = sphi 0, %s67
      %s71 = sphi 0, %s70
      %s87 = sphi 0, %s71
      %s93 = sphi 0, %s95
      %s96 = sphi 0, %s93
      %s97 = sphi 0, %s96
      %s113 = sphi 0, %s97
      %s123 = sphi 0, %s125
      %s126 = sphi 0, %s123
      %s127 = sphi 0, %s126
      %s143 = sphi 0, %s127
    $region4: #{tpu_custom_call.1} parent=1 // loop_header_branch
      %15 = sbr.rel (%p13) target = $region8
    $region5: #{tpu_custom_call.1} parent=1 // loop_body
      %s17 = ssub.s32 %s12, 1
      %s18 = ssub.s32 %s12, 2
      %s28 = sadd.s32 1, %s21
      %p29 = scmp.ge.s32.totalorder %s28, 1
      %s30 = scalar_select %p29, 0, %s28
      %s31 = sadd.s32 1, %s20
      %s32 = scalar_select %p29, %s31, %s20
      %p33 = scmp.ge.s32.totalorder %s32, 2
      %s34 = scalar_select %p33, 0, %s32
      %s35 = sadd.s32 1, %s19
      %s36 = scalar_select %p33, %s35, %s19
      %p37 = scmp.ge.s32.totalorder %s36, 1
      %s38 = scalar_select %p37, 0, %s36
      %s39 = ssub.s32 %s20, %s34
      %p40 = scmp.eq.s32.totalorder %s39, 0
      %s42 = sadd.s32 %s41, 1
      %s43 = scalar_select %p40, %s41, %s42
      %p46 = pneg %p40
      %p47 = scmp.eq.s32.totalorder %s12, 1
      %p48 = por %p46, %p47
      %p49 = scmp.ne.s32.totalorder %s41, %s44
      %p50 = scmp.eq.s32.totalorder %s12, 0
      %p51 = por %p49, %p50
      %p52 = scmp.ne.s32.totalorder %s41, %s44
      %p53 = scmp.eq.s32.totalorder %s17, 1
      %p54 = por %p52, %p53
      %p55 = scmp.ne.s32.totalorder %s44, %s45
      %p56 = scmp.eq.s32.totalorder %s17, 0
      %p57 = por %p55, %p56
      %p58 = scmp.ne.s32.totalorder %s44, %s45
      %p59 = scmp.eq.s32.totalorder %s18, 1
      %p60 = por %p58, %p59
      %p62 = scmp.ne.s32.totalorder %s45, %s61
      %p63 = scmp.eq.s32.totalorder %s18, 0
      %p64 = por %p62, %p63
      %s65 = ssub.s32 %s19, %s38
      %p66 = scmp.eq.s32.totalorder %s65, 0
      %s68 = sadd.s32 %s67, 1
      %s69 = scalar_select %p66, %s67, %s68
      %p72 = pneg %p66
      %p73 = scmp.eq.s32.totalorder %s12, 1
      %p74 = por %p72, %p73
      %p75 = scmp.ne.s32.totalorder %s67, %s70
      %p76 = scmp.eq.s32.totalorder %s12, 0
      %p77 = por %p75, %p76
      %p78 = scmp.ne.s32.totalorder %s67, %s70
      %p79 = scmp.eq.s32.totalorder %s17, 1
      %p80 = por %p78, %p79
      %p81 = scmp.ne.s32.totalorder %s70, %s71
      %p82 = scmp.eq.s32.totalorder %s17, 0
      %p83 = por %p81, %p82
      %p84 = scmp.ne.s32.totalorder %s70, %s71
      %p85 = scmp.eq.s32.totalorder %s18, 1
      %p86 = por %p84, %p85
      %p88 = scmp.ne.s32.totalorder %s71, %s87
      %p89 = scmp.eq.s32.totalorder %s18, 0
      %p90 = por %p88, %p89
      %s91 = ssub.s32 %s19, %s38
      %p92 = scmp.eq.s32.totalorder %s91, 0
      %s94 = sadd.s32 %s93, 1
      %s95 = scalar_select %p92, %s93, %s94
      %p98 = pneg %p92
      %p99 = scmp.eq.s32.totalorder %s12, 1
      %p100 = por %p98, %p99
      %p101 = scmp.ne.s32.totalorder %s93, %s96
      %p102 = scmp.eq.s32.totalorder %s12, 0
      %p103 = por %p101, %p102
      %p104 = scmp.ne.s32.totalorder %s93, %s96
      %p105 = scmp.eq.s32.totalorder %s17, 1
      %p106 = por %p104, %p105
      %p107 = scmp.ne.s32.totalorder %s96, %s97
      %p108 = scmp.eq.s32.totalorder %s17, 0
      %p109 = por %p107, %p108
      %p110 = scmp.ne.s32.totalorder %s96, %s97
      %p111 = scmp.eq.s32.totalorder %s18, 1
      %p112 = por %p110, %p111
      %p114 = scmp.ne.s32.totalorder %s97, %s113
      %p115 = scmp.eq.s32.totalorder %s18, 0
      %p116 = por %p114, %p115
      %s117 = ssub.s32 %s20, %s34
      %s118 = ssub.s32 %s21, %s30
      %s119 = sor.u32 %s117, %s118
      %s120 = ssub.s32 %s19, %s38
      %s121 = sor.u32 %s119, %s120
      %p122 = scmp.eq.s32.totalorder %s121, 0
      %s124 = sadd.s32 %s123, 1
      %s125 = scalar_select %p122, %s123, %s124
      %p128 = pneg %p122
      %p129 = scmp.eq.s32.totalorder %s12, 1
      %p130 = por %p128, %p129
      %p131 = scmp.ne.s32.totalorder %s123, %s126
      %p132 = scmp.eq.s32.totalorder %s12, 0
      %p133 = por %p131, %p132
      %p134 = scmp.ne.s32.totalorder %s123, %s126
      %p135 = scmp.eq.s32.totalorder %s17, 1
      %p136 = por %p134, %p135
      %p137 = scmp.ne.s32.totalorder %s126, %s127
      %p138 = scmp.eq.s32.totalorder %s17, 0
      %p139 = por %p137, %p138
      %p140 = scmp.ne.s32.totalorder %s126, %s127
      %p141 = scmp.eq.s32.totalorder %s18, 1
      %p142 = por %p140, %p141
      %p144 = scmp.ne.s32.totalorder %s127, %s143
      %p145 = scmp.eq.s32.totalorder %s18, 0
      %p146 = por %p144, %p145
      %p147 = scmp.le.s32.totalorder 1, %s12
      %p148 = scmp.lt.s32.totalorder %s12, 3
      %p149 = pnand %p147, %p148
      %p150 = pneg %p149
      // Predicated region
      $region9: #{tpu_custom_call.1} parent=5 // pred_check
        _
      $region10: #{tpu_custom_call.1} parent=5 // pred_check_branch
        %152 = sbr.rel (%p149) target = $region12
      $region11: #{tpu_custom_call.1} parent=5 // pred_region
        %s153 = ssub.s32 %s12, 1
        // Predicated region
        $region13: #{tpu_custom_call.1} parent=11 // pred_check
          %p154 = pneg %p83
        $region14: #{tpu_custom_call.1} parent=11 // pred_check_branch
          %156 = sbr.rel (%p154) target = $region16
        $region15: #{tpu_custom_call.1} parent=11 // pred_region
          %p157 = scmp.lt.s32.totalorder %s22, 0
          %s158 = scalar_select %p157, %s22, 0
          %s159 = smul.addr %s158, 4
          %s160 = scalar_lea.vmem %s1, %s159
        $region16: #{tpu_custom_call.1} parent=11 // pred_fallthru
          _
        // Predicated region
        $region17: #{tpu_custom_call.1} parent=11 // pred_check
          %p161 = pneg %p109
        $region18: #{tpu_custom_call.1} parent=11 // pred_check_branch
          %163 = sbr.rel (%p161) target = $region20
        $region19: #{tpu_custom_call.1} parent=11 // pred_region
          %p164 = scmp.lt.s32.totalorder %s22, 0
          %s165 = scalar_select %p164, %s22, 0
          %s166 = scalar_lea.vmem %s2, %s165
        $region20: #{tpu_custom_call.1} parent=11 // pred_fallthru
          _
      $region12: #{tpu_custom_call.1} parent=5 // pred_fallthru
        _
      %p167 = scmp.lt.s32.totalorder %s12, 2
      // Predicated region
      $region21: #{tpu_custom_call.1} parent=5 // pred_check
        %p168 = pneg %p167
      $region22: #{tpu_custom_call.1} parent=5 // pred_check_branch
        %170 = sbr.rel (%p168) target = $region24
      $region23: #{tpu_custom_call.1} parent=5 // pred_region
        // Predicated region
        $region25: #{tpu_custom_call.1} parent=23 // pred_check
          %p171 = pneg %p51
        $region26: #{tpu_custom_call.1} parent=23 // pred_check_branch
          %173 = sbr.rel (%p171) target = $region28
        $region27: #{tpu_custom_call.1} parent=23 // pred_region
          %p174 = scmp.lt.s32.totalorder %s20, 1
          %s175 = scalar_select %p174, %s20, 1
          %s176 = smul.addr %s175, 54
          %s177 = smul.addr %s176, 4
          %s178 = scalar_lea.vmem %s0, %s177
        $region28: #{tpu_custom_call.1} parent=23 // pred_fallthru
          _
      $region24: #{tpu_custom_call.1} parent=5 // pred_fallthru
        _
      %p179 = scmp.le.s32.totalorder 1, %s12
      %p180 = scmp.lt.s32.totalorder %s12, 3
      %p181 = pnand %p179, %p180
      %p182 = pneg %p181
      // Predicated region
      $region29: #{tpu_custom_call.1} parent=5 // pred_check
        _
      $region30: #{tpu_custom_call.1} parent=5 // pred_check_branch
        %184 = sbr.rel (%p181) target = $region32
      $region31: #{tpu_custom_call.1} parent=5 // pred_region
        %s185 = ssub.s32 %s12, 1
        %p186 = scmp.lt.s32.totalorder %s23, 1
        %s187 = scalar_select %p186, %s23, 1
        %s188 = smul.addr %s187, 54
        %s189 = smul.addr %s188, 4
        %s190 = scalar_lea.vmem %s0, %s189
        %p191 = pneg %p57
        %p192 = pneg %p54
        %p193 = scmp.lt.s32.totalorder %s22, 0
        %s194 = scalar_select %p193, %s22, 0
        %s195 = smul.addr %s194, 4
        %s196 = scalar_lea.vmem %s1, %s195
        %p197 = pneg %p83
        %p198 = pneg %p80
        %p199 = scmp.lt.s32.totalorder %s22, 0
        %s200 = scalar_select %p199, %s22, 0
        %s201 = scalar_lea.vmem %s2, %s200
        %p202 = pneg %p109
        %p203 = pneg %p106
        %p204 = pneg %p139
        %p205 = pneg %p136
        %s206 = sand.u32 %s126, 1
        %s207 = scalar_lea.sflag [#allocation5], %s206
        %s208 = sand.u32 %s126, 1
        %s209 = smul.addr %s208, 128
        %s210 = scalar_lea.vmem [#allocation4], %s209
        %p211 = scmp.lt.s32.totalorder %s23, 1
        %s212 = scalar_select %p211, %s23, 1
        %s213 = smul.addr %s212, 54
        %s214 = smul.addr %s213, 4
        %s215 = scalar_lea.vmem %s0, %s214
        %p216 = scmp.lt.s32.totalorder %s22, 0
        %s217 = scalar_select %p216, %s22, 0
        %s218 = smul.addr %s217, 4
        %s219 = scalar_lea.vmem %s1, %s218
        %p220 = scmp.lt.s32.totalorder %s22, 0
        %s221 = scalar_select %p220, %s22, 0
        %s222 = scalar_lea.vmem %s2, %s221
        %s223 = smul.u32 32, %s24
        %s225 = smul.u32 %s24, 16
        %s226 = smul.u32 %s225, 3
        %s227 = smul.addr %s226, 4
        %s228 = scalar_lea.vmem %s215, %s227
        %v229 = vld [vmem:[%s228] sm:$0xf]
        %v230 = vld [vmem:[%s228 + $0x4] sm:$0xf]
        %v231 = vld [vmem:[%s228 + $0xc] sm:$0xf]
        %v232 = vld [vmem:[%s228 + $0x10] sm:$0xf]
        %v233 = vld [vmem:[%s228 + $0x18] sm:$0xf]
        %v234 = vld [vmem:[%s228 + $0x1c] sm:$0xf]
        %v235 = vld [vmem:[%s228 + $0x24] sm:$0xf]
        %v236 = vld [vmem:[%s228 + $0x28] sm:$0xf]
        %v237 = vld [vmem:[%s228 + $0x30] sm:$0xf]
        %v238 = vld [vmem:[%s228 + $0x34] sm:$0xf]
        %v239 = vld [vmem:[%s228 + $0x3c] sm:$0xf]
        %v240 = vld [vmem:[%s228 + $0x40] sm:$0xf]
        %v241 = vld [vmem:[%s228 + $0x48] sm:$0xf]
        %v242 = vld [vmem:[%s228 + $0x4c] sm:$0xf]
        %v243 = vld [vmem:[%s228 + $0x54] sm:$0xf]
        %v244 = vld [vmem:[%s228 + $0x58] sm:$0xf]
        %v245 = vld [vmem:[%s228 + $0x60] sm:$0xf]
        %v246 = vld [vmem:[%s228 + $0x64] sm:$0xf]
        %v247 = vld [vmem:[%s228 + $0x6c] sm:$0xf]
        %v248 = vld [vmem:[%s228 + $0x70] sm:$0xf]
        %v249 = vld [vmem:[%s228 + $0x78] sm:$0xf]
        %v250 = vld [vmem:[%s228 + $0x7c] sm:$0xf]
        %v251 = vld [vmem:[%s228 + $0x84] sm:$0xf]
        %v252 = vld [vmem:[%s228 + $0x88] sm:$0xf]
        %v253 = vld [vmem:[%s228 + $0x90] sm:$0xf]
        %v254 = vld [vmem:[%s228 + $0x94] sm:$0xf]
        %v255 = vld [vmem:[%s228 + $0x9c] sm:$0xf]
        %v256 = vld [vmem:[%s228 + $0xa0] sm:$0xf]
        %v257 = vld [vmem:[%s228 + $0xa8] sm:$0xf]
        %v258 = vld [vmem:[%s228 + $0xac] sm:$0xf]
        %v259 = vld [vmem:[%s228 + $0xb4] sm:$0xf]
        %v260 = vld [vmem:[%s228 + $0xb8] sm:$0xf]
        %v261 = vld [vmem:[%s228 + $0xc0] sm:$0xf]
        %v262 = vld [vmem:[%s228 + $0xc4] sm:$0xf]
        %v263 = vld [vmem:[%s228 + $0xcc] sm:$0xf]
        %v264 = vld [vmem:[%s228 + $0xd0] sm:$0xf]
        %v301 = vunpack.c.l.b16 %v229
        %v302 = vunpack.c.l.b16 %v230
        %v303 = vunpack.c.l.b16 %v231
        %v304 = vunpack.c.l.b16 %v232
        %v305 = vunpack.c.l.b16 %v233
        %v306 = vunpack.c.l.b16 %v234
        %v307 = vunpack.c.l.b16 %v235
        %v308 = vunpack.c.l.b16 %v236
        %v309 = vunpack.c.l.b16 %v237
        %v310 = vunpack.c.l.b16 %v238
        %v311 = vunpack.c.l.b16 %v239
        %v312 = vunpack.c.l.b16 %v240
        %v313 = vunpack.c.l.b16 %v241
        %v314 = vunpack.c.l.b16 %v242
        %v315 = vunpack.c.l.b16 %v243
        %v316 = vunpack.c.l.b16 %v244
        %v317 = vunpack.c.l.b16 %v245
        %v318 = vunpack.c.l.b16 %v246
        %v319 = vunpack.c.l.b16 %v247
        %v320 = vunpack.c.l.b16 %v248
        %v321 = vunpack.c.l.b16 %v249
        %v322 = vunpack.c.l.b16 %v250
        %v323 = vunpack.c.l.b16 %v251
        %v324 = vunpack.c.l.b16 %v252
        %v325 = vunpack.c.l.b16 %v253
        %v326 = vunpack.c.l.b16 %v254
        %v327 = vunpack.c.l.b16 %v255
        %v328 = vunpack.c.l.b16 %v256
        %v329 = vunpack.c.l.b16 %v257
        %v330 = vunpack.c.l.b16 %v258
        %v331 = vunpack.c.l.b16 %v259
        %v332 = vunpack.c.l.b16 %v260
        %v333 = vunpack.c.l.b16 %v261
        %v334 = vunpack.c.l.b16 %v262
        %v335 = vunpack.c.l.b16 %v263
        %v336 = vunpack.c.l.b16 %v264
        %v337 = vpack.c.b16 %v302, %v301
        %v338 = vpack.c.b16 %v304, %v303
        %v339 = vpack.c.b16 %v306, %v305
        %v340 = vpack.c.b16 %v308, %v307
        %v341 = vpack.c.b16 %v310, %v309
        %v342 = vpack.c.b16 %v312, %v311
        %v343 = vpack.c.b16 %v314, %v313
        %v344 = vpack.c.b16 %v316, %v315
        %v345 = vpack.c.b16 %v318, %v317
        %v346 = vpack.c.b16 %v320, %v319
        %v347 = vpack.c.b16 %v322, %v321
        %v348 = vpack.c.b16 %v324, %v323
        %v349 = vpack.c.b16 %v326, %v325
        %v350 = vpack.c.b16 %v328, %v327
        %v351 = vpack.c.b16 %v330, %v329
        %v352 = vpack.c.b16 %v332, %v331
        %v353 = vpack.c.b16 %v334, %v333
        %v354 = vpack.c.b16 %v336, %v335
        %vm373 = vcmask 261120
        %374 = vst.msk [vmem:[#allocation2] sm:$0xff] %vm373, %v337
        %375 = vst.msk [vmem:[#allocation2 + $0x8] sm:$0xff] %vm373, %v338
        %376 = vst.msk [vmem:[#allocation2 + $0x10] sm:$0xff] %vm373, %v339
        %377 = vst.msk [vmem:[#allocation2 + $0x18] sm:$0xff] %vm373, %v340
        %378 = vst.msk [vmem:[#allocation2 + $0x20] sm:$0xff] %vm373, %v341
        %379 = vst.msk [vmem:[#allocation2 + $0x28] sm:$0xff] %vm373, %v342
        %380 = vst.msk [vmem:[#allocation2 + $0x30] sm:$0xff] %vm373, %v343
        %381 = vst.msk [vmem:[#allocation2 + $0x38] sm:$0xff] %vm373, %v344
        %382 = vst.msk [vmem:[#allocation2 + $0x40] sm:$0xff] %vm373, %v345
        %383 = vst.msk [vmem:[#allocation2 + $0x48] sm:$0xff] %vm373, %v346
        %384 = vst.msk [vmem:[#allocation2 + $0x50] sm:$0xff] %vm373, %v347
        %385 = vst.msk [vmem:[#allocation2 + $0x58] sm:$0xff] %vm373, %v348
        %386 = vst.msk [vmem:[#allocation2 + $0x60] sm:$0xff] %vm373, %v349
        %387 = vst.msk [vmem:[#allocation2 + $0x68] sm:$0xff] %vm373, %v350
        %388 = vst.msk [vmem:[#allocation2 + $0x70] sm:$0xff] %vm373, %v351
        %389 = vst.msk [vmem:[#allocation2 + $0x78] sm:$0xff] %vm373, %v352
        %390 = vst.msk [vmem:[#allocation2 + $0x80] sm:$0xff] %vm373, %v353
        %391 = vst.msk [vmem:[#allocation2 + $0x88] sm:$0xff] %vm373, %v354
        %v392 = vld [vmem:[%s228] sm:$0xf]
        %v393 = vld [vmem:[%s228 + $0x4] sm:$0xf]
        %v394 = vld [vmem:[%s228 + $0x8] sm:$0x1]
        %v395 = vld [vmem:[%s228 + $0xc] sm:$0xf]
        %v396 = vld [vmem:[%s228 + $0x10] sm:$0xf]
        %v397 = vld [vmem:[%s228 + $0x14] sm:$0x1]
        %v398 = vld [vmem:[%s228 + $0x18] sm:$0xf]
        %v399 = vld [vmem:[%s228 + $0x1c] sm:$0xf]
        %v400 = vld [vmem:[%s228 + $0x20] sm:$0x1]
        %v401 = vld [vmem:[%s228 + $0x24] sm:$0xf]
        %v402 = vld [vmem:[%s228 + $0x28] sm:$0xf]
        %v403 = vld [vmem:[%s228 + $0x2c] sm:$0x1]
        %v404 = vld [vmem:[%s228 + $0x30] sm:$0xf]
        %v405 = vld [vmem:[%s228 + $0x34] sm:$0xf]
        %v406 = vld [vmem:[%s228 + $0x38] sm:$0x1]
        %v407 = vld [vmem:[%s228 + $0x3c] sm:$0xf]
        %v408 = vld [vmem:[%s228 + $0x40] sm:$0xf]
        %v409 = vld [vmem:[%s228 + $0x44] sm:$0x1]
        %v410 = vld [vmem:[%s228 + $0x48] sm:$0xf]
        %v411 = vld [vmem:[%s228 + $0x4c] sm:$0xf]
        %v412 = vld [vmem:[%s228 + $0x50] sm:$0x1]
        %v413 = vld [vmem:[%s228 + $0x54] sm:$0xf]
        %v414 = vld [vmem:[%s228 + $0x58] sm:$0xf]
        %v415 = vld [vmem:[%s228 + $0x5c] sm:$0x1]
        %v416 = vld [vmem:[%s228 + $0x60] sm:$0xf]
        %v417 = vld [vmem:[%s228 + $0x64] sm:$0xf]
        %v418 = vld [vmem:[%s228 + $0x68] sm:$0x1]
        %v419 = vld [vmem:[%s228 + $0x6c] sm:$0xf]
        %v420 = vld [vmem:[%s228 + $0x70] sm:$0xf]
        %v421 = vld [vmem:[%s228 + $0x74] sm:$0x1]
        %v422 = vld [vmem:[%s228 + $0x78] sm:$0xf]
        %v423 = vld [vmem:[%s228 + $0x7c] sm:$0xf]
        %v424 = vld [vmem:[%s228 + $0x80] sm:$0x1]
        %v425 = vld [vmem:[%s228 + $0x84] sm:$0xf]
        %v426 = vld [vmem:[%s228 + $0x88] sm:$0xf]
        %v427 = vld [vmem:[%s228 + $0x8c] sm:$0x1]
        %v428 = vld [vmem:[%s228 + $0x90] sm:$0xf]
        %v429 = vld [vmem:[%s228 + $0x94] sm:$0xf]
        %v430 = vld [vmem:[%s228 + $0x98] sm:$0x1]
        %v431 = vld [vmem:[%s228 + $0x9c] sm:$0xf]
        %v432 = vld [vmem:[%s228 + $0xa0] sm:$0xf]
        %v433 = vld [vmem:[%s228 + $0xa4] sm:$0x1]
        %v434 = vld [vmem:[%s228 + $0xa8] sm:$0xf]
        %v435 = vld [vmem:[%s228 + $0xac] sm:$0xf]
        %v436 = vld [vmem:[%s228 + $0xb0] sm:$0x1]
        %v437 = vld [vmem:[%s228 + $0xb4] sm:$0xf]
        %v438 = vld [vmem:[%s228 + $0xb8] sm:$0xf]
        %v439 = vld [vmem:[%s228 + $0xbc] sm:$0x1]
        %v440 = vld [vmem:[%s228 + $0xc0] sm:$0xf]
        %v441 = vld [vmem:[%s228 + $0xc4] sm:$0xf]
        %v442 = vld [vmem:[%s228 + $0xc8] sm:$0x1]
        %v443 = vld [vmem:[%s228 + $0xcc] sm:$0xf]
        %v444 = vld [vmem:[%s228 + $0xd0] sm:$0xf]
        %v445 = vld [vmem:[%s228 + $0xd4] sm:$0x1]
        %vm446 = vsmask.f32 3328
        %vm447 = vsmask.f32 7440
        %vm448 = vmor %vm446, %vm447
        %v450 = vshrl.u32 %v392, 16
        %v452 = vrot.slane %v450, 4
        %v453 = vshll.u32 %v392, 16
        %v455 = vrot.slane %v453, 5
        %v456 = vor.u32 %v452, %v455
        %v457 = vrot.slane %v456, 4
        %v459 = vshll.u32 %v393, 16
        %v461 = vrot.slane %v459, 5
        %v462 = vsel %vm448, %v457, %v461
        %v463 = vshrl.u32 %v393, 16
        %v465 = vrot.slane %v463, 4
        %v466 = vor.u32 %v465, %v461
        %v467 = vrot.slane %v466, 4
        %v469 = vshll.u32 %v394, 16
        %v471 = vrot.slane %v469, 5
        %v472 = vsel %vm448, %v467, %v471
        %v474 = vshrl.u32 %v395, 16
        %v476 = vrot.slane %v474, 4
        %v477 = vshll.u32 %v395, 16
        %v479 = vrot.slane %v477, 5
        %v480 = vor.u32 %v476, %v479
        %v481 = vrot.slane %v480, 4
        %v483 = vshll.u32 %v396, 16
        %v485 = vrot.slane %v483, 5
        %v486 = vsel %vm448, %v481, %v485
        %v487 = vshrl.u32 %v396, 16
        %v489 = vrot.slane %v487, 4
        %v490 = vor.u32 %v489, %v485
        %v491 = vrot.slane %v490, 4
        %v493 = vshll.u32 %v397, 16
        %v495 = vrot.slane %v493, 5
        %v496 = vsel %vm448, %v491, %v495
        %v498 = vshrl.u32 %v398, 16
        %v500 = vrot.slane %v498, 4
        %v501 = vshll.u32 %v398, 16
        %v503 = vrot.slane %v501, 5
        %v504 = vor.u32 %v500, %v503
        %v505 = vrot.slane %v504, 4
        %v507 = vshll.u32 %v399, 16
        %v509 = vrot.slane %v507, 5
        %v510 = vsel %vm448, %v505, %v509
        %v511 = vshrl.u32 %v399, 16
        %v513 = vrot.slane %v511, 4
        %v514 = vor.u32 %v513, %v509
        %v515 = vrot.slane %v514, 4
        %v517 = vshll.u32 %v400, 16
        %v519 = vrot.slane %v517, 5
        %v520 = vsel %vm448, %v515, %v519
        %v522 = vshrl.u32 %v401, 16
        %v524 = vrot.slane %v522, 4
        %v525 = vshll.u32 %v401, 16
        %v527 = vrot.slane %v525, 5
        %v528 = vor.u32 %v524, %v527
        %v529 = vrot.slane %v528, 4
        %v531 = vshll.u32 %v402, 16
        %v533 = vrot.slane %v531, 5
        %v534 = vsel %vm448, %v529, %v533
        %v535 = vshrl.u32 %v402, 16
        %v537 = vrot.slane %v535, 4
        %v538 = vor.u32 %v537, %v533
        %v539 = vrot.slane %v538, 4
        %v541 = vshll.u32 %v403, 16
        %v543 = vrot.slane %v541, 5
        %v544 = vsel %vm448, %v539, %v543
        %v546 = vshrl.u32 %v404, 16
        %v548 = vrot.slane %v546, 4
        %v549 = vshll.u32 %v404, 16
        %v551 = vrot.slane %v549, 5
        %v552 = vor.u32 %v548, %v551
        %v553 = vrot.slane %v552, 4
        %v555 = vshll.u32 %v405, 16
        %v557 = vrot.slane %v555, 5
        %v558 = vsel %vm448, %v553, %v557
        %v559 = vshrl.u32 %v405, 16
        %v561 = vrot.slane %v559, 4
        %v562 = vor.u32 %v561, %v557
        %v563 = vrot.slane %v562, 4
        %v565 = vshll.u32 %v406, 16
        %v567 = vrot.slane %v565, 5
        %v568 = vsel %vm448, %v563, %v567
        %v570 = vshrl.u32 %v407, 16
        %v572 = vrot.slane %v570, 4
        %v573 = vshll.u32 %v407, 16
        %v575 = vrot.slane %v573, 5
        %v576 = vor.u32 %v572, %v575
        %v577 = vrot.slane %v576, 4
        %v579 = vshll.u32 %v408, 16
        %v581 = vrot.slane %v579, 5
        %v582 = vsel %vm448, %v577, %v581
        %v583 = vshrl.u32 %v408, 16
        %v585 = vrot.slane %v583, 4
        %v586 = vor.u32 %v585, %v581
        %v587 = vrot.slane %v586, 4
        %v589 = vshll.u32 %v409, 16
        %v591 = vrot.slane %v589, 5
        %v592 = vsel %vm448, %v587, %v591
        %v594 = vshrl.u32 %v410, 16
        %v596 = vrot.slane %v594, 4
        %v597 = vshll.u32 %v410, 16
        %v599 = vrot.slane %v597, 5
        %v600 = vor.u32 %v596, %v599
        %v601 = vrot.slane %v600, 4
        %v603 = vshll.u32 %v411, 16
        %v605 = vrot.slane %v603, 5
        %v606 = vsel %vm448, %v601, %v605
        %v607 = vshrl.u32 %v411, 16
        %v609 = vrot.slane %v607, 4
        %v610 = vor.u32 %v609, %v605
        %v611 = vrot.slane %v610, 4
        %v613 = vshll.u32 %v412, 16
        %v615 = vrot.slane %v613, 5
        %v616 = vsel %vm448, %v611, %v615
        %v618 = vshrl.u32 %v413, 16
        %v620 = vrot.slane %v618, 4
        %v621 = vshll.u32 %v413, 16
        %v623 = vrot.slane %v621, 5
        %v624 = vor.u32 %v620, %v623
        %v625 = vrot.slane %v624, 4
        %v627 = vshll.u32 %v414, 16
        %v629 = vrot.slane %v627, 5
        %v630 = vsel %vm448, %v625, %v629
        %v631 = vshrl.u32 %v414, 16
        %v633 = vrot.slane %v631, 4
        %v634 = vor.u32 %v633, %v629
        %v635 = vrot.slane %v634, 4
        %v637 = vshll.u32 %v415, 16
        %v639 = vrot.slane %v637, 5
        %v640 = vsel %vm448, %v635, %v639
        %v642 = vshrl.u32 %v416, 16
        %v644 = vrot.slane %v642, 4
        %v645 = vshll.u32 %v416, 16
        %v647 = vrot.slane %v645, 5
        %v648 = vor.u32 %v644, %v647
        %v649 = vrot.slane %v648, 4
        %v651 = vshll.u32 %v417, 16
        %v653 = vrot.slane %v651, 5
        %v654 = vsel %vm448, %v649, %v653
        %v655 = vshrl.u32 %v417, 16
        %v657 = vrot.slane %v655, 4
        %v658 = vor.u32 %v657, %v653
        %v659 = vrot.slane %v658, 4
        %v661 = vshll.u32 %v418, 16
        %v663 = vrot.slane %v661, 5
        %v664 = vsel %vm448, %v659, %v663
        %v666 = vshrl.u32 %v419, 16
        %v668 = vrot.slane %v666, 4
        %v669 = vshll.u32 %v419, 16
        %v671 = vrot.slane %v669, 5
        %v672 = vor.u32 %v668, %v671
        %v673 = vrot.slane %v672, 4
        %v675 = vshll.u32 %v420, 16
        %v677 = vrot.slane %v675, 5
        %v678 = vsel %vm448, %v673, %v677
        %v679 = vshrl.u32 %v420, 16
        %v681 = vrot.slane %v679, 4
        %v682 = vor.u32 %v681, %v677
        %v683 = vrot.slane %v682, 4
        %v685 = vshll.u32 %v421, 16
        %v687 = vrot.slane %v685, 5
        %v688 = vsel %vm448, %v683, %v687
        %v690 = vshrl.u32 %v422, 16
        %v692 = vrot.slane %v690, 4
        %v693 = vshll.u32 %v422, 16
        %v695 = vrot.slane %v693, 5
        %v696 = vor.u32 %v692, %v695
        %v697 = vrot.slane %v696, 4
        %v699 = vshll.u32 %v423, 16
        %v701 = vrot.slane %v699, 5
        %v702 = vsel %vm448, %v697, %v701
        %v703 = vshrl.u32 %v423, 16
        %v705 = vrot.slane %v703, 4
        %v706 = vor.u32 %v705, %v701
        %v707 = vrot.slane %v706, 4
        %v709 = vshll.u32 %v424, 16
        %v711 = vrot.slane %v709, 5
        %v712 = vsel %vm448, %v707, %v711
        %v714 = vshrl.u32 %v425, 16
        %v716 = vrot.slane %v714, 4
        %v717 = vshll.u32 %v425, 16
        %v719 = vrot.slane %v717, 5
        %v720 = vor.u32 %v716, %v719
        %v721 = vrot.slane %v720, 4
        %v723 = vshll.u32 %v426, 16
        %v725 = vrot.slane %v723, 5
        %v726 = vsel %vm448, %v721, %v725
        %v727 = vshrl.u32 %v426, 16
        %v729 = vrot.slane %v727, 4
        %v730 = vor.u32 %v729, %v725
        %v731 = vrot.slane %v730, 4
        %v733 = vshll.u32 %v427, 16
        %v735 = vrot.slane %v733, 5
        %v736 = vsel %vm448, %v731, %v735
        %v738 = vshrl.u32 %v428, 16
        %v740 = vrot.slane %v738, 4
        %v741 = vshll.u32 %v428, 16
        %v743 = vrot.slane %v741, 5
        %v744 = vor.u32 %v740, %v743
        %v745 = vrot.slane %v744, 4
        %v747 = vshll.u32 %v429, 16
        %v749 = vrot.slane %v747, 5
        %v750 = vsel %vm448, %v745, %v749
        %v751 = vshrl.u32 %v429, 16
        %v753 = vrot.slane %v751, 4
        %v754 = vor.u32 %v753, %v749
        %v755 = vrot.slane %v754, 4
        %v757 = vshll.u32 %v430, 16
        %v759 = vrot.slane %v757, 5
        %v760 = vsel %vm448, %v755, %v759
        %v762 = vshrl.u32 %v431, 16
        %v764 = vrot.slane %v762, 4
        %v765 = vshll.u32 %v431, 16
        %v767 = vrot.slane %v765, 5
        %v768 = vor.u32 %v764, %v767
        %v769 = vrot.slane %v768, 4
        %v771 = vshll.u32 %v432, 16
        %v773 = vrot.slane %v771, 5
        %v774 = vsel %vm448, %v769, %v773
        %v775 = vshrl.u32 %v432, 16
        %v777 = vrot.slane %v775, 4
        %v778 = vor.u32 %v777, %v773
        %v779 = vrot.slane %v778, 4
        %v781 = vshll.u32 %v433, 16
        %v783 = vrot.slane %v781, 5
        %v784 = vsel %vm448, %v779, %v783
        %v786 = vshrl.u32 %v434, 16
        %v788 = vrot.slane %v786, 4
        %v789 = vshll.u32 %v434, 16
        %v791 = vrot.slane %v789, 5
        %v792 = vor.u32 %v788, %v791
        %v793 = vrot.slane %v792, 4
        %v795 = vshll.u32 %v435, 16
        %v797 = vrot.slane %v795, 5
        %v798 = vsel %vm448, %v793, %v797
        %v799 = vshrl.u32 %v435, 16
        %v801 = vrot.slane %v799, 4
        %v802 = vor.u32 %v801, %v797
        %v803 = vrot.slane %v802, 4
        %v805 = vshll.u32 %v436, 16
        %v807 = vrot.slane %v805, 5
        %v808 = vsel %vm448, %v803, %v807
        %v810 = vshrl.u32 %v437, 16
        %v812 = vrot.slane %v810, 4
        %v813 = vshll.u32 %v437, 16
        %v815 = vrot.slane %v813, 5
        %v816 = vor.u32 %v812, %v815
        %v817 = vrot.slane %v816, 4
        %v819 = vshll.u32 %v438, 16
        %v821 = vrot.slane %v819, 5
        %v822 = vsel %vm448, %v817, %v821
        %v823 = vshrl.u32 %v438, 16
        %v825 = vrot.slane %v823, 4
        %v826 = vor.u32 %v825, %v821
        %v827 = vrot.slane %v826, 4
        %v829 = vshll.u32 %v439, 16
        %v831 = vrot.slane %v829, 5
        %v832 = vsel %vm448, %v827, %v831
        %v834 = vshrl.u32 %v440, 16
        %v836 = vrot.slane %v834, 4
        %v837 = vshll.u32 %v440, 16
        %v839 = vrot.slane %v837, 5
        %v840 = vor.u32 %v836, %v839
        %v841 = vrot.slane %v840, 4
        %v843 = vshll.u32 %v441, 16
        %v845 = vrot.slane %v843, 5
        %v846 = vsel %vm448, %v841, %v845
        %v847 = vshrl.u32 %v441, 16
        %v849 = vrot.slane %v847, 4
        %v850 = vor.u32 %v849, %v845
        %v851 = vrot.slane %v850, 4
        %v853 = vshll.u32 %v442, 16
        %v855 = vrot.slane %v853, 5
        %v856 = vsel %vm448, %v851, %v855
        %v858 = vshrl.u32 %v443, 16
        %v860 = vrot.slane %v858, 4
        %v861 = vshll.u32 %v443, 16
        %v863 = vrot.slane %v861, 5
        %v864 = vor.u32 %v860, %v863
        %v865 = vrot.slane %v864, 4
        %v867 = vshll.u32 %v444, 16
        %v869 = vrot.slane %v867, 5
        %v870 = vsel %vm448, %v865, %v869
        %v871 = vshrl.u32 %v444, 16
        %v873 = vrot.slane %v871, 4
        %v874 = vor.u32 %v873, %v869
        %v875 = vrot.slane %v874, 4
        %v877 = vshll.u32 %v445, 16
        %v879 = vrot.slane %v877, 5
        %v880 = vsel %vm448, %v875, %v879
        %v881 = vunpack.c.l.b16 %v462
        %v882 = vunpack.c.l.b16 %v472
        %v883 = vunpack.c.l.b16 %v486
        %v884 = vunpack.c.l.b16 %v496
        %v885 = vunpack.c.l.b16 %v510
        %v886 = vunpack.c.l.b16 %v520
        %v887 = vunpack.c.l.b16 %v534
        %v888 = vunpack.c.l.b16 %v544
        %v889 = vunpack.c.l.b16 %v558
        %v890 = vunpack.c.l.b16 %v568
        %v891 = vunpack.c.l.b16 %v582
        %v892 = vunpack.c.l.b16 %v592
        %v893 = vunpack.c.l.b16 %v606
        %v894 = vunpack.c.l.b16 %v616
        %v895 = vunpack.c.l.b16 %v630
        %v896 = vunpack.c.l.b16 %v640
        %v897 = vunpack.c.l.b16 %v654
        %v898 = vunpack.c.l.b16 %v664
        %v899 = vunpack.c.l.b16 %v678
        %v900 = vunpack.c.l.b16 %v688
        %v901 = vunpack.c.l.b16 %v702
        %v902 = vunpack.c.l.b16 %v712
        %v903 = vunpack.c.l.b16 %v726
        %v904 = vunpack.c.l.b16 %v736
        %v905 = vunpack.c.l.b16 %v750
        %v906 = vunpack.c.l.b16 %v760
        %v907 = vunpack.c.l.b16 %v774
        %v908 = vunpack.c.l.b16 %v784
        %v909 = vunpack.c.l.b16 %v798
        %v910 = vunpack.c.l.b16 %v808
        %v911 = vunpack.c.l.b16 %v822
        %v912 = vunpack.c.l.b16 %v832
        %v913 = vunpack.c.l.b16 %v846
        %v914 = vunpack.c.l.b16 %v856
        %v915 = vunpack.c.l.b16 %v870
        %v916 = vunpack.c.l.b16 %v880
        %v917 = vpack.c.b16 %v882, %v881
        %v918 = vpack.c.b16 %v884, %v883
        %v919 = vpack.c.b16 %v886, %v885
        %v920 = vpack.c.b16 %v888, %v887
        %v921 = vpack.c.b16 %v890, %v889
        %v922 = vpack.c.b16 %v892, %v891
        %v923 = vpack.c.b16 %v894, %v893
        %v924 = vpack.c.b16 %v896, %v895
        %v925 = vpack.c.b16 %v898, %v897
        %v926 = vpack.c.b16 %v900, %v899
        %v927 = vpack.c.b16 %v902, %v901
        %v928 = vpack.c.b16 %v904, %v903
        %v929 = vpack.c.b16 %v906, %v905
        %v930 = vpack.c.b16 %v908, %v907
        %v931 = vpack.c.b16 %v910, %v909
        %v932 = vpack.c.b16 %v912, %v911
        %v933 = vpack.c.b16 %v914, %v913
        %v934 = vpack.c.b16 %v916, %v915
        %s953 = scalar_lea.vmem [#allocation2], 144
        %954 = vst.msk [vmem:[%s953] sm:$0xff] %vm373, %v917
        %955 = vst.msk [vmem:[%s953 + $0x8] sm:$0xff] %vm373, %v918
        %956 = vst.msk [vmem:[%s953 + $0x10] sm:$0xff] %vm373, %v919
        %957 = vst.msk [vmem:[%s953 + $0x18] sm:$0xff] %vm373, %v920
        %958 = vst.msk [vmem:[%s953 + $0x20] sm:$0xff] %vm373, %v921
        %959 = vst.msk [vmem:[%s953 + $0x28] sm:$0xff] %vm373, %v922
        %960 = vst.msk [vmem:[%s953 + $0x30] sm:$0xff] %vm373, %v923
        %961 = vst.msk [vmem:[%s953 + $0x38] sm:$0xff] %vm373, %v924
        %962 = vst.msk [vmem:[%s953 + $0x40] sm:$0xff] %vm373, %v925
        %963 = vst.msk [vmem:[%s953 + $0x48] sm:$0xff] %vm373, %v926
        %964 = vst.msk [vmem:[%s953 + $0x50] sm:$0xff] %vm373, %v927
        %965 = vst.msk [vmem:[%s953 + $0x58] sm:$0xff] %vm373, %v928
        %966 = vst.msk [vmem:[%s953 + $0x60] sm:$0xff] %vm373, %v929
        %967 = vst.msk [vmem:[%s953 + $0x68] sm:$0xff] %vm373, %v930
        %968 = vst.msk [vmem:[%s953 + $0x70] sm:$0xff] %vm373, %v931
        %969 = vst.msk [vmem:[%s953 + $0x78] sm:$0xff] %vm373, %v932
        %970 = vst.msk [vmem:[%s953 + $0x80] sm:$0xff] %vm373, %v933
        %971 = vst.msk [vmem:[%s953 + $0x88] sm:$0xff] %vm373, %v934
        %v972 = vld [vmem:[%s228] sm:$0xe]
        %v973 = vld [vmem:[%s228 + $0x4] sm:$0xf]
        %v974 = vld [vmem:[%s228 + $0x8] sm:$0x1]
        %v975 = vld [vmem:[%s228 + $0xc] sm:$0xe]
        %v976 = vld [vmem:[%s228 + $0x10] sm:$0xf]
        %v977 = vld [vmem:[%s228 + $0x14] sm:$0x1]
        %v978 = vld [vmem:[%s228 + $0x18] sm:$0xe]
        %v979 = vld [vmem:[%s228 + $0x1c] sm:$0xf]
        %v980 = vld [vmem:[%s228 + $0x20] sm:$0x1]
        %v981 = vld [vmem:[%s228 + $0x24] sm:$0xe]
        %v982 = vld [vmem:[%s228 + $0x28] sm:$0xf]
        %v983 = vld [vmem:[%s228 + $0x2c] sm:$0x1]
        %v984 = vld [vmem:[%s228 + $0x30] sm:$0xe]
        %v985 = vld [vmem:[%s228 + $0x34] sm:$0xf]
        %v986 = vld [vmem:[%s228 + $0x38] sm:$0x1]
        %v987 = vld [vmem:[%s228 + $0x3c] sm:$0xe]
        %v988 = vld [vmem:[%s228 + $0x40] sm:$0xf]
        %v989 = vld [vmem:[%s228 + $0x44] sm:$0x1]
        %v990 = vld [vmem:[%s228 + $0x48] sm:$0xe]
        %v991 = vld [vmem:[%s228 + $0x4c] sm:$0xf]
        %v992 = vld [vmem:[%s228 + $0x50] sm:$0x1]
        %v993 = vld [vmem:[%s228 + $0x54] sm:$0xe]
        %v994 = vld [vmem:[%s228 + $0x58] sm:$0xf]
        %v995 = vld [vmem:[%s228 + $0x5c] sm:$0x1]
        %v996 = vld [vmem:[%s228 + $0x60] sm:$0xe]
        %v997 = vld [vmem:[%s228 + $0x64] sm:$0xf]
        %v998 = vld [vmem:[%s228 + $0x68] sm:$0x1]
        %v999 = vld [vmem:[%s228 + $0x6c] sm:$0xe]
        %v1000 = vld [vmem:[%s228 + $0x70] sm:$0xf]
        %v1001 = vld [vmem:[%s228 + $0x74] sm:$0x1]
        %v1002 = vld [vmem:[%s228 + $0x78] sm:$0xe]
        %v1003 = vld [vmem:[%s228 + $0x7c] sm:$0xf]
        %v1004 = vld [vmem:[%s228 + $0x80] sm:$0x1]
        %v1005 = vld [vmem:[%s228 + $0x84] sm:$0xe]
        %v1006 = vld [vmem:[%s228 + $0x88] sm:$0xf]
        %v1007 = vld [vmem:[%s228 + $0x8c] sm:$0x1]
        %v1008 = vld [vmem:[%s228 + $0x90] sm:$0xe]
        %v1009 = vld [vmem:[%s228 + $0x94] sm:$0xf]
        %v1010 = vld [vmem:[%s228 + $0x98] sm:$0x1]
        %v1011 = vld [vmem:[%s228 + $0x9c] sm:$0xe]
        %v1012 = vld [vmem:[%s228 + $0xa0] sm:$0xf]
        %v1013 = vld [vmem:[%s228 + $0xa4] sm:$0x1]
        %v1014 = vld [vmem:[%s228 + $0xa8] sm:$0xe]
        %v1015 = vld [vmem:[%s228 + $0xac] sm:$0xf]
        %v1016 = vld [vmem:[%s228 + $0xb0] sm:$0x1]
        %v1017 = vld [vmem:[%s228 + $0xb4] sm:$0xe]
        %v1018 = vld [vmem:[%s228 + $0xb8] sm:$0xf]
        %v1019 = vld [vmem:[%s228 + $0xbc] sm:$0x1]
        %v1020 = vld [vmem:[%s228 + $0xc0] sm:$0xe]
        %v1021 = vld [vmem:[%s228 + $0xc4] sm:$0xf]
        %v1022 = vld [vmem:[%s228 + $0xc8] sm:$0x1]
        %v1023 = vld [vmem:[%s228 + $0xcc] sm:$0xe]
        %v1024 = vld [vmem:[%s228 + $0xd0] sm:$0xf]
        %v1025 = vld [vmem:[%s228 + $0xd4] sm:$0x1]
        %vm1080 = vcmask 1042432
        %vm1081 = vcmask 1046532
        %vm1082 = vmor %vm1080, %vm1081
        %v1083 = vrot.slane %v972, 5
        %v1084 = vrot.slane %v1083, 4
        %v1085 = vrot.slane %v973, 5
        %v1086 = vsel %vm1082, %v1084, %v1085
        %v1087 = vrot.slane %v1085, 4
        %v1088 = vrot.slane %v974, 5
        %v1089 = vsel %vm1082, %v1087, %v1088
        %v1090 = vrot.slane %v975, 5
        %v1091 = vrot.slane %v1090, 4
        %v1092 = vrot.slane %v976, 5
        %v1093 = vsel %vm1082, %v1091, %v1092
        %v1094 = vrot.slane %v1092, 4
        %v1095 = vrot.slane %v977, 5
        %v1096 = vsel %vm1082, %v1094, %v1095
        %v1097 = vrot.slane %v978, 5
        %v1098 = vrot.slane %v1097, 4
        %v1099 = vrot.slane %v979, 5
        %v1100 = vsel %vm1082, %v1098, %v1099
        %v1101 = vrot.slane %v1099, 4
        %v1102 = vrot.slane %v980, 5
        %v1103 = vsel %vm1082, %v1101, %v1102
        %v1104 = vrot.slane %v981, 5
        %v1105 = vrot.slane %v1104, 4
        %v1106 = vrot.slane %v982, 5
        %v1107 = vsel %vm1082, %v1105, %v1106
        %v1108 = vrot.slane %v1106, 4
        %v1109 = vrot.slane %v983, 5
        %v1110 = vsel %vm1082, %v1108, %v1109
        %v1111 = vrot.slane %v984, 5
        %v1112 = vrot.slane %v1111, 4
        %v1113 = vrot.slane %v985, 5
        %v1114 = vsel %vm1082, %v1112, %v1113
        %v1115 = vrot.slane %v1113, 4
        %v1116 = vrot.slane %v986, 5
        %v1117 = vsel %vm1082, %v1115, %v1116
        %v1118 = vrot.slane %v987, 5
        %v1119 = vrot.slane %v1118, 4
        %v1120 = vrot.slane %v988, 5
        %v1121 = vsel %vm1082, %v1119, %v1120
        %v1122 = vrot.slane %v1120, 4
        %v1123 = vrot.slane %v989, 5
        %v1124 = vsel %vm1082, %v1122, %v1123
        %v1125 = vrot.slane %v990, 5
        %v1126 = vrot.slane %v1125, 4
        %v1127 = vrot.slane %v991, 5
        %v1128 = vsel %vm1082, %v1126, %v1127
        %v1129 = vrot.slane %v1127, 4
        %v1130 = vrot.slane %v992, 5
        %v1131 = vsel %vm1082, %v1129, %v1130
        %v1132 = vrot.slane %v993, 5
        %v1133 = vrot.slane %v1132, 4
        %v1134 = vrot.slane %v994, 5
        %v1135 = vsel %vm1082, %v1133, %v1134
        %v1136 = vrot.slane %v1134, 4
        %v1137 = vrot.slane %v995, 5
        %v1138 = vsel %vm1082, %v1136, %v1137
        %v1139 = vrot.slane %v996, 5
        %v1140 = vrot.slane %v1139, 4
        %v1141 = vrot.slane %v997, 5
        %v1142 = vsel %vm1082, %v1140, %v1141
        %v1143 = vrot.slane %v1141, 4
        %v1144 = vrot.slane %v998, 5
        %v1145 = vsel %vm1082, %v1143, %v1144
        %v1146 = vrot.slane %v999, 5
        %v1147 = vrot.slane %v1146, 4
        %v1148 = vrot.slane %v1000, 5
        %v1149 = vsel %vm1082, %v1147, %v1148
        %v1150 = vrot.slane %v1148, 4
        %v1151 = vrot.slane %v1001, 5
        %v1152 = vsel %vm1082, %v1150, %v1151
        %v1153 = vrot.slane %v1002, 5
        %v1154 = vrot.slane %v1153, 4
        %v1155 = vrot.slane %v1003, 5
        %v1156 = vsel %vm1082, %v1154, %v1155
        %v1157 = vrot.slane %v1155, 4
        %v1158 = vrot.slane %v1004, 5
        %v1159 = vsel %vm1082, %v1157, %v1158
        %v1160 = vrot.slane %v1005, 5
        %v1161 = vrot.slane %v1160, 4
        %v1162 = vrot.slane %v1006, 5
        %v1163 = vsel %vm1082, %v1161, %v1162
        %v1164 = vrot.slane %v1162, 4
        %v1165 = vrot.slane %v1007, 5
        %v1166 = vsel %vm1082, %v1164, %v1165
        %v1167 = vrot.slane %v1008, 5
        %v1168 = vrot.slane %v1167, 4
        %v1169 = vrot.slane %v1009, 5
        %v1170 = vsel %vm1082, %v1168, %v1169
        %v1171 = vrot.slane %v1169, 4
        %v1172 = vrot.slane %v1010, 5
        %v1173 = vsel %vm1082, %v1171, %v1172
        %v1174 = vrot.slane %v1011, 5
        %v1175 = vrot.slane %v1174, 4
        %v1176 = vrot.slane %v1012, 5
        %v1177 = vsel %vm1082, %v1175, %v1176
        %v1178 = vrot.slane %v1176, 4
        %v1179 = vrot.slane %v1013, 5
        %v1180 = vsel %vm1082, %v1178, %v1179
        %v1181 = vrot.slane %v1014, 5
        %v1182 = vrot.slane %v1181, 4
        %v1183 = vrot.slane %v1015, 5
        %v1184 = vsel %vm1082, %v1182, %v1183
        %v1185 = vrot.slane %v1183, 4
        %v1186 = vrot.slane %v1016, 5
        %v1187 = vsel %vm1082, %v1185, %v1186
        %v1188 = vrot.slane %v1017, 5
        %v1189 = vrot.slane %v1188, 4
        %v1190 = vrot.slane %v1018, 5
        %v1191 = vsel %vm1082, %v1189, %v1190
        %v1192 = vrot.slane %v1190, 4
        %v1193 = vrot.slane %v1019, 5
        %v1194 = vsel %vm1082, %v1192, %v1193
        %v1195 = vrot.slane %v1020, 5
        %v1196 = vrot.slane %v1195, 4
        %v1197 = vrot.slane %v1021, 5
        %v1198 = vsel %vm1082, %v1196, %v1197
        %v1199 = vrot.slane %v1197, 4
        %v1200 = vrot.slane %v1022, 5
        %v1201 = vsel %vm1082, %v1199, %v1200
        %v1202 = vrot.slane %v1023, 5
        %v1203 = vrot.slane %v1202, 4
        %v1204 = vrot.slane %v1024, 5
        %v1205 = vsel %vm1082, %v1203, %v1204
        %v1206 = vrot.slane %v1204, 4
        %v1207 = vrot.slane %v1025, 5
        %v1208 = vsel %vm1082, %v1206, %v1207
        %v1209 = vunpack.c.l.b16 %v1086
        %v1210 = vunpack.c.l.b16 %v1089
        %v1211 = vunpack.c.l.b16 %v1093
        %v1212 = vunpack.c.l.b16 %v1096
        %v1213 = vunpack.c.l.b16 %v1100
        %v1214 = vunpack.c.l.b16 %v1103
        %v1215 = vunpack.c.l.b16 %v1107
        %v1216 = vunpack.c.l.b16 %v1110
        %v1217 = vunpack.c.l.b16 %v1114
        %v1218 = vunpack.c.l.b16 %v1117
        %v1219 = vunpack.c.l.b16 %v1121
        %v1220 = vunpack.c.l.b16 %v1124
        %v1221 = vunpack.c.l.b16 %v1128
        %v1222 = vunpack.c.l.b16 %v1131
        %v1223 = vunpack.c.l.b16 %v1135
        %v1224 = vunpack.c.l.b16 %v1138
        %v1225 = vunpack.c.l.b16 %v1142
        %v1226 = vunpack.c.l.b16 %v1145
        %v1227 = vunpack.c.l.b16 %v1149
        %v1228 = vunpack.c.l.b16 %v1152
        %v1229 = vunpack.c.l.b16 %v1156
        %v1230 = vunpack.c.l.b16 %v1159
        %v1231 = vunpack.c.l.b16 %v1163
        %v1232 = vunpack.c.l.b16 %v1166
        %v1233 = vunpack.c.l.b16 %v1170
        %v1234 = vunpack.c.l.b16 %v1173
        %v1235 = vunpack.c.l.b16 %v1177
        %v1236 = vunpack.c.l.b16 %v1180
        %v1237 = vunpack.c.l.b16 %v1184
        %v1238 = vunpack.c.l.b16 %v1187
        %v1239 = vunpack.c.l.b16 %v1191
        %v1240 = vunpack.c.l.b16 %v1194
        %v1241 = vunpack.c.l.b16 %v1198
        %v1242 = vunpack.c.l.b16 %v1201
        %v1243 = vunpack.c.l.b16 %v1205
        %v1244 = vunpack.c.l.b16 %v1208
        %v1245 = vpack.c.b16 %v1210, %v1209
        %v1246 = vpack.c.b16 %v1212, %v1211
        %v1247 = vpack.c.b16 %v1214, %v1213
        %v1248 = vpack.c.b16 %v1216, %v1215
        %v1249 = vpack.c.b16 %v1218, %v1217
        %v1250 = vpack.c.b16 %v1220, %v1219
        %v1251 = vpack.c.b16 %v1222, %v1221
        %v1252 = vpack.c.b16 %v1224, %v1223
        %v1253 = vpack.c.b16 %v1226, %v1225
        %v1254 = vpack.c.b16 %v1228, %v1227
        %v1255 = vpack.c.b16 %v1230, %v1229
        %v1256 = vpack.c.b16 %v1232, %v1231
        %v1257 = vpack.c.b16 %v1234, %v1233
        %v1258 = vpack.c.b16 %v1236, %v1235
        %v1259 = vpack.c.b16 %v1238, %v1237
        %v1260 = vpack.c.b16 %v1240, %v1239
        %v1261 = vpack.c.b16 %v1242, %v1241
        %v1262 = vpack.c.b16 %v1244, %v1243
        %s1281 = scalar_lea.vmem [#allocation2], 288
        %1282 = vst.msk [vmem:[%s1281] sm:$0xff] %vm373, %v1245
        %1283 = vst.msk [vmem:[%s1281 + $0x8] sm:$0xff] %vm373, %v1246
        %1284 = vst.msk [vmem:[%s1281 + $0x10] sm:$0xff] %vm373, %v1247
        %1285 = vst.msk [vmem:[%s1281 + $0x18] sm:$0xff] %vm373, %v1248
        %1286 = vst.msk [vmem:[%s1281 + $0x20] sm:$0xff] %vm373, %v1249
        %1287 = vst.msk [vmem:[%s1281 + $0x28] sm:$0xff] %vm373, %v1250
        %1288 = vst.msk [vmem:[%s1281 + $0x30] sm:$0xff] %vm373, %v1251
        %1289 = vst.msk [vmem:[%s1281 + $0x38] sm:$0xff] %vm373, %v1252
        %1290 = vst.msk [vmem:[%s1281 + $0x40] sm:$0xff] %vm373, %v1253
        %1291 = vst.msk [vmem:[%s1281 + $0x48] sm:$0xff] %vm373, %v1254
        %1292 = vst.msk [vmem:[%s1281 + $0x50] sm:$0xff] %vm373, %v1255
        %1293 = vst.msk [vmem:[%s1281 + $0x58] sm:$0xff] %vm373, %v1256
        %1294 = vst.msk [vmem:[%s1281 + $0x60] sm:$0xff] %vm373, %v1257
        %1295 = vst.msk [vmem:[%s1281 + $0x68] sm:$0xff] %vm373, %v1258
        %1296 = vst.msk [vmem:[%s1281 + $0x70] sm:$0xff] %vm373, %v1259
        %1297 = vst.msk [vmem:[%s1281 + $0x78] sm:$0xff] %vm373, %v1260
        %1298 = vst.msk [vmem:[%s1281 + $0x80] sm:$0xff] %vm373, %v1261
        %1299 = vst.msk [vmem:[%s1281 + $0x88] sm:$0xff] %vm373, %v1262
        %v1300 = vld [vmem:[#allocation2] sm:$0xff]
        %v1301 = vld [vmem:[#allocation2 + $0x8] sm:$0xff]
        %v1302 = vld [vmem:[#allocation2 + $0x10] sm:$0xff]
        %v1303 = vld [vmem:[#allocation2 + $0x18] sm:$0xff]
        %v1304 = vld [vmem:[#allocation2 + $0x20] sm:$0xff]
        %v1305 = vld [vmem:[#allocation2 + $0x28] sm:$0xff]
        %v1306 = vld [vmem:[#allocation2 + $0x30] sm:$0xff]
        %v1307 = vld [vmem:[#allocation2 + $0x38] sm:$0xff]
        %v1308 = vld [vmem:[#allocation2 + $0x40] sm:$0xff]
        %v1309 = vld [vmem:[#allocation2 + $0x48] sm:$0xff]
        %v1310 = vld [vmem:[#allocation2 + $0x50] sm:$0xff]
        %v1311 = vld [vmem:[#allocation2 + $0x58] sm:$0xff]
        %v1312 = vld [vmem:[#allocation2 + $0x60] sm:$0xff]
        %v1313 = vld [vmem:[#allocation2 + $0x68] sm:$0xff]
        %v1314 = vld [vmem:[#allocation2 + $0x70] sm:$0xff]
        %v1315 = vld [vmem:[#allocation2 + $0x78] sm:$0xff]
        %v1316 = vld [vmem:[%s219] sm:$0xf]
        %v1317 = vld [vmem:[%s219 + $0x4] sm:$0xf]
        %v1318 = vld [vmem:[%s219 + $0x8] sm:$0xf]
        %v1319 = vld [vmem:[%s219 + $0xc] sm:$0xf]
        %v1324 = vunpack.c.l.b16 %v1316
        %v1325 = vunpack.c.l.b16 %v1317
        %v1326 = vunpack.c.l.b16 %v1318
        %v1327 = vunpack.c.l.b16 %v1319
        %v1328 = vpack.c.b16 %v1325, %v1324
        %v1329 = vpack.c.b16 %v1327, %v1326
        %v1333 = vsel %vm373, %v1300, 0
        %v1336 = vsel %vm373, %v1301, 0
        %v1339 = vsel %vm373, %v1302, 0
        %v1342 = vsel %vm373, %v1303, 0
        %v1345 = vsel %vm373, %v1304, 0
        %v1348 = vsel %vm373, %v1305, 0
        %v1351 = vsel %vm373, %v1306, 0
        %v1354 = vsel %vm373, %v1307, 0
        %v1357 = vsel %vm373, %v1308, 0
        %v1360 = vsel %vm373, %v1309, 0
        %v1363 = vsel %vm373, %v1310, 0
        %v1366 = vsel %vm373, %v1311, 0
        %v1369 = vsel %vm373, %v1312, 0
        %v1372 = vsel %vm373, %v1313, 0
        %v1375 = vsel %vm373, %v1314, 0
        %v1378 = vsel %vm373, %v1315, 0
        %1380 = vmatprep.subr.bf16.mxu0 0
        %1381 = vmatpush1.bf16.msra.mxu0 %v1328
        %1382 = vmatprep.subr.bf16.mxu0 0
        %1383 = vmatpush1.bf16.msra.mxu0 %v1329
        %1384 = vmatprep.subr.bf16.mxu0 0
        %1385 = vmatpush1.bf16.msra.mxu0 0
        %1386 = vmatprep.subr.bf16.mxu0 0
        %1387 = vmatpush1.bf16.msra.mxu0 0
        %1388 = vmatprep.subr.bf16.mxu0 0
        %1389 = vmatpush1.bf16.msra.mxu0 0
        %1390 = vmatprep.subr.bf16.mxu0 0
        %1391 = vmatpush1.bf16.msra.mxu0 0
        %1392 = vmatprep.subr.bf16.mxu0 0
        %1393 = vmatpush1.bf16.msra.mxu0 0
        %1394 = vmatprep.subr.bf16.mxu0 0
        %1395 = vmatpush1.bf16.msra.mxu0 0
        %1396 = vmatprep.subr.bf16.mxu0 0
        %1397 = vmatpush1.bf16.msra.mxu0 0
        %1398 = vmatprep.subr.bf16.mxu0 0
        %1399 = vmatpush1.bf16.msra.mxu0 0
        %1400 = vmatprep.subr.bf16.mxu0 0
        %1401 = vmatpush1.bf16.msra.mxu0 0
        %1402 = vmatprep.subr.bf16.mxu0 0
        %1403 = vmatpush1.bf16.msra.mxu0 0
        %1404 = vmatprep.subr.bf16.mxu0 0
        %1405 = vmatpush1.bf16.msra.mxu0 0
        %1406 = vmatprep.subr.bf16.mxu0 0
        %1407 = vmatpush1.bf16.msra.mxu0 0
        %1408 = vmatprep.subr.bf16.mxu0 0
        %1409 = vmatpush1.bf16.msra.mxu0 0
        %1410 = vmatprep.subr.bf16.mxu0 0
        %1411 = vmatpush1.bf16.msra.mxu0 0
        %1412 = vmatprep.mubr.bf16.mxu0 0
        %1413 = vmatmul.mubr.bf16.gmra.mrb[0].mxu0 %v1333
        %v1414 = vpop.f32.mrb[0].mxu0
        %v1415 = vadd.f32 0.0, %v1414
        %v1416 = vpop.f32.mrb[0].mxu0
        %v1417 = vpop.f32.mrb[0].mxu0
        %v1418 = vadd.f32 0.0, %v1417
        %v1419 = vpop.f32.mrb[0].mxu0
        %1420 = vmatprep.mubr.bf16.mxu0 0
        %1421 = vmatmul.mubr.bf16.gmra.mrb[0].mxu0 %v1336
        %v1422 = vpop.f32.mrb[0].mxu0
        %v1423 = vadd.f32 0.0, %v1422
        %v1424 = vpop.f32.mrb[0].mxu0
        %v1425 = vpop.f32.mrb[0].mxu0
        %v1426 = vadd.f32 0.0, %v1425
        %v1427 = vpop.f32.mrb[0].mxu0
        %1428 = vmatprep.mubr.bf16.mxu0 0
        %1429 = vmatmul.mubr.bf16.gmra.mrb[0].mxu0 %v1339
        %v1430 = vpop.f32.mrb[0].mxu0
        %v1431 = vadd.f32 0.0, %v1430
        %v1432 = vpop.f32.mrb[0].mxu0
        %v1433 = vpop.f32.mrb[0].mxu0
        %v1434 = vadd.f32 0.0, %v1433
        %v1435 = vpop.f32.mrb[0].mxu0
        %1436 = vmatprep.mubr.bf16.mxu0 0
        %1437 = vmatmul.mubr.bf16.gmra.mrb[0].mxu0 %v1342
        %v1438 = vpop.f32.mrb[0].mxu0
        %v1439 = vadd.f32 0.0, %v1438
        %v1440 = vpop.f32.mrb[0].mxu0
        %v1441 = vpop.f32.mrb[0].mxu0
        %v1442 = vadd.f32 0.0, %v1441
        %v1443 = vpop.f32.mrb[0].mxu0
        %1444 = vmatprep.mubr.bf16.mxu0 0
        %1445 = vmatmul.mubr.bf16.gmra.mrb[0].mxu0 %v1345
        %v1446 = vpop.f32.mrb[0].mxu0
        %v1447 = vadd.f32 0.0, %v1446
        %v1448 = vpop.f32.mrb[0].mxu0
        %v1449 = vpop.f32.mrb[0].mxu0
        %v1450 = vadd.f32 0.0, %v1449
        %v1451 = vpop.f32.mrb[0].mxu0
        %1452 = vmatprep.mubr.bf16.mxu0 0
        %1453 = vmatmul.mubr.bf16.gmra.mrb[0].mxu0 %v1348
        %v1454 = vpop.f32.mrb[0].mxu0
        %v1455 = vadd.f32 0.0, %v1454
        %v1456 = vpop.f32.mrb[0].mxu0
        %v1457 = vpop.f32.mrb[0].mxu0
        %v1458 = vadd.f32 0.0, %v1457
        %v1459 = vpop.f32.mrb[0].mxu0
        %1460 = vmatprep.mubr.bf16.mxu0 0
        %1461 = vmatmul.mubr.bf16.gmra.mrb[0].mxu0 %v1351
        %v1462 = vpop.f32.mrb[0].mxu0
        %v1463 = vadd.f32 0.0, %v1462
        %v1464 = vpop.f32.mrb[0].mxu0
        %v1465 = vpop.f32.mrb[0].mxu0
        %v1466 = vadd.f32 0.0, %v1465
        %v1467 = vpop.f32.mrb[0].mxu0
        %1468 = vmatprep.mubr.bf16.mxu0 0
        %1469 = vmatmul.mubr.bf16.gmra.mrb[0].mxu0 %v1354
        %v1470 = vpop.f32.mrb[0].mxu0
        %v1471 = vadd.f32 0.0, %v1470
        %v1472 = vpop.f32.mrb[0].mxu0
        %v1473 = vpop.f32.mrb[0].mxu0
        %v1474 = vadd.f32 0.0, %v1473
        %v1475 = vpop.f32.mrb[0].mxu0
        %1476 = vmatprep.mubr.bf16.mxu0 0
        %1477 = vmatmul.mubr.bf16.gmra.mrb[0].mxu0 %v1357
        %v1478 = vpop.f32.mrb[0].mxu0
        %v1479 = vadd.f32 0.0, %v1478
        %v1480 = vpop.f32.mrb[0].mxu0
        %v1481 = vpop.f32.mrb[0].mxu0
        %v1482 = vadd.f32 0.0, %v1481
        %v1483 = vpop.f32.mrb[0].mxu0
        %1484 = vmatprep.mubr.bf16.mxu0 0
        %1485 = vmatmul.mubr.bf16.gmra.mrb[0].mxu0 %v1360
        %v1486 = vpop.f32.mrb[0].mxu0
        %v1487 = vadd.f32 0.0, %v1486
        %v1488 = vpop.f32.mrb[0].mxu0
        %v1489 = vpop.f32.mrb[0].mxu0
        %v1490 = vadd.f32 0.0, %v1489
        %v1491 = vpop.f32.mrb[0].mxu0
        %1492 = vmatprep.mubr.bf16.mxu0 0
        %1493 = vmatmul.mubr.bf16.gmra.mrb[0].mxu0 %v1363
        %v1494 = vpop.f32.mrb[0].mxu0
        %v1495 = vadd.f32 0.0, %v1494
        %v1496 = vpop.f32.mrb[0].mxu0
        %v1497 = vpop.f32.mrb[0].mxu0
        %v1498 = vadd.f32 0.0, %v1497
        %v1499 = vpop.f32.mrb[0].mxu0
        %1500 = vmatprep.mubr.bf16.mxu0 0
        %1501 = vmatmul.mubr.bf16.gmra.mrb[0].mxu0 %v1366
        %v1502 = vpop.f32.mrb[0].mxu0
        %v1503 = vadd.f32 0.0, %v1502
        %v1504 = vpop.f32.mrb[0].mxu0
        %v1505 = vpop.f32.mrb[0].mxu0
        %v1506 = vadd.f32 0.0, %v1505
        %v1507 = vpop.f32.mrb[0].mxu0
        %1508 = vmatprep.mubr.bf16.mxu0 0
        %1509 = vmatmul.mubr.bf16.gmra.mrb[0].mxu0 %v1369
        %v1510 = vpop.f32.mrb[0].mxu0
        %v1511 = vadd.f32 0.0, %v1510
        %v1512 = vpop.f32.mrb[0].mxu0
        %v1513 = vpop.f32.mrb[0].mxu0
        %v1514 = vadd.f32 0.0, %v1513
        %v1515 = vpop.f32.mrb[0].mxu0
        %1516 = vmatprep.mubr.bf16.mxu0 0
        %1517 = vmatmul.mubr.bf16.gmra.mrb[0].mxu0 %v1372
        %v1518 = vpop.f32.mrb[0].mxu0
        %v1519 = vadd.f32 0.0, %v1518
        %v1520 = vpop.f32.mrb[0].mxu0
        %v1521 = vpop.f32.mrb[0].mxu0
        %v1522 = vadd.f32 0.0, %v1521
        %v1523 = vpop.f32.mrb[0].mxu0
        %1524 = vmatprep.mubr.bf16.mxu0 0
        %1525 = vmatmul.mubr.bf16.gmra.mrb[0].mxu0 %v1375
        %v1526 = vpop.f32.mrb[0].mxu0
        %v1527 = vadd.f32 0.0, %v1526
        %v1528 = vpop.f32.mrb[0].mxu0
        %v1529 = vpop.f32.mrb[0].mxu0
        %v1530 = vadd.f32 0.0, %v1529
        %v1531 = vpop.f32.mrb[0].mxu0
        %1532 = vmatprep.mubr.bf16.mxu0 0
        %1533 = vmatmul.mubr.bf16.gmra.mrb[0].mxu0 %v1378
        %v1534 = vpop.f32.mrb[0].mxu0
        %v1535 = vadd.f32 0.0, %v1534
        %v1536 = vpop.f32.mrb[0].mxu0
        %v1537 = vpop.f32.mrb[0].mxu0
        %v1538 = vadd.f32 0.0, %v1537
        %v1539 = vpop.f32.mrb[0].mxu0
        %1540 = vdwg.mxu0
        %1541 = vst [vmem:[#allocation3] sm:$0xff] %v1415
        %1542 = vst [vmem:[#allocation3 + $0x8] sm:$0xff] %v1418
        %1543 = vst [vmem:[#allocation3 + $0x10] sm:$0xff] %v1423
        %1544 = vst [vmem:[#allocation3 + $0x18] sm:$0xff] %v1426
        %1545 = vst [vmem:[#allocation3 + $0x20] sm:$0xff] %v1431
        %1546 = vst [vmem:[#allocation3 + $0x28] sm:$0xff] %v1434
        %1547 = vst [vmem:[#allocation3 + $0x30] sm:$0xff] %v1439
        %1548 = vst [vmem:[#allocation3 + $0x38] sm:$0xff] %v1442
        %1549 = vst [vmem:[#allocation3 + $0x40] sm:$0xff] %v1447
        %1550 = vst [vmem:[#allocation3 + $0x48] sm:$0xff] %v1450
        %1551 = vst [vmem:[#allocation3 + $0x50] sm:$0xff] %v1455
        %1552 = vst [vmem:[#allocation3 + $0x58] sm:$0xff] %v1458
        %1553 = vst [vmem:[#allocation3 + $0x60] sm:$0xff] %v1463
        %1554 = vst [vmem:[#allocation3 + $0x68] sm:$0xff] %v1466
        %1555 = vst [vmem:[#allocation3 + $0x70] sm:$0xff] %v1471
        %1556 = vst [vmem:[#allocation3 + $0x78] sm:$0xff] %v1474
        %1557 = vst [vmem:[#allocation3 + $0x80] sm:$0xff] %v1479
        %1558 = vst [vmem:[#allocation3 + $0x88] sm:$0xff] %v1482
        %1559 = vst [vmem:[#allocation3 + $0x90] sm:$0xff] %v1487
        %1560 = vst [vmem:[#allocation3 + $0x98] sm:$0xff] %v1490
        %1561 = vst [vmem:[#allocation3 + $0xa0] sm:$0xff] %v1495
        %1562 = vst [vmem:[#allocation3 + $0xa8] sm:$0xff] %v1498
        %1563 = vst [vmem:[#allocation3 + $0xb0] sm:$0xff] %v1503
        %1564 = vst [vmem:[#allocation3 + $0xb8] sm:$0xff] %v1506
        %1565 = vst [vmem:[#allocation3 + $0xc0] sm:$0xff] %v1511
        %1566 = vst [vmem:[#allocation3 + $0xc8] sm:$0xff] %v1514
        %1567 = vst [vmem:[#allocation3 + $0xd0] sm:$0xff] %v1519
        %1568 = vst [vmem:[#allocation3 + $0xd8] sm:$0xff] %v1522
        %1569 = vst [vmem:[#allocation3 + $0xe0] sm:$0xff] %v1527
        %1570 = vst [vmem:[#allocation3 + $0xe8] sm:$0xff] %v1530
        %1571 = vst [vmem:[#allocation3 + $0xf0] sm:$0xff] %v1535
        %1572 = vst [vmem:[#allocation3 + $0xf8] sm:$0xff] %v1538
        %v1573 = vld [vmem:[%s953] sm:$0xff]
        %v1574 = vld [vmem:[%s953 + $0x8] sm:$0xff]
        %v1575 = vld [vmem:[%s953 + $0x10] sm:$0xff]
        %v1576 = vld [vmem:[%s953 + $0x18] sm:$0xff]
        %v1577 = vld [vmem:[%s953 + $0x20] sm:$0xff]
        %v1578 = vld [vmem:[%s953 + $0x28] sm:$0xff]
        %v1579 = vld [vmem:[%s953 + $0x30] sm:$0xff]
        %v1580 = vld [vmem:[%s953 + $0x38] sm:$0xff]
        %v1581 = vld [vmem:[%s953 + $0x40] sm:$0xff]
        %v1582 = vld [vmem:[%s953 + $0x48] sm:$0xff]
        %v1583 = vld [vmem:[%s953 + $0x50] sm:$0xff]
        %v1584 = vld [vmem:[%s953 + $0x58] sm:$0xff]
        %v1585 = vld [vmem:[%s953 + $0x60] sm:$0xff]
        %v1586 = vld [vmem:[%s953 + $0x68] sm:$0xff]
        %v1587 = vld [vmem:[%s953 + $0x70] sm:$0xff]
        %v1588 = vld [vmem:[%s953 + $0x78] sm:$0xff]
        %s1589 = scalar_lea.vmem %s219, 16
        %v1590 = vld [vmem:[%s1589] sm:$0xf]
        %v1591 = vld [vmem:[%s1589 + $0x4] sm:$0xf]
        %v1592 = vld [vmem:[%s1589 + $0x8] sm:$0xf]
        %v1593 = vld [vmem:[%s1589 + $0xc] sm:$0xf]
        %v1598 = vunpack.c.l.b16 %v1590
        %v1599 = vunpack.c.l.b16 %v1591
        %v1600 = vunpack.c.l.b16 %v1592
        %v1601 = vunpack.c.l.b16 %v1593
        %v1602 = vpack.c.b16 %v1599, %v1598
        %v1603 = vpack.c.b16 %v1601, %v1600
        %v1607 = vsel %vm373, %v1573, 0
        %v1610 = vsel %vm373, %v1574, 0
        %v1613 = vsel %vm373, %v1575, 0
        %v1616 = vsel %vm373, %v1576, 0
        %v1619 = vsel %vm373, %v1577, 0
        %v1622 = vsel %vm373, %v1578, 0
        %v1625 = vsel %vm373, %v1579, 0
        %v1628 = vsel %vm373, %v1580, 0
        %v1631 = vsel %vm373, %v1581, 0
        %v1634 = vsel %vm373, %v1582, 0
        %v1637 = vsel %vm373, %v1583, 0
        %v1640 = vsel %vm373, %v1584, 0
        %v1643 = vsel %vm373, %v1585, 0
        %v1646 = vsel %vm373, %v1586, 0
        %v1649 = vsel %vm373, %v1587, 0
        %v1652 = vsel %vm373, %v1588, 0
        %1654 = vmatprep.subr.bf16.mxu0 0
        %1655 = vmatpush1.bf16.msra.mxu0 %v1602
        %1656 = vmatprep.subr.bf16.mxu0 0
        %1657 = vmatpush1.bf16.msra.mxu0 %v1603
        %1658 = vmatprep.subr.bf16.mxu0 0
        %1659 = vmatpush1.bf16.msra.mxu0 0
        %1660 = vmatprep.subr.bf16.mxu0 0
        %1661 = vmatpush1.bf16.msra.mxu0 0
        %1662 = vmatprep.subr.bf16.mxu0 0
        %1663 = vmatpush1.bf16.msra.mxu0 0
        %1664 = vmatprep.subr.bf16.mxu0 0
        %1665 = vmatpush1.bf16.msra.mxu0 0
        %1666 = vmatprep.subr.bf16.mxu0 0
        %1667 = vmatpush1.bf16.msra.mxu0 0
        %1668 = vmatprep.subr.bf16.mxu0 0
        %1669 = vmatpush1.bf16.msra.mxu0 0
        %1670 = vmatprep.subr.bf16.mxu0 0
        %1671 = vmatpush1.bf16.msra.mxu0 0
        %1672 = vmatprep.subr.bf16.mxu0 0
        %1673 = vmatpush1.bf16.msra.mxu0 0
        %1674 = vmatprep.subr.bf16.mxu0 0
        %1675 = vmatpush1.bf16.msra.mxu0 0
        %1676 = vmatprep.subr.bf16.mxu0 0
        %1677 = vmatpush1.bf16.msra.mxu0 0
        %1678 = vmatprep.subr.bf16.mxu0 0
        %1679 = vmatpush1.bf16.msra.mxu0 0
        %1680 = vmatprep.subr.bf16.mxu0 0
        %1681 = vmatpush1.bf16.msra.mxu0 0
        %1682 = vmatprep.subr.bf16.mxu0 0
        %1683 = vmatpush1.bf16.msra.mxu0 0
        %1684 = vmatprep.subr.bf16.mxu0 0
        %1685 = vmatpush1.bf16.msra.mxu0 0
        %1686 = vmatprep.mubr.bf16.mxu0 0
        %1687 = vmatmul.mubr.bf16.gmra.mrb[0].mxu0 %v1607
        %v1688 = vpop.f32.mrb[0].mxu0
        %v1689 = vadd.f32 0.0, %v1688
        %v1690 = vpop.f32.mrb[0].mxu0
        %v1691 = vpop.f32.mrb[0].mxu0
        %v1692 = vadd.f32 0.0, %v1691
        %v1693 = vpop.f32.mrb[0].mxu0
        %1694 = vmatprep.mubr.bf16.mxu0 0
        %1695 = vmatmul.mubr.bf16.gmra.mrb[0].mxu0 %v1610
        %v1696 = vpop.f32.mrb[0].mxu0
        %v1697 = vadd.f32 0.0, %v1696
        %v1698 = vpop.f32.mrb[0].mxu0
        %v1699 = vpop.f32.mrb[0].mxu0
        %v1700 = vadd.f32 0.0, %v1699
        %v1701 = vpop.f32.mrb[0].mxu0
        %1702 = vmatprep.mubr.bf16.mxu0 0
        %1703 = vmatmul.mubr.bf16.gmra.mrb[0].mxu0 %v1613
        %v1704 = vpop.f32.mrb[0].mxu0
        %v1705 = vadd.f32 0.0, %v1704
        %v1706 = vpop.f32.mrb[0].mxu0
        %v1707 = vpop.f32.mrb[0].mxu0
        %v1708 = vadd.f32 0.0, %v1707
        %v1709 = vpop.f32.mrb[0].mxu0
        %1710 = vmatprep.mubr.bf16.mxu0 0
        %1711 = vmatmul.mubr.bf16.gmra.mrb[0].mxu0 %v1616
        %v1712 = vpop.f32.mrb[0].mxu0
        %v1713 = vadd.f32 0.0, %v1712
        %v1714 = vpop.f32.mrb[0].mxu0
        %v1715 = vpop.f32.mrb[0].mxu0
        %v1716 = vadd.f32 0.0, %v1715
        %v1717 = vpop.f32.mrb[0].mxu0
        %1718 = vmatprep.mubr.bf16.mxu0 0
        %1719 = vmatmul.mubr.bf16.gmra.mrb[0].mxu0 %v1619
        %v1720 = vpop.f32.mrb[0].mxu0
        %v1721 = vadd.f32 0.0, %v1720
        %v1722 = vpop.f32.mrb[0].mxu0
        %v1723 = vpop.f32.mrb[0].mxu0
        %v1724 = vadd.f32 0.0, %v1723
        %v1725 = vpop.f32.mrb[0].mxu0
        %1726 = vmatprep.mubr.bf16.mxu0 0
        %1727 = vmatmul.mubr.bf16.gmra.mrb[0].mxu0 %v1622
        %v1728 = vpop.f32.mrb[0].mxu0
        %v1729 = vadd.f32 0.0, %v1728
        %v1730 = vpop.f32.mrb[0].mxu0
        %v1731 = vpop.f32.mrb[0].mxu0
        %v1732 = vadd.f32 0.0, %v1731
        %v1733 = vpop.f32.mrb[0].mxu0
        %1734 = vmatprep.mubr.bf16.mxu0 0
        %1735 = vmatmul.mubr.bf16.gmra.mrb[0].mxu0 %v1625
        %v1736 = vpop.f32.mrb[0].mxu0
        %v1737 = vadd.f32 0.0, %v1736
        %v1738 = vpop.f32.mrb[0].mxu0
        %v1739 = vpop.f32.mrb[0].mxu0
        %v1740 = vadd.f32 0.0, %v1739
        %v1741 = vpop.f32.mrb[0].mxu0
        %1742 = vmatprep.mubr.bf16.mxu0 0
        %1743 = vmatmul.mubr.bf16.gmra.mrb[0].mxu0 %v1628
        %v1744 = vpop.f32.mrb[0].mxu0
        %v1745 = vadd.f32 0.0, %v1744
        %v1746 = vpop.f32.mrb[0].mxu0
        %v1747 = vpop.f32.mrb[0].mxu0
        %v1748 = vadd.f32 0.0, %v1747
        %v1749 = vpop.f32.mrb[0].mxu0
        %1750 = vmatprep.mubr.bf16.mxu0 0
        %1751 = vmatmul.mubr.bf16.gmra.mrb[0].mxu0 %v1631
        %v1752 = vpop.f32.mrb[0].mxu0
        %v1753 = vadd.f32 0.0, %v1752
        %v1754 = vpop.f32.mrb[0].mxu0
        %v1755 = vpop.f32.mrb[0].mxu0
        %v1756 = vadd.f32 0.0, %v1755
        %v1757 = vpop.f32.mrb[0].mxu0
        %1758 = vmatprep.mubr.bf16.mxu0 0
        %1759 = vmatmul.mubr.bf16.gmra.mrb[0].mxu0 %v1634
        %v1760 = vpop.f32.mrb[0].mxu0
        %v1761 = vadd.f32 0.0, %v1760
        %v1762 = vpop.f32.mrb[0].mxu0
        %v1763 = vpop.f32.mrb[0].mxu0
        %v1764 = vadd.f32 0.0, %v1763
        %v1765 = vpop.f32.mrb[0].mxu0
        %1766 = vmatprep.mubr.bf16.mxu0 0
        %1767 = vmatmul.mubr.bf16.gmra.mrb[0].mxu0 %v1637
        %v1768 = vpop.f32.mrb[0].mxu0
        %v1769 = vadd.f32 0.0, %v1768
        %v1770 = vpop.f32.mrb[0].mxu0
        %v1771 = vpop.f32.mrb[0].mxu0
        %v1772 = vadd.f32 0.0, %v1771
        %v1773 = vpop.f32.mrb[0].mxu0
        %1774 = vmatprep.mubr.bf16.mxu0 0
        %1775 = vmatmul.mubr.bf16.gmra.mrb[0].mxu0 %v1640
        %v1776 = vpop.f32.mrb[0].mxu0
        %v1777 = vadd.f32 0.0, %v1776
        %v1778 = vpop.f32.mrb[0].mxu0
        %v1779 = vpop.f32.mrb[0].mxu0
        %v1780 = vadd.f32 0.0, %v1779
        %v1781 = vpop.f32.mrb[0].mxu0
        %1782 = vmatprep.mubr.bf16.mxu0 0
        %1783 = vmatmul.mubr.bf16.gmra.mrb[0].mxu0 %v1643
        %v1784 = vpop.f32.mrb[0].mxu0
        %v1785 = vadd.f32 0.0, %v1784
        %v1786 = vpop.f32.mrb[0].mxu0
        %v1787 = vpop.f32.mrb[0].mxu0
        %v1788 = vadd.f32 0.0, %v1787
        %v1789 = vpop.f32.mrb[0].mxu0
        %1790 = vmatprep.mubr.bf16.mxu0 0
        %1791 = vmatmul.mubr.bf16.gmra.mrb[0].mxu0 %v1646
        %v1792 = vpop.f32.mrb[0].mxu0
        %v1793 = vadd.f32 0.0, %v1792
        %v1794 = vpop.f32.mrb[0].mxu0
        %v1795 = vpop.f32.mrb[0].mxu0
        %v1796 = vadd.f32 0.0, %v1795
        %v1797 = vpop.f32.mrb[0].mxu0
        %1798 = vmatprep.mubr.bf16.mxu0 0
        %1799 = vmatmul.mubr.bf16.gmra.mrb[0].mxu0 %v1649
        %v1800 = vpop.f32.mrb[0].mxu0
        %v1801 = vadd.f32 0.0, %v1800
        %v1802 = vpop.f32.mrb[0].mxu0
        %v1803 = vpop.f32.mrb[0].mxu0
        %v1804 = vadd.f32 0.0, %v1803
        %v1805 = vpop.f32.mrb[0].mxu0
        %1806 = vmatprep.mubr.bf16.mxu0 0
        %1807 = vmatmul.mubr.bf16.gmra.mrb[0].mxu0 %v1652
        %v1808 = vpop.f32.mrb[0].mxu0
        %v1809 = vadd.f32 0.0, %v1808
        %v1810 = vpop.f32.mrb[0].mxu0
        %v1811 = vpop.f32.mrb[0].mxu0
        %v1812 = vadd.f32 0.0, %v1811
        %v1813 = vpop.f32.mrb[0].mxu0
        %1814 = vdwg.mxu0
        %v1815 = vld [vmem:[#allocation3] sm:$0xff]
        %v1816 = vld [vmem:[#allocation3 + $0x8] sm:$0xff]
        %v1817 = vld [vmem:[#allocation3 + $0x10] sm:$0xff]
        %v1818 = vld [vmem:[#allocation3 + $0x18] sm:$0xff]
        %v1819 = vld [vmem:[#allocation3 + $0x20] sm:$0xff]
        %v1820 = vld [vmem:[#allocation3 + $0x28] sm:$0xff]
        %v1821 = vld [vmem:[#allocation3 + $0x30] sm:$0xff]
        %v1822 = vld [vmem:[#allocation3 + $0x38] sm:$0xff]
        %v1823 = vld [vmem:[#allocation3 + $0x40] sm:$0xff]
        %v1824 = vld [vmem:[#allocation3 + $0x48] sm:$0xff]
        %v1825 = vld [vmem:[#allocation3 + $0x50] sm:$0xff]
        %v1826 = vld [vmem:[#allocation3 + $0x58] sm:$0xff]
        %v1827 = vld [vmem:[#allocation3 + $0x60] sm:$0xff]
        %v1828 = vld [vmem:[#allocation3 + $0x68] sm:$0xff]
        %v1829 = vld [vmem:[#allocation3 + $0x70] sm:$0xff]
        %v1830 = vld [vmem:[#allocation3 + $0x78] sm:$0xff]
        %v1831 = vld [vmem:[#allocation3 + $0x80] sm:$0xff]
        %v1832 = vld [vmem:[#allocation3 + $0x88] sm:$0xff]
        %v1833 = vld [vmem:[#allocation3 + $0x90] sm:$0xff]
        %v1834 = vld [vmem:[#allocation3 + $0x98] sm:$0xff]
        %v1835 = vld [vmem:[#allocation3 + $0xa0] sm:$0xff]
        %v1836 = vld [vmem:[#allocation3 + $0xa8] sm:$0xff]
        %v1837 = vld [vmem:[#allocation3 + $0xb0] sm:$0xff]
        %v1838 = vld [vmem:[#allocation3 + $0xb8] sm:$0xff]
        %v1839 = vld [vmem:[#allocation3 + $0xc0] sm:$0xff]
        %v1840 = vld [vmem:[#allocation3 + $0xc8] sm:$0xff]
        %v1841 = vld [vmem:[#allocation3 + $0xd0] sm:$0xff]
        %v1842 = vld [vmem:[#allocation3 + $0xd8] sm:$0xff]
        %v1843 = vld [vmem:[#allocation3 + $0xe0] sm:$0xff]
        %v1844 = vld [vmem:[#allocation3 + $0xe8] sm:$0xff]
        %v1845 = vld [vmem:[#allocation3 + $0xf0] sm:$0xff]
        %v1846 = vld [vmem:[#allocation3 + $0xf8] sm:$0xff]
        %v1847 = vadd.f32 %v1815, %v1689
        %v1848 = vadd.f32 %v1816, %v1692
        %v1849 = vadd.f32 %v1817, %v1697
        %v1850 = vadd.f32 %v1818, %v1700
        %v1851 = vadd.f32 %v1819, %v1705
        %v1852 = vadd.f32 %v1820, %v1708
        %v1853 = vadd.f32 %v1821, %v1713
        %v1854 = vadd.f32 %v1822, %v1716
        %v1855 = vadd.f32 %v1823, %v1721
        %v1856 = vadd.f32 %v1824, %v1724
        %v1857 = vadd.f32 %v1825, %v1729
        %v1858 = vadd.f32 %v1826, %v1732
        %v1859 = vadd.f32 %v1827, %v1737
        %v1860 = vadd.f32 %v1828, %v1740
        %v1861 = vadd.f32 %v1829, %v1745
        %v1862 = vadd.f32 %v1830, %v1748
        %v1863 = vadd.f32 %v1831, %v1753
        %v1864 = vadd.f32 %v1832, %v1756
        %v1865 = vadd.f32 %v1833, %v1761
        %v1866 = vadd.f32 %v1834, %v1764
        %v1867 = vadd.f32 %v1835, %v1769
        %v1868 = vadd.f32 %v1836, %v1772
        %v1869 = vadd.f32 %v1837, %v1777
        %v1870 = vadd.f32 %v1838, %v1780
        %v1871 = vadd.f32 %v1839, %v1785
        %v1872 = vadd.f32 %v1840, %v1788
        %v1873 = vadd.f32 %v1841, %v1793
        %v1874 = vadd.f32 %v1842, %v1796
        %v1875 = vadd.f32 %v1843, %v1801
        %v1876 = vadd.f32 %v1844, %v1804
        %v1877 = vadd.f32 %v1845, %v1809
        %v1878 = vadd.f32 %v1846, %v1812
        %1879 = vst [vmem:[#allocation3] sm:$0xff] %v1847
        %1880 = vst [vmem:[#allocation3 + $0x8] sm:$0xff] %v1848
        %1881 = vst [vmem:[#allocation3 + $0x10] sm:$0xff] %v1849
        %1882 = vst [vmem:[#allocation3 + $0x18] sm:$0xff] %v1850
        %1883 = vst [vmem:[#allocation3 + $0x20] sm:$0xff] %v1851
        %1884 = vst [vmem:[#allocation3 + $0x28] sm:$0xff] %v1852
        %1885 = vst [vmem:[#allocation3 + $0x30] sm:$0xff] %v1853
        %1886 = vst [vmem:[#allocation3 + $0x38] sm:$0xff] %v1854
        %1887 = vst [vmem:[#allocation3 + $0x40] sm:$0xff] %v1855
        %1888 = vst [vmem:[#allocation3 + $0x48] sm:$0xff] %v1856
        %1889 = vst [vmem:[#allocation3 + $0x50] sm:$0xff] %v1857
        %1890 = vst [vmem:[#allocation3 + $0x58] sm:$0xff] %v1858
        %1891 = vst [vmem:[#allocation3 + $0x60] sm:$0xff] %v1859
        %1892 = vst [vmem:[#allocation3 + $0x68] sm:$0xff] %v1860
        %1893 = vst [vmem:[#allocation3 + $0x70] sm:$0xff] %v1861
        %1894 = vst [vmem:[#allocation3 + $0x78] sm:$0xff] %v1862
        %1895 = vst [vmem:[#allocation3 + $0x80] sm:$0xff] %v1863
        %1896 = vst [vmem:[#allocation3 + $0x88] sm:$0xff] %v1864
        %1897 = vst [vmem:[#allocation3 + $0x90] sm:$0xff] %v1865
        %1898 = vst [vmem:[#allocation3 + $0x98] sm:$0xff] %v1866
        %1899 = vst [vmem:[#allocation3 + $0xa0] sm:$0xff] %v1867
        %1900 = vst [vmem:[#allocation3 + $0xa8] sm:$0xff] %v1868
        %1901 = vst [vmem:[#allocation3 + $0xb0] sm:$0xff] %v1869
        %1902 = vst [vmem:[#allocation3 + $0xb8] sm:$0xff] %v1870
        %1903 = vst [vmem:[#allocation3 + $0xc0] sm:$0xff] %v1871
        %1904 = vst [vmem:[#allocation3 + $0xc8] sm:$0xff] %v1872
        %1905 = vst [vmem:[#allocation3 + $0xd0] sm:$0xff] %v1873
        %1906 = vst [vmem:[#allocation3 + $0xd8] sm:$0xff] %v1874
        %1907 = vst [vmem:[#allocation3 + $0xe0] sm:$0xff] %v1875
        %1908 = vst [vmem:[#allocation3 + $0xe8] sm:$0xff] %v1876
        %1909 = vst [vmem:[#allocation3 + $0xf0] sm:$0xff] %v1877
        %1910 = vst [vmem:[#allocation3 + $0xf8] sm:$0xff] %v1878
        %v1911 = vld [vmem:[%s1281] sm:$0xff]
        %v1912 = vld [vmem:[%s1281 + $0x8] sm:$0xff]
        %v1913 = vld [vmem:[%s1281 + $0x10] sm:$0xff]
        %v1914 = vld [vmem:[%s1281 + $0x18] sm:$0xff]
        %v1915 = vld [vmem:[%s1281 + $0x20] sm:$0xff]
        %v1916 = vld [vmem:[%s1281 + $0x28] sm:$0xff]
        %v1917 = vld [vmem:[%s1281 + $0x30] sm:$0xff]
        %v1918 = vld [vmem:[%s1281 + $0x38] sm:$0xff]
        %v1919 = vld [vmem:[%s1281 + $0x40] sm:$0xff]
        %v1920 = vld [vmem:[%s1281 + $0x48] sm:$0xff]
        %v1921 = vld [vmem:[%s1281 + $0x50] sm:$0xff]
        %v1922 = vld [vmem:[%s1281 + $0x58] sm:$0xff]
        %v1923 = vld [vmem:[%s1281 + $0x60] sm:$0xff]
        %v1924 = vld [vmem:[%s1281 + $0x68] sm:$0xff]
        %v1925 = vld [vmem:[%s1281 + $0x70] sm:$0xff]
        %v1926 = vld [vmem:[%s1281 + $0x78] sm:$0xff]
        %s1927 = scalar_lea.vmem %s219, 32
        %v1928 = vld [vmem:[%s1927] sm:$0xf]
        %v1929 = vld [vmem:[%s1927 + $0x4] sm:$0xf]
        %v1930 = vld [vmem:[%s1927 + $0x8] sm:$0xf]
        %v1931 = vld [vmem:[%s1927 + $0xc] sm:$0xf]
        %v1936 = vunpack.c.l.b16 %v1928
        %v1937 = vunpack.c.l.b16 %v1929
        %v1938 = vunpack.c.l.b16 %v1930
        %v1939 = vunpack.c.l.b16 %v1931
        %v1940 = vpack.c.b16 %v1937, %v1936
        %v1941 = vpack.c.b16 %v1939, %v1938
        %v1945 = vsel %vm373, %v1911, 0
        %v1948 = vsel %vm373, %v1912, 0
        %v1951 = vsel %vm373, %v1913, 0
        %v1954 = vsel %vm373, %v1914, 0
        %v1957 = vsel %vm373, %v1915, 0
        %v1960 = vsel %vm373, %v1916, 0
        %v1963 = vsel %vm373, %v1917, 0
        %v1966 = vsel %vm373, %v1918, 0
        %v1969 = vsel %vm373, %v1919, 0
        %v1972 = vsel %vm373, %v1920, 0
        %v1975 = vsel %vm373, %v1921, 0
        %v1978 = vsel %vm373, %v1922, 0
        %v1981 = vsel %vm373, %v1923, 0
        %v1984 = vsel %vm373, %v1924, 0
        %v1987 = vsel %vm373, %v1925, 0
        %v1990 = vsel %vm373, %v1926, 0
        %1992 = vmatprep.subr.bf16.mxu0 0
        %1993 = vmatpush1.bf16.msra.mxu0 %v1940
        %1994 = vmatprep.subr.bf16.mxu0 0
        %1995 = vmatpush1.bf16.msra.mxu0 %v1941
        %1996 = vmatprep.subr.bf16.mxu0 0
        %1997 = vmatpush1.bf16.msra.mxu0 0
        %1998 = vmatprep.subr.bf16.mxu0 0
        %1999 = vmatpush1.bf16.msra.mxu0 0
        %2000 = vmatprep.subr.bf16.mxu0 0
        %2001 = vmatpush1.bf16.msra.mxu0 0
        %2002 = vmatprep.subr.bf16.mxu0 0
        %2003 = vmatpush1.bf16.msra.mxu0 0
        %2004 = vmatprep.subr.bf16.mxu0 0
        %2005 = vmatpush1.bf16.msra.mxu0 0
        %2006 = vmatprep.subr.bf16.mxu0 0
        %2007 = vmatpush1.bf16.msra.mxu0 0
        %2008 = vmatprep.subr.bf16.mxu0 0
        %2009 = vmatpush1.bf16.msra.mxu0 0
        %2010 = vmatprep.subr.bf16.mxu0 0
        %2011 = vmatpush1.bf16.msra.mxu0 0
        %2012 = vmatprep.subr.bf16.mxu0 0
        %2013 = vmatpush1.bf16.msra.mxu0 0
        %2014 = vmatprep.subr.bf16.mxu0 0
        %2015 = vmatpush1.bf16.msra.mxu0 0
        %2016 = vmatprep.subr.bf16.mxu0 0
        %2017 = vmatpush1.bf16.msra.mxu0 0
        %2018 = vmatprep.subr.bf16.mxu0 0
        %2019 = vmatpush1.bf16.msra.mxu0 0
        %2020 = vmatprep.subr.bf16.mxu0 0
        %2021 = vmatpush1.bf16.msra.mxu0 0
        %2022 = vmatprep.subr.bf16.mxu0 0
        %2023 = vmatpush1.bf16.msra.mxu0 0
        %2024 = vmatprep.mubr.bf16.mxu0 0
        %2025 = vmatmul.mubr.bf16.gmra.mrb[0].mxu0 %v1945
        %v2026 = vpop.f32.mrb[0].mxu0
        %v2027 = vadd.f32 0.0, %v2026
        %v2028 = vpop.f32.mrb[0].mxu0
        %v2029 = vpop.f32.mrb[0].mxu0
        %v2030 = vadd.f32 0.0, %v2029
        %v2031 = vpop.f32.mrb[0].mxu0
        %2032 = vmatprep.mubr.bf16.mxu0 0
        %2033 = vmatmul.mubr.bf16.gmra.mrb[0].mxu0 %v1948
        %v2034 = vpop.f32.mrb[0].mxu0
        %v2035 = vadd.f32 0.0, %v2034
        %v2036 = vpop.f32.mrb[0].mxu0
        %v2037 = vpop.f32.mrb[0].mxu0
        %v2038 = vadd.f32 0.0, %v2037
        %v2039 = vpop.f32.mrb[0].mxu0
        %2040 = vmatprep.mubr.bf16.mxu0 0
        %2041 = vmatmul.mubr.bf16.gmra.mrb[0].mxu0 %v1951
        %v2042 = vpop.f32.mrb[0].mxu0
        %v2043 = vadd.f32 0.0, %v2042
        %v2044 = vpop.f32.mrb[0].mxu0
        %v2045 = vpop.f32.mrb[0].mxu0
        %v2046 = vadd.f32 0.0, %v2045
        %v2047 = vpop.f32.mrb[0].mxu0
        %2048 = vmatprep.mubr.bf16.mxu0 0
        %2049 = vmatmul.mubr.bf16.gmra.mrb[0].mxu0 %v1954
        %v2050 = vpop.f32.mrb[0].mxu0
        %v2051 = vadd.f32 0.0, %v2050
        %v2052 = vpop.f32.mrb[0].mxu0
        %v2053 = vpop.f32.mrb[0].mxu0
        %v2054 = vadd.f32 0.0, %v2053
        %v2055 = vpop.f32.mrb[0].mxu0
        %2056 = vmatprep.mubr.bf16.mxu0 0
        %2057 = vmatmul.mubr.bf16.gmra.mrb[0].mxu0 %v1957
        %v2058 = vpop.f32.mrb[0].mxu0
        %v2059 = vadd.f32 0.0, %v2058
        %v2060 = vpop.f32.mrb[0].mxu0
        %v2061 = vpop.f32.mrb[0].mxu0
        %v2062 = vadd.f32 0.0, %v2061
        %v2063 = vpop.f32.mrb[0].mxu0
        %2064 = vmatprep.mubr.bf16.mxu0 0
        %2065 = vmatmul.mubr.bf16.gmra.mrb[0].mxu0 %v1960
        %v2066 = vpop.f32.mrb[0].mxu0
        %v2067 = vadd.f32 0.0, %v2066
        %v2068 = vpop.f32.mrb[0].mxu0
        %v2069 = vpop.f32.mrb[0].mxu0
        %v2070 = vadd.f32 0.0, %v2069
        %v2071 = vpop.f32.mrb[0].mxu0
        %2072 = vmatprep.mubr.bf16.mxu0 0
        %2073 = vmatmul.mubr.bf16.gmra.mrb[0].mxu0 %v1963
        %v2074 = vpop.f32.mrb[0].mxu0
        %v2075 = vadd.f32 0.0, %v2074
        %v2076 = vpop.f32.mrb[0].mxu0
        %v2077 = vpop.f32.mrb[0].mxu0
        %v2078 = vadd.f32 0.0, %v2077
        %v2079 = vpop.f32.mrb[0].mxu0
        %2080 = vmatprep.mubr.bf16.mxu0 0
        %2081 = vmatmul.mubr.bf16.gmra.mrb[0].mxu0 %v1966
        %v2082 = vpop.f32.mrb[0].mxu0
        %v2083 = vadd.f32 0.0, %v2082
        %v2084 = vpop.f32.mrb[0].mxu0
        %v2085 = vpop.f32.mrb[0].mxu0
        %v2086 = vadd.f32 0.0, %v2085
        %v2087 = vpop.f32.mrb[0].mxu0
        %2088 = vmatprep.mubr.bf16.mxu0 0
        %2089 = vmatmul.mubr.bf16.gmra.mrb[0].mxu0 %v1969
        %v2090 = vpop.f32.mrb[0].mxu0
        %v2091 = vadd.f32 0.0, %v2090
        %v2092 = vpop.f32.mrb[0].mxu0
        %v2093 = vpop.f32.mrb[0].mxu0
        %v2094 = vadd.f32 0.0, %v2093
        %v2095 = vpop.f32.mrb[0].mxu0
        %2096 = vmatprep.mubr.bf16.mxu0 0
        %2097 = vmatmul.mubr.bf16.gmra.mrb[0].mxu0 %v1972
        %v2098 = vpop.f32.mrb[0].mxu0
        %v2099 = vadd.f32 0.0, %v2098
        %v2100 = vpop.f32.mrb[0].mxu0
        %v2101 = vpop.f32.mrb[0].mxu0
        %v2102 = vadd.f32 0.0, %v2101
        %v2103 = vpop.f32.mrb[0].mxu0
        %2104 = vmatprep.mubr.bf16.mxu0 0
        %2105 = vmatmul.mubr.bf16.gmra.mrb[0].mxu0 %v1975
        %v2106 = vpop.f32.mrb[0].mxu0
        %v2107 = vadd.f32 0.0, %v2106
        %v2108 = vpop.f32.mrb[0].mxu0
        %v2109 = vpop.f32.mrb[0].mxu0
        %v2110 = vadd.f32 0.0, %v2109
        %v2111 = vpop.f32.mrb[0].mxu0
        %2112 = vmatprep.mubr.bf16.mxu0 0
        %2113 = vmatmul.mubr.bf16.gmra.mrb[0].mxu0 %v1978
        %v2114 = vpop.f32.mrb[0].mxu0
        %v2115 = vadd.f32 0.0, %v2114
        %v2116 = vpop.f32.mrb[0].mxu0
        %v2117 = vpop.f32.mrb[0].mxu0
        %v2118 = vadd.f32 0.0, %v2117
        %v2119 = vpop.f32.mrb[0].mxu0
        %2120 = vmatprep.mubr.bf16.mxu0 0
        %2121 = vmatmul.mubr.bf16.gmra.mrb[0].mxu0 %v1981
        %v2122 = vpop.f32.mrb[0].mxu0
        %v2123 = vadd.f32 0.0, %v2122
        %v2124 = vpop.f32.mrb[0].mxu0
        %v2125 = vpop.f32.mrb[0].mxu0
        %v2126 = vadd.f32 0.0, %v2125
        %v2127 = vpop.f32.mrb[0].mxu0
        %2128 = vmatprep.mubr.bf16.mxu0 0
        %2129 = vmatmul.mubr.bf16.gmra.mrb[0].mxu0 %v1984
        %v2130 = vpop.f32.mrb[0].mxu0
        %v2131 = vadd.f32 0.0, %v2130
        %v2132 = vpop.f32.mrb[0].mxu0
        %v2133 = vpop.f32.mrb[0].mxu0
        %v2134 = vadd.f32 0.0, %v2133
        %v2135 = vpop.f32.mrb[0].mxu0
        %2136 = vmatprep.mubr.bf16.mxu0 0
        %2137 = vmatmul.mubr.bf16.gmra.mrb[0].mxu0 %v1987
        %v2138 = vpop.f32.mrb[0].mxu0
        %v2139 = vadd.f32 0.0, %v2138
        %v2140 = vpop.f32.mrb[0].mxu0
        %v2141 = vpop.f32.mrb[0].mxu0
        %v2142 = vadd.f32 0.0, %v2141
        %v2143 = vpop.f32.mrb[0].mxu0
        %2144 = vmatprep.mubr.bf16.mxu0 0
        %2145 = vmatmul.mubr.bf16.gmra.mrb[0].mxu0 %v1990
        %v2146 = vpop.f32.mrb[0].mxu0
        %v2147 = vadd.f32 0.0, %v2146
        %v2148 = vpop.f32.mrb[0].mxu0
        %v2149 = vpop.f32.mrb[0].mxu0
        %v2150 = vadd.f32 0.0, %v2149
        %v2151 = vpop.f32.mrb[0].mxu0
        %2152 = vdwg.mxu0
        %v2153 = vld [vmem:[#allocation3] sm:$0xff]
        %v2154 = vld [vmem:[#allocation3 + $0x8] sm:$0xff]
        %v2155 = vld [vmem:[#allocation3 + $0x10] sm:$0xff]
        %v2156 = vld [vmem:[#allocation3 + $0x18] sm:$0xff]
        %v2157 = vld [vmem:[#allocation3 + $0x20] sm:$0xff]
        %v2158 = vld [vmem:[#allocation3 + $0x28] sm:$0xff]
        %v2159 = vld [vmem:[#allocation3 + $0x30] sm:$0xff]
        %v2160 = vld [vmem:[#allocation3 + $0x38] sm:$0xff]
        %v2161 = vld [vmem:[#allocation3 + $0x40] sm:$0xff]
        %v2162 = vld [vmem:[#allocation3 + $0x48] sm:$0xff]
        %v2163 = vld [vmem:[#allocation3 + $0x50] sm:$0xff]
        %v2164 = vld [vmem:[#allocation3 + $0x58] sm:$0xff]
        %v2165 = vld [vmem:[#allocation3 + $0x60] sm:$0xff]
        %v2166 = vld [vmem:[#allocation3 + $0x68] sm:$0xff]
        %v2167 = vld [vmem:[#allocation3 + $0x70] sm:$0xff]
        %v2168 = vld [vmem:[#allocation3 + $0x78] sm:$0xff]
        %v2169 = vld [vmem:[#allocation3 + $0x80] sm:$0xff]
        %v2170 = vld [vmem:[#allocation3 + $0x88] sm:$0xff]
        %v2171 = vld [vmem:[#allocation3 + $0x90] sm:$0xff]
        %v2172 = vld [vmem:[#allocation3 + $0x98] sm:$0xff]
        %v2173 = vld [vmem:[#allocation3 + $0xa0] sm:$0xff]
        %v2174 = vld [vmem:[#allocation3 + $0xa8] sm:$0xff]
        %v2175 = vld [vmem:[#allocation3 + $0xb0] sm:$0xff]
        %v2176 = vld [vmem:[#allocation3 + $0xb8] sm:$0xff]
        %v2177 = vld [vmem:[#allocation3 + $0xc0] sm:$0xff]
        %v2178 = vld [vmem:[#allocation3 + $0xc8] sm:$0xff]
        %v2179 = vld [vmem:[#allocation3 + $0xd0] sm:$0xff]
        %v2180 = vld [vmem:[#allocation3 + $0xd8] sm:$0xff]
        %v2181 = vld [vmem:[#allocation3 + $0xe0] sm:$0xff]
        %v2182 = vld [vmem:[#allocation3 + $0xe8] sm:$0xff]
        %v2183 = vld [vmem:[#allocation3 + $0xf0] sm:$0xff]
        %v2184 = vld [vmem:[#allocation3 + $0xf8] sm:$0xff]
        %v2185 = vadd.f32 %v2153, %v2027
        %v2186 = vadd.f32 %v2154, %v2030
        %v2187 = vadd.f32 %v2155, %v2035
        %v2188 = vadd.f32 %v2156, %v2038
        %v2189 = vadd.f32 %v2157, %v2043
        %v2190 = vadd.f32 %v2158, %v2046
        %v2191 = vadd.f32 %v2159, %v2051
        %v2192 = vadd.f32 %v2160, %v2054
        %v2193 = vadd.f32 %v2161, %v2059
        %v2194 = vadd.f32 %v2162, %v2062
        %v2195 = vadd.f32 %v2163, %v2067
        %v2196 = vadd.f32 %v2164, %v2070
        %v2197 = vadd.f32 %v2165, %v2075
        %v2198 = vadd.f32 %v2166, %v2078
        %v2199 = vadd.f32 %v2167, %v2083
        %v2200 = vadd.f32 %v2168, %v2086
        %v2201 = vadd.f32 %v2169, %v2091
        %v2202 = vadd.f32 %v2170, %v2094
        %v2203 = vadd.f32 %v2171, %v2099
        %v2204 = vadd.f32 %v2172, %v2102
        %v2205 = vadd.f32 %v2173, %v2107
        %v2206 = vadd.f32 %v2174, %v2110
        %v2207 = vadd.f32 %v2175, %v2115
        %v2208 = vadd.f32 %v2176, %v2118
        %v2209 = vadd.f32 %v2177, %v2123
        %v2210 = vadd.f32 %v2178, %v2126
        %v2211 = vadd.f32 %v2179, %v2131
        %v2212 = vadd.f32 %v2180, %v2134
        %v2213 = vadd.f32 %v2181, %v2139
        %v2214 = vadd.f32 %v2182, %v2142
        %v2215 = vadd.f32 %v2183, %v2147
        %v2216 = vadd.f32 %v2184, %v2150
        %2217 = vst [vmem:[#allocation3] sm:$0xff] %v2185
        %2218 = vst [vmem:[#allocation3 + $0x8] sm:$0xff] %v2186
        %2219 = vst [vmem:[#allocation3 + $0x10] sm:$0xff] %v2187
        %2220 = vst [vmem:[#allocation3 + $0x18] sm:$0xff] %v2188
        %2221 = vst [vmem:[#allocation3 + $0x20] sm:$0xff] %v2189
        %2222 = vst [vmem:[#allocation3 + $0x28] sm:$0xff] %v2190
        %2223 = vst [vmem:[#allocation3 + $0x30] sm:$0xff] %v2191
        %2224 = vst [vmem:[#allocation3 + $0x38] sm:$0xff] %v2192
        %2225 = vst [vmem:[#allocation3 + $0x40] sm:$0xff] %v2193
        %2226 = vst [vmem:[#allocation3 + $0x48] sm:$0xff] %v2194
        %2227 = vst [vmem:[#allocation3 + $0x50] sm:$0xff] %v2195
        %2228 = vst [vmem:[#allocation3 + $0x58] sm:$0xff] %v2196
        %2229 = vst [vmem:[#allocation3 + $0x60] sm:$0xff] %v2197
        %2230 = vst [vmem:[#allocation3 + $0x68] sm:$0xff] %v2198
        %2231 = vst [vmem:[#allocation3 + $0x70] sm:$0xff] %v2199
        %2232 = vst [vmem:[#allocation3 + $0x78] sm:$0xff] %v2200
        %2233 = vst [vmem:[#allocation3 + $0x80] sm:$0xff] %v2201
        %2234 = vst [vmem:[#allocation3 + $0x88] sm:$0xff] %v2202
        %2235 = vst [vmem:[#allocation3 + $0x90] sm:$0xff] %v2203
        %2236 = vst [vmem:[#allocation3 + $0x98] sm:$0xff] %v2204
        %2237 = vst [vmem:[#allocation3 + $0xa0] sm:$0xff] %v2205
        %2238 = vst [vmem:[#allocation3 + $0xa8] sm:$0xff] %v2206
        %2239 = vst [vmem:[#allocation3 + $0xb0] sm:$0xff] %v2207
        %2240 = vst [vmem:[#allocation3 + $0xb8] sm:$0xff] %v2208
        %2241 = vst [vmem:[#allocation3 + $0xc0] sm:$0xff] %v2209
        %2242 = vst [vmem:[#allocation3 + $0xc8] sm:$0xff] %v2210
        %2243 = vst [vmem:[#allocation3 + $0xd0] sm:$0xff] %v2211
        %2244 = vst [vmem:[#allocation3 + $0xd8] sm:$0xff] %v2212
        %2245 = vst [vmem:[#allocation3 + $0xe0] sm:$0xff] %v2213
        %2246 = vst [vmem:[#allocation3 + $0xe8] sm:$0xff] %v2214
        %2247 = vst [vmem:[#allocation3 + $0xf0] sm:$0xff] %v2215
        %2248 = vst [vmem:[#allocation3 + $0xf8] sm:$0xff] %v2216
        %v2249 = vld [vmem:[#allocation2 + $0x8] sm:$0xff]
        %v2250 = vld [vmem:[#allocation2 + $0x10] sm:$0xff]
        %v2251 = vld [vmem:[#allocation2 + $0x18] sm:$0xff]
        %v2252 = vld [vmem:[#allocation2 + $0x20] sm:$0xff]
        %v2253 = vld [vmem:[#allocation2 + $0x28] sm:$0xff]
        %v2254 = vld [vmem:[#allocation2 + $0x30] sm:$0xff]
        %v2255 = vld [vmem:[#allocation2 + $0x38] sm:$0xff]
        %v2256 = vld [vmem:[#allocation2 + $0x40] sm:$0xff]
        %v2257 = vld [vmem:[#allocation2 + $0x48] sm:$0xff]
        %v2258 = vld [vmem:[#allocation2 + $0x50] sm:$0xff]
        %v2259 = vld [vmem:[#allocation2 + $0x58] sm:$0xff]
        %v2260 = vld [vmem:[#allocation2 + $0x60] sm:$0xff]
        %v2261 = vld [vmem:[#allocation2 + $0x68] sm:$0xff]
        %v2262 = vld [vmem:[#allocation2 + $0x70] sm:$0xff]
        %v2263 = vld [vmem:[#allocation2 + $0x78] sm:$0xff]
        %v2264 = vld [vmem:[#allocation2 + $0x80] sm:$0xff]
        %s2265 = scalar_lea.vmem %s219, 48
        %v2266 = vld [vmem:[%s2265] sm:$0xf]
        %v2267 = vld [vmem:[%s2265 + $0x4] sm:$0xf]
        %v2268 = vld [vmem:[%s2265 + $0x8] sm:$0xf]
        %v2269 = vld [vmem:[%s2265 + $0xc] sm:$0xf]
        %v2274 = vunpack.c.l.b16 %v2266
        %v2275 = vunpack.c.l.b16 %v2267
        %v2276 = vunpack.c.l.b16 %v2268
        %v2277 = vunpack.c.l.b16 %v2269
        %v2278 = vpack.c.b16 %v2275, %v2274
        %v2279 = vpack.c.b16 %v2277, %v2276
        %v2283 = vsel %vm373, %v2249, 0
        %v2286 = vsel %vm373, %v2250, 0
        %v2289 = vsel %vm373, %v2251, 0
        %v2292 = vsel %vm373, %v2252, 0
        %v2295 = vsel %vm373, %v2253, 0
        %v2298 = vsel %vm373, %v2254, 0
        %v2301 = vsel %vm373, %v2255, 0
        %v2304 = vsel %vm373, %v2256, 0
        %v2307 = vsel %vm373, %v2257, 0
        %v2310 = vsel %vm373, %v2258, 0
        %v2313 = vsel %vm373, %v2259, 0
        %v2316 = vsel %vm373, %v2260, 0
        %v2319 = vsel %vm373, %v2261, 0
        %v2322 = vsel %vm373, %v2262, 0
        %v2325 = vsel %vm373, %v2263, 0
        %v2328 = vsel %vm373, %v2264, 0
        %2330 = vmatprep.subr.bf16.mxu0 0
        %2331 = vmatpush1.bf16.msra.mxu0 %v2278
        %2332 = vmatprep.subr.bf16.mxu0 0
        %2333 = vmatpush1.bf16.msra.mxu0 %v2279
        %2334 = vmatprep.subr.bf16.mxu0 0
        %2335 = vmatpush1.bf16.msra.mxu0 0
        %2336 = vmatprep.subr.bf16.mxu0 0
        %2337 = vmatpush1.bf16.msra.mxu0 0
        %2338 = vmatprep.subr.bf16.mxu0 0
        %2339 = vmatpush1.bf16.msra.mxu0 0
        %2340 = vmatprep.subr.bf16.mxu0 0
        %2341 = vmatpush1.bf16.msra.mxu0 0
        %2342 = vmatprep.subr.bf16.mxu0 0
        %2343 = vmatpush1.bf16.msra.mxu0 0
        %2344 = vmatprep.subr.bf16.mxu0 0
        %2345 = vmatpush1.bf16.msra.mxu0 0
        %2346 = vmatprep.subr.bf16.mxu0 0
        %2347 = vmatpush1.bf16.msra.mxu0 0
        %2348 = vmatprep.subr.bf16.mxu0 0
        %2349 = vmatpush1.bf16.msra.mxu0 0
        %2350 = vmatprep.subr.bf16.mxu0 0
        %2351 = vmatpush1.bf16.msra.mxu0 0
        %2352 = vmatprep.subr.bf16.mxu0 0
        %2353 = vmatpush1.bf16.msra.mxu0 0
        %2354 = vmatprep.subr.bf16.mxu0 0
        %2355 = vmatpush1.bf16.msra.mxu0 0
        %2356 = vmatprep.subr.bf16.mxu0 0
        %2357 = vmatpush1.bf16.msra.mxu0 0
        %2358 = vmatprep.subr.bf16.mxu0 0
        %2359 = vmatpush1.bf16.msra.mxu0 0
        %2360 = vmatprep.subr.bf16.mxu0 0
        %2361 = vmatpush1.bf16.msra.mxu0 0
        %2362 = vmatprep.mubr.bf16.mxu0 0
        %2363 = vmatmul.mubr.bf16.gmra.mrb[0].mxu0 %v2283
        %v2364 = vpop.f32.mrb[0].mxu0
        %v2365 = vadd.f32 0.0, %v2364
        %v2366 = vpop.f32.mrb[0].mxu0
        %v2367 = vpop.f32.mrb[0].mxu0
        %v2368 = vadd.f32 0.0, %v2367
        %v2369 = vpop.f32.mrb[0].mxu0
        %2370 = vmatprep.mubr.bf16.mxu0 0
        %2371 = vmatmul.mubr.bf16.gmra.mrb[0].mxu0 %v2286
        %v2372 = vpop.f32.mrb[0].mxu0
        %v2373 = vadd.f32 0.0, %v2372
        %v2374 = vpop.f32.mrb[0].mxu0
        %v2375 = vpop.f32.mrb[0].mxu0
        %v2376 = vadd.f32 0.0, %v2375
        %v2377 = vpop.f32.mrb[0].mxu0
        %2378 = vmatprep.mubr.bf16.mxu0 0
        %2379 = vmatmul.mubr.bf16.gmra.mrb[0].mxu0 %v2289
        %v2380 = vpop.f32.mrb[0].mxu0
        %v2381 = vadd.f32 0.0, %v2380
        %v2382 = vpop.f32.mrb[0].mxu0
        %v2383 = vpop.f32.mrb[0].mxu0
        %v2384 = vadd.f32 0.0, %v2383
        %v2385 = vpop.f32.mrb[0].mxu0
        %2386 = vmatprep.mubr.bf16.mxu0 0
        %2387 = vmatmul.mubr.bf16.gmra.mrb[0].mxu0 %v2292
        %v2388 = vpop.f32.mrb[0].mxu0
        %v2389 = vadd.f32 0.0, %v2388
        %v2390 = vpop.f32.mrb[0].mxu0
        %v2391 = vpop.f32.mrb[0].mxu0
        %v2392 = vadd.f32 0.0, %v2391
        %v2393 = vpop.f32.mrb[0].mxu0
        %2394 = vmatprep.mubr.bf16.mxu0 0
        %2395 = vmatmul.mubr.bf16.gmra.mrb[0].mxu0 %v2295
        %v2396 = vpop.f32.mrb[0].mxu0
        %v2397 = vadd.f32 0.0, %v2396
        %v2398 = vpop.f32.mrb[0].mxu0
        %v2399 = vpop.f32.mrb[0].mxu0
        %v2400 = vadd.f32 0.0, %v2399
        %v2401 = vpop.f32.mrb[0].mxu0
        %2402 = vmatprep.mubr.bf16.mxu0 0
        %2403 = vmatmul.mubr.bf16.gmra.mrb[0].mxu0 %v2298
        %v2404 = vpop.f32.mrb[0].mxu0
        %v2405 = vadd.f32 0.0, %v2404
        %v2406 = vpop.f32.mrb[0].mxu0
        %v2407 = vpop.f32.mrb[0].mxu0
        %v2408 = vadd.f32 0.0, %v2407
        %v2409 = vpop.f32.mrb[0].mxu0
        %2410 = vmatprep.mubr.bf16.mxu0 0
        %2411 = vmatmul.mubr.bf16.gmra.mrb[0].mxu0 %v2301
        %v2412 = vpop.f32.mrb[0].mxu0
        %v2413 = vadd.f32 0.0, %v2412
        %v2414 = vpop.f32.mrb[0].mxu0
        %v2415 = vpop.f32.mrb[0].mxu0
        %v2416 = vadd.f32 0.0, %v2415
        %v2417 = vpop.f32.mrb[0].mxu0
        %2418 = vmatprep.mubr.bf16.mxu0 0
        %2419 = vmatmul.mubr.bf16.gmra.mrb[0].mxu0 %v2304
        %v2420 = vpop.f32.mrb[0].mxu0
        %v2421 = vadd.f32 0.0, %v2420
        %v2422 = vpop.f32.mrb[0].mxu0
        %v2423 = vpop.f32.mrb[0].mxu0
        %v2424 = vadd.f32 0.0, %v2423
        %v2425 = vpop.f32.mrb[0].mxu0
        %2426 = vmatprep.mubr.bf16.mxu0 0
        %2427 = vmatmul.mubr.bf16.gmra.mrb[0].mxu0 %v2307
        %v2428 = vpop.f32.mrb[0].mxu0
        %v2429 = vadd.f32 0.0, %v2428
        %v2430 = vpop.f32.mrb[0].mxu0
        %v2431 = vpop.f32.mrb[0].mxu0
        %v2432 = vadd.f32 0.0, %v2431
        %v2433 = vpop.f32.mrb[0].mxu0
        %2434 = vmatprep.mubr.bf16.mxu0 0
        %2435 = vmatmul.mubr.bf16.gmra.mrb[0].mxu0 %v2310
        %v2436 = vpop.f32.mrb[0].mxu0
        %v2437 = vadd.f32 0.0, %v2436
        %v2438 = vpop.f32.mrb[0].mxu0
        %v2439 = vpop.f32.mrb[0].mxu0
        %v2440 = vadd.f32 0.0, %v2439
        %v2441 = vpop.f32.mrb[0].mxu0
        %2442 = vmatprep.mubr.bf16.mxu0 0
        %2443 = vmatmul.mubr.bf16.gmra.mrb[0].mxu0 %v2313
        %v2444 = vpop.f32.mrb[0].mxu0
        %v2445 = vadd.f32 0.0, %v2444
        %v2446 = vpop.f32.mrb[0].mxu0
        %v2447 = vpop.f32.mrb[0].mxu0
        %v2448 = vadd.f32 0.0, %v2447
        %v2449 = vpop.f32.mrb[0].mxu0
        %2450 = vmatprep.mubr.bf16.mxu0 0
        %2451 = vmatmul.mubr.bf16.gmra.mrb[0].mxu0 %v2316
        %v2452 = vpop.f32.mrb[0].mxu0
        %v2453 = vadd.f32 0.0, %v2452
        %v2454 = vpop.f32.mrb[0].mxu0
        %v2455 = vpop.f32.mrb[0].mxu0
        %v2456 = vadd.f32 0.0, %v2455
        %v2457 = vpop.f32.mrb[0].mxu0
        %2458 = vmatprep.mubr.bf16.mxu0 0
        %2459 = vmatmul.mubr.bf16.gmra.mrb[0].mxu0 %v2319
        %v2460 = vpop.f32.mrb[0].mxu0
        %v2461 = vadd.f32 0.0, %v2460
        %v2462 = vpop.f32.mrb[0].mxu0
        %v2463 = vpop.f32.mrb[0].mxu0
        %v2464 = vadd.f32 0.0, %v2463
        %v2465 = vpop.f32.mrb[0].mxu0
        %2466 = vmatprep.mubr.bf16.mxu0 0
        %2467 = vmatmul.mubr.bf16.gmra.mrb[0].mxu0 %v2322
        %v2468 = vpop.f32.mrb[0].mxu0
        %v2469 = vadd.f32 0.0, %v2468
        %v2470 = vpop.f32.mrb[0].mxu0
        %v2471 = vpop.f32.mrb[0].mxu0
        %v2472 = vadd.f32 0.0, %v2471
        %v2473 = vpop.f32.mrb[0].mxu0
        %2474 = vmatprep.mubr.bf16.mxu0 0
        %2475 = vmatmul.mubr.bf16.gmra.mrb[0].mxu0 %v2325
        %v2476 = vpop.f32.mrb[0].mxu0
        %v2477 = vadd.f32 0.0, %v2476
        %v2478 = vpop.f32.mrb[0].mxu0
        %v2479 = vpop.f32.mrb[0].mxu0
        %v2480 = vadd.f32 0.0, %v2479
        %v2481 = vpop.f32.mrb[0].mxu0
        %2482 = vmatprep.mubr.bf16.mxu0 0
        %2483 = vmatmul.mubr.bf16.gmra.mrb[0].mxu0 %v2328
        %v2484 = vpop.f32.mrb[0].mxu0
        %v2485 = vadd.f32 0.0, %v2484
        %v2486 = vpop.f32.mrb[0].mxu0
        %v2487 = vpop.f32.mrb[0].mxu0
        %v2488 = vadd.f32 0.0, %v2487
        %v2489 = vpop.f32.mrb[0].mxu0
        %2490 = vdwg.mxu0
        %v2491 = vld [vmem:[#allocation3] sm:$0xff]
        %v2492 = vld [vmem:[#allocation3 + $0x8] sm:$0xff]
        %v2493 = vld [vmem:[#allocation3 + $0x10] sm:$0xff]
        %v2494 = vld [vmem:[#allocation3 + $0x18] sm:$0xff]
        %v2495 = vld [vmem:[#allocation3 + $0x20] sm:$0xff]
        %v2496 = vld [vmem:[#allocation3 + $0x28] sm:$0xff]
        %v2497 = vld [vmem:[#allocation3 + $0x30] sm:$0xff]
        %v2498 = vld [vmem:[#allocation3 + $0x38] sm:$0xff]
        %v2499 = vld [vmem:[#allocation3 + $0x40] sm:$0xff]
        %v2500 = vld [vmem:[#allocation3 + $0x48] sm:$0xff]
        %v2501 = vld [vmem:[#allocation3 + $0x50] sm:$0xff]
        %v2502 = vld [vmem:[#allocation3 + $0x58] sm:$0xff]
        %v2503 = vld [vmem:[#allocation3 + $0x60] sm:$0xff]
        %v2504 = vld [vmem:[#allocation3 + $0x68] sm:$0xff]
        %v2505 = vld [vmem:[#allocation3 + $0x70] sm:$0xff]
        %v2506 = vld [vmem:[#allocation3 + $0x78] sm:$0xff]
        %v2507 = vld [vmem:[#allocation3 + $0x80] sm:$0xff]
        %v2508 = vld [vmem:[#allocation3 + $0x88] sm:$0xff]
        %v2509 = vld [vmem:[#allocation3 + $0x90] sm:$0xff]
        %v2510 = vld [vmem:[#allocation3 + $0x98] sm:$0xff]
        %v2511 = vld [vmem:[#allocation3 + $0xa0] sm:$0xff]
        %v2512 = vld [vmem:[#allocation3 + $0xa8] sm:$0xff]
        %v2513 = vld [vmem:[#allocation3 + $0xb0] sm:$0xff]
        %v2514 = vld [vmem:[#allocation3 + $0xb8] sm:$0xff]
        %v2515 = vld [vmem:[#allocation3 + $0xc0] sm:$0xff]
        %v2516 = vld [vmem:[#allocation3 + $0xc8] sm:$0xff]
        %v2517 = vld [vmem:[#allocation3 + $0xd0] sm:$0xff]
        %v2518 = vld [vmem:[#allocation3 + $0xd8] sm:$0xff]
        %v2519 = vld [vmem:[#allocation3 + $0xe0] sm:$0xff]
        %v2520 = vld [vmem:[#allocation3 + $0xe8] sm:$0xff]
        %v2521 = vld [vmem:[#allocation3 + $0xf0] sm:$0xff]
        %v2522 = vld [vmem:[#allocation3 + $0xf8] sm:$0xff]
        %v2523 = vadd.f32 %v2491, %v2365
        %v2524 = vadd.f32 %v2492, %v2368
        %v2525 = vadd.f32 %v2493, %v2373
        %v2526 = vadd.f32 %v2494, %v2376
        %v2527 = vadd.f32 %v2495, %v2381
        %v2528 = vadd.f32 %v2496, %v2384
        %v2529 = vadd.f32 %v2497, %v2389
        %v2530 = vadd.f32 %v2498, %v2392
        %v2531 = vadd.f32 %v2499, %v2397
        %v2532 = vadd.f32 %v2500, %v2400
        %v2533 = vadd.f32 %v2501, %v2405
        %v2534 = vadd.f32 %v2502, %v2408
        %v2535 = vadd.f32 %v2503, %v2413
        %v2536 = vadd.f32 %v2504, %v2416
        %v2537 = vadd.f32 %v2505, %v2421
        %v2538 = vadd.f32 %v2506, %v2424
        %v2539 = vadd.f32 %v2507, %v2429
        %v2540 = vadd.f32 %v2508, %v2432
        %v2541 = vadd.f32 %v2509, %v2437
        %v2542 = vadd.f32 %v2510, %v2440
        %v2543 = vadd.f32 %v2511, %v2445
        %v2544 = vadd.f32 %v2512, %v2448
        %v2545 = vadd.f32 %v2513, %v2453
        %v2546 = vadd.f32 %v2514, %v2456
        %v2547 = vadd.f32 %v2515, %v2461
        %v2548 = vadd.f32 %v2516, %v2464
        %v2549 = vadd.f32 %v2517, %v2469
        %v2550 = vadd.f32 %v2518, %v2472
        %v2551 = vadd.f32 %v2519, %v2477
        %v2552 = vadd.f32 %v2520, %v2480
        %v2553 = vadd.f32 %v2521, %v2485
        %v2554 = vadd.f32 %v2522, %v2488
        %2555 = vst [vmem:[#allocation3] sm:$0xff] %v2523
        %2556 = vst [vmem:[#allocation3 + $0x8] sm:$0xff] %v2524
        %2557 = vst [vmem:[#allocation3 + $0x10] sm:$0xff] %v2525
        %2558 = vst [vmem:[#allocation3 + $0x18] sm:$0xff] %v2526
        %2559 = vst [vmem:[#allocation3 + $0x20] sm:$0xff] %v2527
        %2560 = vst [vmem:[#allocation3 + $0x28] sm:$0xff] %v2528
        %2561 = vst [vmem:[#allocation3 + $0x30] sm:$0xff] %v2529
        %2562 = vst [vmem:[#allocation3 + $0x38] sm:$0xff] %v2530
        %2563 = vst [vmem:[#allocation3 + $0x40] sm:$0xff] %v2531
        %2564 = vst [vmem:[#allocation3 + $0x48] sm:$0xff] %v2532
        %2565 = vst [vmem:[#allocation3 + $0x50] sm:$0xff] %v2533
        %2566 = vst [vmem:[#allocation3 + $0x58] sm:$0xff] %v2534
        %2567 = vst [vmem:[#allocation3 + $0x60] sm:$0xff] %v2535
        %2568 = vst [vmem:[#allocation3 + $0x68] sm:$0xff] %v2536
        %2569 = vst [vmem:[#allocation3 + $0x70] sm:$0xff] %v2537
        %2570 = vst [vmem:[#allocation3 + $0x78] sm:$0xff] %v2538
        %2571 = vst [vmem:[#allocation3 + $0x80] sm:$0xff] %v2539
        %2572 = vst [vmem:[#allocation3 + $0x88] sm:$0xff] %v2540
        %2573 = vst [vmem:[#allocation3 + $0x90] sm:$0xff] %v2541
        %2574 = vst [vmem:[#allocation3 + $0x98] sm:$0xff] %v2542
        %2575 = vst [vmem:[#allocation3 + $0xa0] sm:$0xff] %v2543
        %2576 = vst [vmem:[#allocation3 + $0xa8] sm:$0xff] %v2544
        %2577 = vst [vmem:[#allocation3 + $0xb0] sm:$0xff] %v2545
        %2578 = vst [vmem:[#allocation3 + $0xb8] sm:$0xff] %v2546
        %2579 = vst [vmem:[#allocation3 + $0xc0] sm:$0xff] %v2547
        %2580 = vst [vmem:[#allocation3 + $0xc8] sm:$0xff] %v2548
        %2581 = vst [vmem:[#allocation3 + $0xd0] sm:$0xff] %v2549
        %2582 = vst [vmem:[#allocation3 + $0xd8] sm:$0xff] %v2550
        %2583 = vst [vmem:[#allocation3 + $0xe0] sm:$0xff] %v2551
        %2584 = vst [vmem:[#allocation3 + $0xe8] sm:$0xff] %v2552
        %2585 = vst [vmem:[#allocation3 + $0xf0] sm:$0xff] %v2553
        %2586 = vst [vmem:[#allocation3 + $0xf8] sm:$0xff] %v2554
        %v2587 = vld [vmem:[%s953 + $0x8] sm:$0xff]
        %v2588 = vld [vmem:[%s953 + $0x10] sm:$0xff]
        %v2589 = vld [vmem:[%s953 + $0x18] sm:$0xff]
        %v2590 = vld [vmem:[%s953 + $0x20] sm:$0xff]
        %v2591 = vld [vmem:[%s953 + $0x28] sm:$0xff]
        %v2592 = vld [vmem:[%s953 + $0x30] sm:$0xff]
        %v2593 = vld [vmem:[%s953 + $0x38] sm:$0xff]
        %v2594 = vld [vmem:[%s953 + $0x40] sm:$0xff]
        %v2595 = vld [vmem:[%s953 + $0x48] sm:$0xff]
        %v2596 = vld [vmem:[%s953 + $0x50] sm:$0xff]
        %v2597 = vld [vmem:[%s953 + $0x58] sm:$0xff]
        %v2598 = vld [vmem:[%s953 + $0x60] sm:$0xff]
        %v2599 = vld [vmem:[%s953 + $0x68] sm:$0xff]
        %v2600 = vld [vmem:[%s953 + $0x70] sm:$0xff]
        %v2601 = vld [vmem:[%s953 + $0x78] sm:$0xff]
        %v2602 = vld [vmem:[%s953 + $0x80] sm:$0xff]
        %s2603 = scalar_lea.vmem %s219, 64
        %v2604 = vld [vmem:[%s2603] sm:$0xf]
        %v2605 = vld [vmem:[%s2603 + $0x4] sm:$0xf]
        %v2606 = vld [vmem:[%s2603 + $0x8] sm:$0xf]
        %v2607 = vld [vmem:[%s2603 + $0xc] sm:$0xf]
        %v2612 = vunpack.c.l.b16 %v2604
        %v2613 = vunpack.c.l.b16 %v2605
        %v2614 = vunpack.c.l.b16 %v2606
        %v2615 = vunpack.c.l.b16 %v2607
        %v2616 = vpack.c.b16 %v2613, %v2612
        %v2617 = vpack.c.b16 %v2615, %v2614
        %v2621 = vsel %vm373, %v2587, 0
        %v2624 = vsel %vm373, %v2588, 0
        %v2627 = vsel %vm373, %v2589, 0
        %v2630 = vsel %vm373, %v2590, 0
        %v2633 = vsel %vm373, %v2591, 0
        %v2636 = vsel %vm373, %v2592, 0
        %v2639 = vsel %vm373, %v2593, 0
        %v2642 = vsel %vm373, %v2594, 0
        %v2645 = vsel %vm373, %v2595, 0
        %v2648 = vsel %vm373, %v2596, 0
        %v2651 = vsel %vm373, %v2597, 0
        %v2654 = vsel %vm373, %v2598, 0
        %v2657 = vsel %vm373, %v2599, 0
        %v2660 = vsel %vm373, %v2600, 0
        %v2663 = vsel %vm373, %v2601, 0
        %v2666 = vsel %vm373, %v2602, 0
        %2668 = vmatprep.subr.bf16.mxu0 0
        %2669 = vmatpush1.bf16.msra.mxu0 %v2616
        %2670 = vmatprep.subr.bf16.mxu0 0
        %2671 = vmatpush1.bf16.msra.mxu0 %v2617
        %2672 = vmatprep.subr.bf16.mxu0 0
        %2673 = vmatpush1.bf16.msra.mxu0 0
        %2674 = vmatprep.subr.bf16.mxu0 0
        %2675 = vmatpush1.bf16.msra.mxu0 0
        %2676 = vmatprep.subr.bf16.mxu0 0
        %2677 = vmatpush1.bf16.msra.mxu0 0
        %2678 = vmatprep.subr.bf16.mxu0 0
        %2679 = vmatpush1.bf16.msra.mxu0 0
        %2680 = vmatprep.subr.bf16.mxu0 0
        %2681 = vmatpush1.bf16.msra.mxu0 0
        %2682 = vmatprep.subr.bf16.mxu0 0
        %2683 = vmatpush1.bf16.msra.mxu0 0
        %2684 = vmatprep.subr.bf16.mxu0 0
        %2685 = vmatpush1.bf16.msra.mxu0 0
        %2686 = vmatprep.subr.bf16.mxu0 0
        %2687 = vmatpush1.bf16.msra.mxu0 0
        %2688 = vmatprep.subr.bf16.mxu0 0
        %2689 = vmatpush1.bf16.msra.mxu0 0
        %2690 = vmatprep.subr.bf16.mxu0 0
        %2691 = vmatpush1.bf16.msra.mxu0 0
        %2692 = vmatprep.subr.bf16.mxu0 0
        %2693 = vmatpush1.bf16.msra.mxu0 0
        %2694 = vmatprep.subr.bf16.mxu0 0
        %2695 = vmatpush1.bf16.msra.mxu0 0
        %2696 = vmatprep.subr.bf16.mxu0 0
        %2697 = vmatpush1.bf16.msra.mxu0 0
        %2698 = vmatprep.subr.bf16.mxu0 0
        %2699 = vmatpush1.bf16.msra.mxu0 0
        %2700 = vmatprep.mubr.bf16.mxu0 0
        %2701 = vmatmul.mubr.bf16.gmra.mrb[0].mxu0 %v2621
        %v2702 = vpop.f32.mrb[0].mxu0
        %v2703 = vadd.f32 0.0, %v2702
        %v2704 = vpop.f32.mrb[0].mxu0
        %v2705 = vpop.f32.mrb[0].mxu0
        %v2706 = vadd.f32 0.0, %v2705
        %v2707 = vpop.f32.mrb[0].mxu0
        %2708 = vmatprep.mubr.bf16.mxu0 0
        %2709 = vmatmul.mubr.bf16.gmra.mrb[0].mxu0 %v2624
        %v2710 = vpop.f32.mrb[0].mxu0
        %v2711 = vadd.f32 0.0, %v2710
        %v2712 = vpop.f32.mrb[0].mxu0
        %v2713 = vpop.f32.mrb[0].mxu0
        %v2714 = vadd.f32 0.0, %v2713
        %v2715 = vpop.f32.mrb[0].mxu0
        %2716 = vmatprep.mubr.bf16.mxu0 0
        %2717 = vmatmul.mubr.bf16.gmra.mrb[0].mxu0 %v2627
        %v2718 = vpop.f32.mrb[0].mxu0
        %v2719 = vadd.f32 0.0, %v2718
        %v2720 = vpop.f32.mrb[0].mxu0
        %v2721 = vpop.f32.mrb[0].mxu0
        %v2722 = vadd.f32 0.0, %v2721
        %v2723 = vpop.f32.mrb[0].mxu0
        %2724 = vmatprep.mubr.bf16.mxu0 0
        %2725 = vmatmul.mubr.bf16.gmra.mrb[0].mxu0 %v2630
        %v2726 = vpop.f32.mrb[0].mxu0
        %v2727 = vadd.f32 0.0, %v2726
        %v2728 = vpop.f32.mrb[0].mxu0
        %v2729 = vpop.f32.mrb[0].mxu0
        %v2730 = vadd.f32 0.0, %v2729
        %v2731 = vpop.f32.mrb[0].mxu0
        %2732 = vmatprep.mubr.bf16.mxu0 0
        %2733 = vmatmul.mubr.bf16.gmra.mrb[0].mxu0 %v2633
        %v2734 = vpop.f32.mrb[0].mxu0
        %v2735 = vadd.f32 0.0, %v2734
        %v2736 = vpop.f32.mrb[0].mxu0
        %v2737 = vpop.f32.mrb[0].mxu0
        %v2738 = vadd.f32 0.0, %v2737
        %v2739 = vpop.f32.mrb[0].mxu0
        %2740 = vmatprep.mubr.bf16.mxu0 0
        %2741 = vmatmul.mubr.bf16.gmra.mrb[0].mxu0 %v2636
        %v2742 = vpop.f32.mrb[0].mxu0
        %v2743 = vadd.f32 0.0, %v2742
        %v2744 = vpop.f32.mrb[0].mxu0
        %v2745 = vpop.f32.mrb[0].mxu0
        %v2746 = vadd.f32 0.0, %v2745
        %v2747 = vpop.f32.mrb[0].mxu0
        %2748 = vmatprep.mubr.bf16.mxu0 0
        %2749 = vmatmul.mubr.bf16.gmra.mrb[0].mxu0 %v2639
        %v2750 = vpop.f32.mrb[0].mxu0
        %v2751 = vadd.f32 0.0, %v2750
        %v2752 = vpop.f32.mrb[0].mxu0
        %v2753 = vpop.f32.mrb[0].mxu0
        %v2754 = vadd.f32 0.0, %v2753
        %v2755 = vpop.f32.mrb[0].mxu0
        %2756 = vmatprep.mubr.bf16.mxu0 0
        %2757 = vmatmul.mubr.bf16.gmra.mrb[0].mxu0 %v2642
        %v2758 = vpop.f32.mrb[0].mxu0
        %v2759 = vadd.f32 0.0, %v2758
        %v2760 = vpop.f32.mrb[0].mxu0
        %v2761 = vpop.f32.mrb[0].mxu0
        %v2762 = vadd.f32 0.0, %v2761
        %v2763 = vpop.f32.mrb[0].mxu0
        %2764 = vmatprep.mubr.bf16.mxu0 0
        %2765 = vmatmul.mubr.bf16.gmra.mrb[0].mxu0 %v2645
        %v2766 = vpop.f32.mrb[0].mxu0
        %v2767 = vadd.f32 0.0, %v2766
        %v2768 = vpop.f32.mrb[0].mxu0
        %v2769 = vpop.f32.mrb[0].mxu0
        %v2770 = vadd.f32 0.0, %v2769
        %v2771 = vpop.f32.mrb[0].mxu0
        %2772 = vmatprep.mubr.bf16.mxu0 0
        %2773 = vmatmul.mubr.bf16.gmra.mrb[0].mxu0 %v2648
        %v2774 = vpop.f32.mrb[0].mxu0
        %v2775 = vadd.f32 0.0, %v2774
        %v2776 = vpop.f32.mrb[0].mxu0
        %v2777 = vpop.f32.mrb[0].mxu0
        %v2778 = vadd.f32 0.0, %v2777
        %v2779 = vpop.f32.mrb[0].mxu0
        %2780 = vmatprep.mubr.bf16.mxu0 0
        %2781 = vmatmul.mubr.bf16.gmra.mrb[0].mxu0 %v2651
        %v2782 = vpop.f32.mrb[0].mxu0
        %v2783 = vadd.f32 0.0, %v2782
        %v2784 = vpop.f32.mrb[0].mxu0
        %v2785 = vpop.f32.mrb[0].mxu0
        %v2786 = vadd.f32 0.0, %v2785
        %v2787 = vpop.f32.mrb[0].mxu0
        %2788 = vmatprep.mubr.bf16.mxu0 0
        %2789 = vmatmul.mubr.bf16.gmra.mrb[0].mxu0 %v2654
        %v2790 = vpop.f32.mrb[0].mxu0
        %v2791 = vadd.f32 0.0, %v2790
        %v2792 = vpop.f32.mrb[0].mxu0
        %v2793 = vpop.f32.mrb[0].mxu0
        %v2794 = vadd.f32 0.0, %v2793
        %v2795 = vpop.f32.mrb[0].mxu0
        %2796 = vmatprep.mubr.bf16.mxu0 0
        %2797 = vmatmul.mubr.bf16.gmra.mrb[0].mxu0 %v2657
        %v2798 = vpop.f32.mrb[0].mxu0
        %v2799 = vadd.f32 0.0, %v2798
        %v2800 = vpop.f32.mrb[0].mxu0
        %v2801 = vpop.f32.mrb[0].mxu0
        %v2802 = vadd.f32 0.0, %v2801
        %v2803 = vpop.f32.mrb[0].mxu0
        %2804 = vmatprep.mubr.bf16.mxu0 0
        %2805 = vmatmul.mubr.bf16.gmra.mrb[0].mxu0 %v2660
        %v2806 = vpop.f32.mrb[0].mxu0
        %v2807 = vadd.f32 0.0, %v2806
        %v2808 = vpop.f32.mrb[0].mxu0
        %v2809 = vpop.f32.mrb[0].mxu0
        %v2810 = vadd.f32 0.0, %v2809
        %v2811 = vpop.f32.mrb[0].mxu0
        %2812 = vmatprep.mubr.bf16.mxu0 0
        %2813 = vmatmul.mubr.bf16.gmra.mrb[0].mxu0 %v2663
        %v2814 = vpop.f32.mrb[0].mxu0
        %v2815 = vadd.f32 0.0, %v2814
        %v2816 = vpop.f32.mrb[0].mxu0
        %v2817 = vpop.f32.mrb[0].mxu0
        %v2818 = vadd.f32 0.0, %v2817
        %v2819 = vpop.f32.mrb[0].mxu0
        %2820 = vmatprep.mubr.bf16.mxu0 0
        %2821 = vmatmul.mubr.bf16.gmra.mrb[0].mxu0 %v2666
        %v2822 = vpop.f32.mrb[0].mxu0
        %v2823 = vadd.f32 0.0, %v2822
        %v2824 = vpop.f32.mrb[0].mxu0
        %v2825 = vpop.f32.mrb[0].mxu0
        %v2826 = vadd.f32 0.0, %v2825
        %v2827 = vpop.f32.mrb[0].mxu0
        %2828 = vdwg.mxu0
        %v2829 = vld [vmem:[#allocation3] sm:$0xff]
        %v2830 = vld [vmem:[#allocation3 + $0x8] sm:$0xff]
        %v2831 = vld [vmem:[#allocation3 + $0x10] sm:$0xff]
        %v2832 = vld [vmem:[#allocation3 + $0x18] sm:$0xff]
        %v2833 = vld [vmem:[#allocation3 + $0x20] sm:$0xff]
        %v2834 = vld [vmem:[#allocation3 + $0x28] sm:$0xff]
        %v2835 = vld [vmem:[#allocation3 + $0x30] sm:$0xff]
        %v2836 = vld [vmem:[#allocation3 + $0x38] sm:$0xff]
        %v2837 = vld [vmem:[#allocation3 + $0x40] sm:$0xff]
        %v2838 = vld [vmem:[#allocation3 + $0x48] sm:$0xff]
        %v2839 = vld [vmem:[#allocation3 + $0x50] sm:$0xff]
        %v2840 = vld [vmem:[#allocation3 + $0x58] sm:$0xff]
        %v2841 = vld [vmem:[#allocation3 + $0x60] sm:$0xff]
        %v2842 = vld [vmem:[#allocation3 + $0x68] sm:$0xff]
        %v2843 = vld [vmem:[#allocation3 + $0x70] sm:$0xff]
        %v2844 = vld [vmem:[#allocation3 + $0x78] sm:$0xff]
        %v2845 = vld [vmem:[#allocation3 + $0x80] sm:$0xff]
        %v2846 = vld [vmem:[#allocation3 + $0x88] sm:$0xff]
        %v2847 = vld [vmem:[#allocation3 + $0x90] sm:$0xff]
        %v2848 = vld [vmem:[#allocation3 + $0x98] sm:$0xff]
        %v2849 = vld [vmem:[#allocation3 + $0xa0] sm:$0xff]
        %v2850 = vld [vmem:[#allocation3 + $0xa8] sm:$0xff]
        %v2851 = vld [vmem:[#allocation3 + $0xb0] sm:$0xff]
        %v2852 = vld [vmem:[#allocation3 + $0xb8] sm:$0xff]
        %v2853 = vld [vmem:[#allocation3 + $0xc0] sm:$0xff]
        %v2854 = vld [vmem:[#allocation3 + $0xc8] sm:$0xff]
        %v2855 = vld [vmem:[#allocation3 + $0xd0] sm:$0xff]
        %v2856 = vld [vmem:[#allocation3 + $0xd8] sm:$0xff]
        %v2857 = vld [vmem:[#allocation3 + $0xe0] sm:$0xff]
        %v2858 = vld [vmem:[#allocation3 + $0xe8] sm:$0xff]
        %v2859 = vld [vmem:[#allocation3 + $0xf0] sm:$0xff]
        %v2860 = vld [vmem:[#allocation3 + $0xf8] sm:$0xff]
        %v2861 = vadd.f32 %v2829, %v2703
        %v2862 = vadd.f32 %v2830, %v2706
        %v2863 = vadd.f32 %v2831, %v2711
        %v2864 = vadd.f32 %v2832, %v2714
        %v2865 = vadd.f32 %v2833, %v2719
        %v2866 = vadd.f32 %v2834, %v2722
        %v2867 = vadd.f32 %v2835, %v2727
        %v2868 = vadd.f32 %v2836, %v2730
        %v2869 = vadd.f32 %v2837, %v2735
        %v2870 = vadd.f32 %v2838, %v2738
        %v2871 = vadd.f32 %v2839, %v2743
        %v2872 = vadd.f32 %v2840, %v2746
        %v2873 = vadd.f32 %v2841, %v2751
        %v2874 = vadd.f32 %v2842, %v2754
        %v2875 = vadd.f32 %v2843, %v2759
        %v2876 = vadd.f32 %v2844, %v2762
        %v2877 = vadd.f32 %v2845, %v2767
        %v2878 = vadd.f32 %v2846, %v2770
        %v2879 = vadd.f32 %v2847, %v2775
        %v2880 = vadd.f32 %v2848, %v2778
        %v2881 = vadd.f32 %v2849, %v2783
        %v2882 = vadd.f32 %v2850, %v2786
        %v2883 = vadd.f32 %v2851, %v2791
        %v2884 = vadd.f32 %v2852, %v2794
        %v2885 = vadd.f32 %v2853, %v2799
        %v2886 = vadd.f32 %v2854, %v2802
        %v2887 = vadd.f32 %v2855, %v2807
        %v2888 = vadd.f32 %v2856, %v2810
        %v2889 = vadd.f32 %v2857, %v2815
        %v2890 = vadd.f32 %v2858, %v2818
        %v2891 = vadd.f32 %v2859, %v2823
        %v2892 = vadd.f32 %v2860, %v2826
        %2893 = vst [vmem:[#allocation3] sm:$0xff] %v2861
        %2894 = vst [vmem:[#allocation3 + $0x8] sm:$0xff] %v2862
        %2895 = vst [vmem:[#allocation3 + $0x10] sm:$0xff] %v2863
        %2896 = vst [vmem:[#allocation3 + $0x18] sm:$0xff] %v2864
        %2897 = vst [vmem:[#allocation3 + $0x20] sm:$0xff] %v2865
        %2898 = vst [vmem:[#allocation3 + $0x28] sm:$0xff] %v2866
        %2899 = vst [vmem:[#allocation3 + $0x30] sm:$0xff] %v2867
        %2900 = vst [vmem:[#allocation3 + $0x38] sm:$0xff] %v2868
        %2901 = vst [vmem:[#allocation3 + $0x40] sm:$0xff] %v2869
        %2902 = vst [vmem:[#allocation3 + $0x48] sm:$0xff] %v2870
        %2903 = vst [vmem:[#allocation3 + $0x50] sm:$0xff] %v2871
        %2904 = vst [vmem:[#allocation3 + $0x58] sm:$0xff] %v2872
        %2905 = vst [vmem:[#allocation3 + $0x60] sm:$0xff] %v2873
        %2906 = vst [vmem:[#allocation3 + $0x68] sm:$0xff] %v2874
        %2907 = vst [vmem:[#allocation3 + $0x70] sm:$0xff] %v2875
        %2908 = vst [vmem:[#allocation3 + $0x78] sm:$0xff] %v2876
        %2909 = vst [vmem:[#allocation3 + $0x80] sm:$0xff] %v2877
        %2910 = vst [vmem:[#allocation3 + $0x88] sm:$0xff] %v2878
        %2911 = vst [vmem:[#allocation3 + $0x90] sm:$0xff] %v2879
        %2912 = vst [vmem:[#allocation3 + $0x98] sm:$0xff] %v2880
        %2913 = vst [vmem:[#allocation3 + $0xa0] sm:$0xff] %v2881
        %2914 = vst [vmem:[#allocation3 + $0xa8] sm:$0xff] %v2882
        %2915 = vst [vmem:[#allocation3 + $0xb0] sm:$0xff] %v2883
        %2916 = vst [vmem:[#allocation3 + $0xb8] sm:$0xff] %v2884
        %2917 = vst [vmem:[#allocation3 + $0xc0] sm:$0xff] %v2885
        %2918 = vst [vmem:[#allocation3 + $0xc8] sm:$0xff] %v2886
        %2919 = vst [vmem:[#allocation3 + $0xd0] sm:$0xff] %v2887
        %2920 = vst [vmem:[#allocation3 + $0xd8] sm:$0xff] %v2888
        %2921 = vst [vmem:[#allocation3 + $0xe0] sm:$0xff] %v2889
        %2922 = vst [vmem:[#allocation3 + $0xe8] sm:$0xff] %v2890
        %2923 = vst [vmem:[#allocation3 + $0xf0] sm:$0xff] %v2891
        %2924 = vst [vmem:[#allocation3 + $0xf8] sm:$0xff] %v2892
        %v2925 = vld [vmem:[%s1281 + $0x8] sm:$0xff]
        %v2926 = vld [vmem:[%s1281 + $0x10] sm:$0xff]
        %v2927 = vld [vmem:[%s1281 + $0x18] sm:$0xff]
        %v2928 = vld [vmem:[%s1281 + $0x20] sm:$0xff]
        %v2929 = vld [vmem:[%s1281 + $0x28] sm:$0xff]
        %v2930 = vld [vmem:[%s1281 + $0x30] sm:$0xff]
        %v2931 = vld [vmem:[%s1281 + $0x38] sm:$0xff]
        %v2932 = vld [vmem:[%s1281 + $0x40] sm:$0xff]
        %v2933 = vld [vmem:[%s1281 + $0x48] sm:$0xff]
        %v2934 = vld [vmem:[%s1281 + $0x50] sm:$0xff]
        %v2935 = vld [vmem:[%s1281 + $0x58] sm:$0xff]
        %v2936 = vld [vmem:[%s1281 + $0x60] sm:$0xff]
        %v2937 = vld [vmem:[%s1281 + $0x68] sm:$0xff]
        %v2938 = vld [vmem:[%s1281 + $0x70] sm:$0xff]
        %v2939 = vld [vmem:[%s1281 + $0x78] sm:$0xff]
        %v2940 = vld [vmem:[%s1281 + $0x80] sm:$0xff]
        %s2941 = scalar_lea.vmem %s219, 80
        %v2942 = vld [vmem:[%s2941] sm:$0xf]
        %v2943 = vld [vmem:[%s2941 + $0x4] sm:$0xf]
        %v2944 = vld [vmem:[%s2941 + $0x8] sm:$0xf]
        %v2945 = vld [vmem:[%s2941 + $0xc] sm:$0xf]
        %v2950 = vunpack.c.l.b16 %v2942
        %v2951 = vunpack.c.l.b16 %v2943
        %v2952 = vunpack.c.l.b16 %v2944
        %v2953 = vunpack.c.l.b16 %v2945
        %v2954 = vpack.c.b16 %v2951, %v2950
        %v2955 = vpack.c.b16 %v2953, %v2952
        %v2959 = vsel %vm373, %v2925, 0
        %v2962 = vsel %vm373, %v2926, 0
        %v2965 = vsel %vm373, %v2927, 0
        %v2968 = vsel %vm373, %v2928, 0
        %v2971 = vsel %vm373, %v2929, 0
        %v2974 = vsel %vm373, %v2930, 0
        %v2977 = vsel %vm373, %v2931, 0
        %v2980 = vsel %vm373, %v2932, 0
        %v2983 = vsel %vm373, %v2933, 0
        %v2986 = vsel %vm373, %v2934, 0
        %v2989 = vsel %vm373, %v2935, 0
        %v2992 = vsel %vm373, %v2936, 0
        %v2995 = vsel %vm373, %v2937, 0
        %v2998 = vsel %vm373, %v2938, 0
        %v3001 = vsel %vm373, %v2939, 0
        %v3004 = vsel %vm373, %v2940, 0
        %3006 = vmatprep.subr.bf16.mxu0 0
        %3007 = vmatpush1.bf16.msra.mxu0 %v2954
        %3008 = vmatprep.subr.bf16.mxu0 0
        %3009 = vmatpush1.bf16.msra.mxu0 %v2955
        %3010 = vmatprep.subr.bf16.mxu0 0
        %3011 = vmatpush1.bf16.msra.mxu0 0
        %3012 = vmatprep.subr.bf16.mxu0 0
        %3013 = vmatpush1.bf16.msra.mxu0 0
        %3014 = vmatprep.subr.bf16.mxu0 0
        %3015 = vmatpush1.bf16.msra.mxu0 0
        %3016 = vmatprep.subr.bf16.mxu0 0
        %3017 = vmatpush1.bf16.msra.mxu0 0
        %3018 = vmatprep.subr.bf16.mxu0 0
        %3019 = vmatpush1.bf16.msra.mxu0 0
        %3020 = vmatprep.subr.bf16.mxu0 0
        %3021 = vmatpush1.bf16.msra.mxu0 0
        %3022 = vmatprep.subr.bf16.mxu0 0
        %3023 = vmatpush1.bf16.msra.mxu0 0
        %3024 = vmatprep.subr.bf16.mxu0 0
        %3025 = vmatpush1.bf16.msra.mxu0 0
        %3026 = vmatprep.subr.bf16.mxu0 0
        %3027 = vmatpush1.bf16.msra.mxu0 0
        %3028 = vmatprep.subr.bf16.mxu0 0
        %3029 = vmatpush1.bf16.msra.mxu0 0
        %3030 = vmatprep.subr.bf16.mxu0 0
        %3031 = vmatpush1.bf16.msra.mxu0 0
        %3032 = vmatprep.subr.bf16.mxu0 0
        %3033 = vmatpush1.bf16.msra.mxu0 0
        %3034 = vmatprep.subr.bf16.mxu0 0
        %3035 = vmatpush1.bf16.msra.mxu0 0
        %3036 = vmatprep.subr.bf16.mxu0 0
        %3037 = vmatpush1.bf16.msra.mxu0 0
        %3038 = vmatprep.mubr.bf16.mxu0 0
        %3039 = vmatmul.mubr.bf16.gmra.mrb[0].mxu0 %v2959
        %v3040 = vpop.f32.mrb[0].mxu0
        %v3041 = vadd.f32 0.0, %v3040
        %v3042 = vpop.f32.mrb[0].mxu0
        %v3043 = vpop.f32.mrb[0].mxu0
        %v3044 = vadd.f32 0.0, %v3043
        %v3045 = vpop.f32.mrb[0].mxu0
        %3046 = vmatprep.mubr.bf16.mxu0 0
        %3047 = vmatmul.mubr.bf16.gmra.mrb[0].mxu0 %v2962
        %v3048 = vpop.f32.mrb[0].mxu0
        %v3049 = vadd.f32 0.0, %v3048
        %v3050 = vpop.f32.mrb[0].mxu0
        %v3051 = vpop.f32.mrb[0].mxu0
        %v3052 = vadd.f32 0.0, %v3051
        %v3053 = vpop.f32.mrb[0].mxu0
        %3054 = vmatprep.mubr.bf16.mxu0 0
        %3055 = vmatmul.mubr.bf16.gmra.mrb[0].mxu0 %v2965
        %v3056 = vpop.f32.mrb[0].mxu0
        %v3057 = vadd.f32 0.0, %v3056
        %v3058 = vpop.f32.mrb[0].mxu0
        %v3059 = vpop.f32.mrb[0].mxu0
        %v3060 = vadd.f32 0.0, %v3059
        %v3061 = vpop.f32.mrb[0].mxu0
        %3062 = vmatprep.mubr.bf16.mxu0 0
        %3063 = vmatmul.mubr.bf16.gmra.mrb[0].mxu0 %v2968
        %v3064 = vpop.f32.mrb[0].mxu0
        %v3065 = vadd.f32 0.0, %v3064
        %v3066 = vpop.f32.mrb[0].mxu0
        %v3067 = vpop.f32.mrb[0].mxu0
        %v3068 = vadd.f32 0.0, %v3067
        %v3069 = vpop.f32.mrb[0].mxu0
        %3070 = vmatprep.mubr.bf16.mxu0 0
        %3071 = vmatmul.mubr.bf16.gmra.mrb[0].mxu0 %v2971
        %v3072 = vpop.f32.mrb[0].mxu0
        %v3073 = vadd.f32 0.0, %v3072
        %v3074 = vpop.f32.mrb[0].mxu0
        %v3075 = vpop.f32.mrb[0].mxu0
        %v3076 = vadd.f32 0.0, %v3075
        %v3077 = vpop.f32.mrb[0].mxu0
        %3078 = vmatprep.mubr.bf16.mxu0 0
        %3079 = vmatmul.mubr.bf16.gmra.mrb[0].mxu0 %v2974
        %v3080 = vpop.f32.mrb[0].mxu0
        %v3081 = vadd.f32 0.0, %v3080
        %v3082 = vpop.f32.mrb[0].mxu0
        %v3083 = vpop.f32.mrb[0].mxu0
        %v3084 = vadd.f32 0.0, %v3083
        %v3085 = vpop.f32.mrb[0].mxu0
        %3086 = vmatprep.mubr.bf16.mxu0 0
        %3087 = vmatmul.mubr.bf16.gmra.mrb[0].mxu0 %v2977
        %v3088 = vpop.f32.mrb[0].mxu0
        %v3089 = vadd.f32 0.0, %v3088
        %v3090 = vpop.f32.mrb[0].mxu0
        %v3091 = vpop.f32.mrb[0].mxu0
        %v3092 = vadd.f32 0.0, %v3091
        %v3093 = vpop.f32.mrb[0].mxu0
        %3094 = vmatprep.mubr.bf16.mxu0 0
        %3095 = vmatmul.mubr.bf16.gmra.mrb[0].mxu0 %v2980
        %v3096 = vpop.f32.mrb[0].mxu0
        %v3097 = vadd.f32 0.0, %v3096
        %v3098 = vpop.f32.mrb[0].mxu0
        %v3099 = vpop.f32.mrb[0].mxu0
        %v3100 = vadd.f32 0.0, %v3099
        %v3101 = vpop.f32.mrb[0].mxu0
        %3102 = vmatprep.mubr.bf16.mxu0 0
        %3103 = vmatmul.mubr.bf16.gmra.mrb[0].mxu0 %v2983
        %v3104 = vpop.f32.mrb[0].mxu0
        %v3105 = vadd.f32 0.0, %v3104
        %v3106 = vpop.f32.mrb[0].mxu0
        %v3107 = vpop.f32.mrb[0].mxu0
        %v3108 = vadd.f32 0.0, %v3107
        %v3109 = vpop.f32.mrb[0].mxu0
        %3110 = vmatprep.mubr.bf16.mxu0 0
        %3111 = vmatmul.mubr.bf16.gmra.mrb[0].mxu0 %v2986
        %v3112 = vpop.f32.mrb[0].mxu0
        %v3113 = vadd.f32 0.0, %v3112
        %v3114 = vpop.f32.mrb[0].mxu0
        %v3115 = vpop.f32.mrb[0].mxu0
        %v3116 = vadd.f32 0.0, %v3115
        %v3117 = vpop.f32.mrb[0].mxu0
        %3118 = vmatprep.mubr.bf16.mxu0 0
        %3119 = vmatmul.mubr.bf16.gmra.mrb[0].mxu0 %v2989
        %v3120 = vpop.f32.mrb[0].mxu0
        %v3121 = vadd.f32 0.0, %v3120
        %v3122 = vpop.f32.mrb[0].mxu0
        %v3123 = vpop.f32.mrb[0].mxu0
        %v3124 = vadd.f32 0.0, %v3123
        %v3125 = vpop.f32.mrb[0].mxu0
        %3126 = vmatprep.mubr.bf16.mxu0 0
        %3127 = vmatmul.mubr.bf16.gmra.mrb[0].mxu0 %v2992
        %v3128 = vpop.f32.mrb[0].mxu0
        %v3129 = vadd.f32 0.0, %v3128
        %v3130 = vpop.f32.mrb[0].mxu0
        %v3131 = vpop.f32.mrb[0].mxu0
        %v3132 = vadd.f32 0.0, %v3131
        %v3133 = vpop.f32.mrb[0].mxu0
        %3134 = vmatprep.mubr.bf16.mxu0 0
        %3135 = vmatmul.mubr.bf16.gmra.mrb[0].mxu0 %v2995
        %v3136 = vpop.f32.mrb[0].mxu0
        %v3137 = vadd.f32 0.0, %v3136
        %v3138 = vpop.f32.mrb[0].mxu0
        %v3139 = vpop.f32.mrb[0].mxu0
        %v3140 = vadd.f32 0.0, %v3139
        %v3141 = vpop.f32.mrb[0].mxu0
        %3142 = vmatprep.mubr.bf16.mxu0 0
        %3143 = vmatmul.mubr.bf16.gmra.mrb[0].mxu0 %v2998
        %v3144 = vpop.f32.mrb[0].mxu0
        %v3145 = vadd.f32 0.0, %v3144
        %v3146 = vpop.f32.mrb[0].mxu0
        %v3147 = vpop.f32.mrb[0].mxu0
        %v3148 = vadd.f32 0.0, %v3147
        %v3149 = vpop.f32.mrb[0].mxu0
        %3150 = vmatprep.mubr.bf16.mxu0 0
        %3151 = vmatmul.mubr.bf16.gmra.mrb[0].mxu0 %v3001
        %v3152 = vpop.f32.mrb[0].mxu0
        %v3153 = vadd.f32 0.0, %v3152
        %v3154 = vpop.f32.mrb[0].mxu0
        %v3155 = vpop.f32.mrb[0].mxu0
        %v3156 = vadd.f32 0.0, %v3155
        %v3157 = vpop.f32.mrb[0].mxu0
        %3158 = vmatprep.mubr.bf16.mxu0 0
        %3159 = vmatmul.mubr.bf16.gmra.mrb[0].mxu0 %v3004
        %v3160 = vpop.f32.mrb[0].mxu0
        %v3161 = vadd.f32 0.0, %v3160
        %v3162 = vpop.f32.mrb[0].mxu0
        %v3163 = vpop.f32.mrb[0].mxu0
        %v3164 = vadd.f32 0.0, %v3163
        %v3165 = vpop.f32.mrb[0].mxu0
        %3166 = vdwg.mxu0
        %v3167 = vld [vmem:[#allocation3] sm:$0xff]
        %v3168 = vld [vmem:[#allocation3 + $0x8] sm:$0xff]
        %v3169 = vld [vmem:[#allocation3 + $0x10] sm:$0xff]
        %v3170 = vld [vmem:[#allocation3 + $0x18] sm:$0xff]
        %v3171 = vld [vmem:[#allocation3 + $0x20] sm:$0xff]
        %v3172 = vld [vmem:[#allocation3 + $0x28] sm:$0xff]
        %v3173 = vld [vmem:[#allocation3 + $0x30] sm:$0xff]
        %v3174 = vld [vmem:[#allocation3 + $0x38] sm:$0xff]
        %v3175 = vld [vmem:[#allocation3 + $0x40] sm:$0xff]
        %v3176 = vld [vmem:[#allocation3 + $0x48] sm:$0xff]
        %v3177 = vld [vmem:[#allocation3 + $0x50] sm:$0xff]
        %v3178 = vld [vmem:[#allocation3 + $0x58] sm:$0xff]
        %v3179 = vld [vmem:[#allocation3 + $0x60] sm:$0xff]
        %v3180 = vld [vmem:[#allocation3 + $0x68] sm:$0xff]
        %v3181 = vld [vmem:[#allocation3 + $0x70] sm:$0xff]
        %v3182 = vld [vmem:[#allocation3 + $0x78] sm:$0xff]
        %v3183 = vld [vmem:[#allocation3 + $0x80] sm:$0xff]
        %v3184 = vld [vmem:[#allocation3 + $0x88] sm:$0xff]
        %v3185 = vld [vmem:[#allocation3 + $0x90] sm:$0xff]
        %v3186 = vld [vmem:[#allocation3 + $0x98] sm:$0xff]
        %v3187 = vld [vmem:[#allocation3 + $0xa0] sm:$0xff]
        %v3188 = vld [vmem:[#allocation3 + $0xa8] sm:$0xff]
        %v3189 = vld [vmem:[#allocation3 + $0xb0] sm:$0xff]
        %v3190 = vld [vmem:[#allocation3 + $0xb8] sm:$0xff]
        %v3191 = vld [vmem:[#allocation3 + $0xc0] sm:$0xff]
        %v3192 = vld [vmem:[#allocation3 + $0xc8] sm:$0xff]
        %v3193 = vld [vmem:[#allocation3 + $0xd0] sm:$0xff]
        %v3194 = vld [vmem:[#allocation3 + $0xd8] sm:$0xff]
        %v3195 = vld [vmem:[#allocation3 + $0xe0] sm:$0xff]
        %v3196 = vld [vmem:[#allocation3 + $0xe8] sm:$0xff]
        %v3197 = vld [vmem:[#allocation3 + $0xf0] sm:$0xff]
        %v3198 = vld [vmem:[#allocation3 + $0xf8] sm:$0xff]
        %v3199 = vadd.f32 %v3167, %v3041
        %v3200 = vadd.f32 %v3168, %v3044
        %v3201 = vadd.f32 %v3169, %v3049
        %v3202 = vadd.f32 %v3170, %v3052
        %v3203 = vadd.f32 %v3171, %v3057
        %v3204 = vadd.f32 %v3172, %v3060
        %v3205 = vadd.f32 %v3173, %v3065
        %v3206 = vadd.f32 %v3174, %v3068
        %v3207 = vadd.f32 %v3175, %v3073
        %v3208 = vadd.f32 %v3176, %v3076
        %v3209 = vadd.f32 %v3177, %v3081
        %v3210 = vadd.f32 %v3178, %v3084
        %v3211 = vadd.f32 %v3179, %v3089
        %v3212 = vadd.f32 %v3180, %v3092
        %v3213 = vadd.f32 %v3181, %v3097
        %v3214 = vadd.f32 %v3182, %v3100
        %v3215 = vadd.f32 %v3183, %v3105
        %v3216 = vadd.f32 %v3184, %v3108
        %v3217 = vadd.f32 %v3185, %v3113
        %v3218 = vadd.f32 %v3186, %v3116
        %v3219 = vadd.f32 %v3187, %v3121
        %v3220 = vadd.f32 %v3188, %v3124
        %v3221 = vadd.f32 %v3189, %v3129
        %v3222 = vadd.f32 %v3190, %v3132
        %v3223 = vadd.f32 %v3191, %v3137
        %v3224 = vadd.f32 %v3192, %v3140
        %v3225 = vadd.f32 %v3193, %v3145
        %v3226 = vadd.f32 %v3194, %v3148
        %v3227 = vadd.f32 %v3195, %v3153
        %v3228 = vadd.f32 %v3196, %v3156
        %v3229 = vadd.f32 %v3197, %v3161
        %v3230 = vadd.f32 %v3198, %v3164
        %3231 = vst [vmem:[#allocation3] sm:$0xff] %v3199
        %3232 = vst [vmem:[#allocation3 + $0x8] sm:$0xff] %v3200
        %3233 = vst [vmem:[#allocation3 + $0x10] sm:$0xff] %v3201
        %3234 = vst [vmem:[#allocation3 + $0x18] sm:$0xff] %v3202
        %3235 = vst [vmem:[#allocation3 + $0x20] sm:$0xff] %v3203
        %3236 = vst [vmem:[#allocation3 + $0x28] sm:$0xff] %v3204
        %3237 = vst [vmem:[#allocation3 + $0x30] sm:$0xff] %v3205
        %3238 = vst [vmem:[#allocation3 + $0x38] sm:$0xff] %v3206
        %3239 = vst [vmem:[#allocation3 + $0x40] sm:$0xff] %v3207
        %3240 = vst [vmem:[#allocation3 + $0x48] sm:$0xff] %v3208
        %3241 = vst [vmem:[#allocation3 + $0x50] sm:$0xff] %v3209
        %3242 = vst [vmem:[#allocation3 + $0x58] sm:$0xff] %v3210
        %3243 = vst [vmem:[#allocation3 + $0x60] sm:$0xff] %v3211
        %3244 = vst [vmem:[#allocation3 + $0x68] sm:$0xff] %v3212
        %3245 = vst [vmem:[#allocation3 + $0x70] sm:$0xff] %v3213
        %3246 = vst [vmem:[#allocation3 + $0x78] sm:$0xff] %v3214
        %3247 = vst [vmem:[#allocation3 + $0x80] sm:$0xff] %v3215
        %3248 = vst [vmem:[#allocation3 + $0x88] sm:$0xff] %v3216
        %3249 = vst [vmem:[#allocation3 + $0x90] sm:$0xff] %v3217
        %3250 = vst [vmem:[#allocation3 + $0x98] sm:$0xff] %v3218
        %3251 = vst [vmem:[#allocation3 + $0xa0] sm:$0xff] %v3219
        %3252 = vst [vmem:[#allocation3 + $0xa8] sm:$0xff] %v3220
        %3253 = vst [vmem:[#allocation3 + $0xb0] sm:$0xff] %v3221
        %3254 = vst [vmem:[#allocation3 + $0xb8] sm:$0xff] %v3222
        %3255 = vst [vmem:[#allocation3 + $0xc0] sm:$0xff] %v3223
        %3256 = vst [vmem:[#allocation3 + $0xc8] sm:$0xff] %v3224
        %3257 = vst [vmem:[#allocation3 + $0xd0] sm:$0xff] %v3225
        %3258 = vst [vmem:[#allocation3 + $0xd8] sm:$0xff] %v3226
        %3259 = vst [vmem:[#allocation3 + $0xe0] sm:$0xff] %v3227
        %3260 = vst [vmem:[#allocation3 + $0xe8] sm:$0xff] %v3228
        %3261 = vst [vmem:[#allocation3 + $0xf0] sm:$0xff] %v3229
        %3262 = vst [vmem:[#allocation3 + $0xf8] sm:$0xff] %v3230
        %v3263 = vld [vmem:[#allocation2 + $0x10] sm:$0xff]
        %v3264 = vld [vmem:[#allocation2 + $0x18] sm:$0xff]
        %v3265 = vld [vmem:[#allocation2 + $0x20] sm:$0xff]
        %v3266 = vld [vmem:[#allocation2 + $0x28] sm:$0xff]
        %v3267 = vld [vmem:[#allocation2 + $0x30] sm:$0xff]
        %v3268 = vld [vmem:[#allocation2 + $0x38] sm:$0xff]
        %v3269 = vld [vmem:[#allocation2 + $0x40] sm:$0xff]
        %v3270 = vld [vmem:[#allocation2 + $0x48] sm:$0xff]
        %v3271 = vld [vmem:[#allocation2 + $0x50] sm:$0xff]
        %v3272 = vld [vmem:[#allocation2 + $0x58] sm:$0xff]
        %v3273 = vld [vmem:[#allocation2 + $0x60] sm:$0xff]
        %v3274 = vld [vmem:[#allocation2 + $0x68] sm:$0xff]
        %v3275 = vld [vmem:[#allocation2 + $0x70] sm:$0xff]
        %v3276 = vld [vmem:[#allocation2 + $0x78] sm:$0xff]
        %v3277 = vld [vmem:[#allocation2 + $0x80] sm:$0xff]
        %v3278 = vld [vmem:[#allocation2 + $0x88] sm:$0xff]
        %s3279 = scalar_lea.vmem %s219, 96
        %v3280 = vld [vmem:[%s3279] sm:$0xf]
        %v3281 = vld [vmem:[%s3279 + $0x4] sm:$0xf]
        %v3282 = vld [vmem:[%s3279 + $0x8] sm:$0xf]
        %v3283 = vld [vmem:[%s3279 + $0xc] sm:$0xf]
        %v3288 = vunpack.c.l.b16 %v3280
        %v3289 = vunpack.c.l.b16 %v3281
        %v3290 = vunpack.c.l.b16 %v3282
        %v3291 = vunpack.c.l.b16 %v3283
        %v3292 = vpack.c.b16 %v3289, %v3288
        %v3293 = vpack.c.b16 %v3291, %v3290
        %v3297 = vsel %vm373, %v3263, 0
        %v3300 = vsel %vm373, %v3264, 0
        %v3303 = vsel %vm373, %v3265, 0
        %v3306 = vsel %vm373, %v3266, 0
        %v3309 = vsel %vm373, %v3267, 0
        %v3312 = vsel %vm373, %v3268, 0
        %v3315 = vsel %vm373, %v3269, 0
        %v3318 = vsel %vm373, %v3270, 0
        %v3321 = vsel %vm373, %v3271, 0
        %v3324 = vsel %vm373, %v3272, 0
        %v3327 = vsel %vm373, %v3273, 0
        %v3330 = vsel %vm373, %v3274, 0
        %v3333 = vsel %vm373, %v3275, 0
        %v3336 = vsel %vm373, %v3276, 0
        %v3339 = vsel %vm373, %v3277, 0
        %v3342 = vsel %vm373, %v3278, 0
        %3344 = vmatprep.subr.bf16.mxu0 0
        %3345 = vmatpush1.bf16.msra.mxu0 %v3292
        %3346 = vmatprep.subr.bf16.mxu0 0
        %3347 = vmatpush1.bf16.msra.mxu0 %v3293
        %3348 = vmatprep.subr.bf16.mxu0 0
        %3349 = vmatpush1.bf16.msra.mxu0 0
        %3350 = vmatprep.subr.bf16.mxu0 0
        %3351 = vmatpush1.bf16.msra.mxu0 0
        %3352 = vmatprep.subr.bf16.mxu0 0
        %3353 = vmatpush1.bf16.msra.mxu0 0
        %3354 = vmatprep.subr.bf16.mxu0 0
        %3355 = vmatpush1.bf16.msra.mxu0 0
        %3356 = vmatprep.subr.bf16.mxu0 0
        %3357 = vmatpush1.bf16.msra.mxu0 0
        %3358 = vmatprep.subr.bf16.mxu0 0
        %3359 = vmatpush1.bf16.msra.mxu0 0
        %3360 = vmatprep.subr.bf16.mxu0 0
        %3361 = vmatpush1.bf16.msra.mxu0 0
        %3362 = vmatprep.subr.bf16.mxu0 0
        %3363 = vmatpush1.bf16.msra.mxu0 0
        %3364 = vmatprep.subr.bf16.mxu0 0
        %3365 = vmatpush1.bf16.msra.mxu0 0
        %3366 = vmatprep.subr.bf16.mxu0 0
        %3367 = vmatpush1.bf16.msra.mxu0 0
        %3368 = vmatprep.subr.bf16.mxu0 0
        %3369 = vmatpush1.bf16.msra.mxu0 0
        %3370 = vmatprep.subr.bf16.mxu0 0
        %3371 = vmatpush1.bf16.msra.mxu0 0
        %3372 = vmatprep.subr.bf16.mxu0 0
        %3373 = vmatpush1.bf16.msra.mxu0 0
        %3374 = vmatprep.subr.bf16.mxu0 0
        %3375 = vmatpush1.bf16.msra.mxu0 0
        %3376 = vmatprep.mubr.bf16.mxu0 0
        %3377 = vmatmul.mubr.bf16.gmra.mrb[0].mxu0 %v3297
        %v3378 = vpop.f32.mrb[0].mxu0
        %v3379 = vadd.f32 0.0, %v3378
        %v3380 = vpop.f32.mrb[0].mxu0
        %v3381 = vpop.f32.mrb[0].mxu0
        %v3382 = vadd.f32 0.0, %v3381
        %v3383 = vpop.f32.mrb[0].mxu0
        %3384 = vmatprep.mubr.bf16.mxu0 0
        %3385 = vmatmul.mubr.bf16.gmra.mrb[0].mxu0 %v3300
        %v3386 = vpop.f32.mrb[0].mxu0
        %v3387 = vadd.f32 0.0, %v3386
        %v3388 = vpop.f32.mrb[0].mxu0
        %v3389 = vpop.f32.mrb[0].mxu0
        %v3390 = vadd.f32 0.0, %v3389
        %v3391 = vpop.f32.mrb[0].mxu0
        %3392 = vmatprep.mubr.bf16.mxu0 0
        %3393 = vmatmul.mubr.bf16.gmra.mrb[0].mxu0 %v3303
        %v3394 = vpop.f32.mrb[0].mxu0
        %v3395 = vadd.f32 0.0, %v3394
        %v3396 = vpop.f32.mrb[0].mxu0
        %v3397 = vpop.f32.mrb[0].mxu0
        %v3398 = vadd.f32 0.0, %v3397
        %v3399 = vpop.f32.mrb[0].mxu0
        %3400 = vmatprep.mubr.bf16.mxu0 0
        %3401 = vmatmul.mubr.bf16.gmra.mrb[0].mxu0 %v3306
        %v3402 = vpop.f32.mrb[0].mxu0
        %v3403 = vadd.f32 0.0, %v3402
        %v3404 = vpop.f32.mrb[0].mxu0
        %v3405 = vpop.f32.mrb[0].mxu0
        %v3406 = vadd.f32 0.0, %v3405
        %v3407 = vpop.f32.mrb[0].mxu0
        %3408 = vmatprep.mubr.bf16.mxu0 0
        %3409 = vmatmul.mubr.bf16.gmra.mrb[0].mxu0 %v3309
        %v3410 = vpop.f32.mrb[0].mxu0
        %v3411 = vadd.f32 0.0, %v3410
        %v3412 = vpop.f32.mrb[0].mxu0
        %v3413 = vpop.f32.mrb[0].mxu0
        %v3414 = vadd.f32 0.0, %v3413
        %v3415 = vpop.f32.mrb[0].mxu0
        %3416 = vmatprep.mubr.bf16.mxu0 0
        %3417 = vmatmul.mubr.bf16.gmra.mrb[0].mxu0 %v3312
        %v3418 = vpop.f32.mrb[0].mxu0
        %v3419 = vadd.f32 0.0, %v3418
        %v3420 = vpop.f32.mrb[0].mxu0
        %v3421 = vpop.f32.mrb[0].mxu0
        %v3422 = vadd.f32 0.0, %v3421
        %v3423 = vpop.f32.mrb[0].mxu0
        %3424 = vmatprep.mubr.bf16.mxu0 0
        %3425 = vmatmul.mubr.bf16.gmra.mrb[0].mxu0 %v3315
        %v3426 = vpop.f32.mrb[0].mxu0
        %v3427 = vadd.f32 0.0, %v3426
        %v3428 = vpop.f32.mrb[0].mxu0
        %v3429 = vpop.f32.mrb[0].mxu0
        %v3430 = vadd.f32 0.0, %v3429
        %v3431 = vpop.f32.mrb[0].mxu0
        %3432 = vmatprep.mubr.bf16.mxu0 0
        %3433 = vmatmul.mubr.bf16.gmra.mrb[0].mxu0 %v3318
        %v3434 = vpop.f32.mrb[0].mxu0
        %v3435 = vadd.f32 0.0, %v3434
        %v3436 = vpop.f32.mrb[0].mxu0
        %v3437 = vpop.f32.mrb[0].mxu0
        %v3438 = vadd.f32 0.0, %v3437
        %v3439 = vpop.f32.mrb[0].mxu0
        %3440 = vmatprep.mubr.bf16.mxu0 0
        %3441 = vmatmul.mubr.bf16.gmra.mrb[0].mxu0 %v3321
        %v3442 = vpop.f32.mrb[0].mxu0
        %v3443 = vadd.f32 0.0, %v3442
        %v3444 = vpop.f32.mrb[0].mxu0
        %v3445 = vpop.f32.mrb[0].mxu0
        %v3446 = vadd.f32 0.0, %v3445
        %v3447 = vpop.f32.mrb[0].mxu0
        %3448 = vmatprep.mubr.bf16.mxu0 0
        %3449 = vmatmul.mubr.bf16.gmra.mrb[0].mxu0 %v3324
        %v3450 = vpop.f32.mrb[0].mxu0
        %v3451 = vadd.f32 0.0, %v3450
        %v3452 = vpop.f32.mrb[0].mxu0
        %v3453 = vpop.f32.mrb[0].mxu0
        %v3454 = vadd.f32 0.0, %v3453
        %v3455 = vpop.f32.mrb[0].mxu0
        %3456 = vmatprep.mubr.bf16.mxu0 0
        %3457 = vmatmul.mubr.bf16.gmra.mrb[0].mxu0 %v3327
        %v3458 = vpop.f32.mrb[0].mxu0
        %v3459 = vadd.f32 0.0, %v3458
        %v3460 = vpop.f32.mrb[0].mxu0
        %v3461 = vpop.f32.mrb[0].mxu0
        %v3462 = vadd.f32 0.0, %v3461
        %v3463 = vpop.f32.mrb[0].mxu0
        %3464 = vmatprep.mubr.bf16.mxu0 0
        %3465 = vmatmul.mubr.bf16.gmra.mrb[0].mxu0 %v3330
        %v3466 = vpop.f32.mrb[0].mxu0
        %v3467 = vadd.f32 0.0, %v3466
        %v3468 = vpop.f32.mrb[0].mxu0
        %v3469 = vpop.f32.mrb[0].mxu0
        %v3470 = vadd.f32 0.0, %v3469
        %v3471 = vpop.f32.mrb[0].mxu0
        %3472 = vmatprep.mubr.bf16.mxu0 0
        %3473 = vmatmul.mubr.bf16.gmra.mrb[0].mxu0 %v3333
        %v3474 = vpop.f32.mrb[0].mxu0
        %v3475 = vadd.f32 0.0, %v3474
        %v3476 = vpop.f32.mrb[0].mxu0
        %v3477 = vpop.f32.mrb[0].mxu0
        %v3478 = vadd.f32 0.0, %v3477
        %v3479 = vpop.f32.mrb[0].mxu0
        %3480 = vmatprep.mubr.bf16.mxu0 0
        %3481 = vmatmul.mubr.bf16.gmra.mrb[0].mxu0 %v3336
        %v3482 = vpop.f32.mrb[0].mxu0
        %v3483 = vadd.f32 0.0, %v3482
        %v3484 = vpop.f32.mrb[0].mxu0
        %v3485 = vpop.f32.mrb[0].mxu0
        %v3486 = vadd.f32 0.0, %v3485
        %v3487 = vpop.f32.mrb[0].mxu0
        %3488 = vmatprep.mubr.bf16.mxu0 0
        %3489 = vmatmul.mubr.bf16.gmra.mrb[0].mxu0 %v3339
        %v3490 = vpop.f32.mrb[0].mxu0
        %v3491 = vadd.f32 0.0, %v3490
        %v3492 = vpop.f32.mrb[0].mxu0
        %v3493 = vpop.f32.mrb[0].mxu0
        %v3494 = vadd.f32 0.0, %v3493
        %v3495 = vpop.f32.mrb[0].mxu0
        %3496 = vmatprep.mubr.bf16.mxu0 0
        %3497 = vmatmul.mubr.bf16.gmra.mrb[0].mxu0 %v3342
        %v3498 = vpop.f32.mrb[0].mxu0
        %v3499 = vadd.f32 0.0, %v3498
        %v3500 = vpop.f32.mrb[0].mxu0
        %v3501 = vpop.f32.mrb[0].mxu0
        %v3502 = vadd.f32 0.0, %v3501
        %v3503 = vpop.f32.mrb[0].mxu0
        %3504 = vdwg.mxu0
        %v3505 = vld [vmem:[#allocation3] sm:$0xff]
        %v3506 = vld [vmem:[#allocation3 + $0x8] sm:$0xff]
        %v3507 = vld [vmem:[#allocation3 + $0x10] sm:$0xff]
        %v3508 = vld [vmem:[#allocation3 + $0x18] sm:$0xff]
        %v3509 = vld [vmem:[#allocation3 + $0x20] sm:$0xff]
        %v3510 = vld [vmem:[#allocation3 + $0x28] sm:$0xff]
        %v3511 = vld [vmem:[#allocation3 + $0x30] sm:$0xff]
        %v3512 = vld [vmem:[#allocation3 + $0x38] sm:$0xff]
        %v3513 = vld [vmem:[#allocation3 + $0x40] sm:$0xff]
        %v3514 = vld [vmem:[#allocation3 + $0x48] sm:$0xff]
        %v3515 = vld [vmem:[#allocation3 + $0x50] sm:$0xff]
        %v3516 = vld [vmem:[#allocation3 + $0x58] sm:$0xff]
        %v3517 = vld [vmem:[#allocation3 + $0x60] sm:$0xff]
        %v3518 = vld [vmem:[#allocation3 + $0x68] sm:$0xff]
        %v3519 = vld [vmem:[#allocation3 + $0x70] sm:$0xff]
        %v3520 = vld [vmem:[#allocation3 + $0x78] sm:$0xff]
        %v3521 = vld [vmem:[#allocation3 + $0x80] sm:$0xff]
        %v3522 = vld [vmem:[#allocation3 + $0x88] sm:$0xff]
        %v3523 = vld [vmem:[#allocation3 + $0x90] sm:$0xff]
        %v3524 = vld [vmem:[#allocation3 + $0x98] sm:$0xff]
        %v3525 = vld [vmem:[#allocation3 + $0xa0] sm:$0xff]
        %v3526 = vld [vmem:[#allocation3 + $0xa8] sm:$0xff]
        %v3527 = vld [vmem:[#allocation3 + $0xb0] sm:$0xff]
        %v3528 = vld [vmem:[#allocation3 + $0xb8] sm:$0xff]
        %v3529 = vld [vmem:[#allocation3 + $0xc0] sm:$0xff]
        %v3530 = vld [vmem:[#allocation3 + $0xc8] sm:$0xff]
        %v3531 = vld [vmem:[#allocation3 + $0xd0] sm:$0xff]
        %v3532 = vld [vmem:[#allocation3 + $0xd8] sm:$0xff]
        %v3533 = vld [vmem:[#allocation3 + $0xe0] sm:$0xff]
        %v3534 = vld [vmem:[#allocation3 + $0xe8] sm:$0xff]
        %v3535 = vld [vmem:[#allocation3 + $0xf0] sm:$0xff]
        %v3536 = vld [vmem:[#allocation3 + $0xf8] sm:$0xff]
        %v3537 = vadd.f32 %v3505, %v3379
        %v3538 = vadd.f32 %v3506, %v3382
        %v3539 = vadd.f32 %v3507, %v3387
        %v3540 = vadd.f32 %v3508, %v3390
        %v3541 = vadd.f32 %v3509, %v3395
        %v3542 = vadd.f32 %v3510, %v3398
        %v3543 = vadd.f32 %v3511, %v3403
        %v3544 = vadd.f32 %v3512, %v3406
        %v3545 = vadd.f32 %v3513, %v3411
        %v3546 = vadd.f32 %v3514, %v3414
        %v3547 = vadd.f32 %v3515, %v3419
        %v3548 = vadd.f32 %v3516, %v3422
        %v3549 = vadd.f32 %v3517, %v3427
        %v3550 = vadd.f32 %v3518, %v3430
        %v3551 = vadd.f32 %v3519, %v3435
        %v3552 = vadd.f32 %v3520, %v3438
        %v3553 = vadd.f32 %v3521, %v3443
        %v3554 = vadd.f32 %v3522, %v3446
        %v3555 = vadd.f32 %v3523, %v3451
        %v3556 = vadd.f32 %v3524, %v3454
        %v3557 = vadd.f32 %v3525, %v3459
        %v3558 = vadd.f32 %v3526, %v3462
        %v3559 = vadd.f32 %v3527, %v3467
        %v3560 = vadd.f32 %v3528, %v3470
        %v3561 = vadd.f32 %v3529, %v3475
        %v3562 = vadd.f32 %v3530, %v3478
        %v3563 = vadd.f32 %v3531, %v3483
        %v3564 = vadd.f32 %v3532, %v3486
        %v3565 = vadd.f32 %v3533, %v3491
        %v3566 = vadd.f32 %v3534, %v3494
        %v3567 = vadd.f32 %v3535, %v3499
        %v3568 = vadd.f32 %v3536, %v3502
        %3569 = vst [vmem:[#allocation3] sm:$0xff] %v3537
        %3570 = vst [vmem:[#allocation3 + $0x8] sm:$0xff] %v3538
        %3571 = vst [vmem:[#allocation3 + $0x10] sm:$0xff] %v3539
        %3572 = vst [vmem:[#allocation3 + $0x18] sm:$0xff] %v3540
        %3573 = vst [vmem:[#allocation3 + $0x20] sm:$0xff] %v3541
        %3574 = vst [vmem:[#allocation3 + $0x28] sm:$0xff] %v3542
        %3575 = vst [vmem:[#allocation3 + $0x30] sm:$0xff] %v3543
        %3576 = vst [vmem:[#allocation3 + $0x38] sm:$0xff] %v3544
        %3577 = vst [vmem:[#allocation3 + $0x40] sm:$0xff] %v3545
        %3578 = vst [vmem:[#allocation3 + $0x48] sm:$0xff] %v3546
        %3579 = vst [vmem:[#allocation3 + $0x50] sm:$0xff] %v3547
        %3580 = vst [vmem:[#allocation3 + $0x58] sm:$0xff] %v3548
        %3581 = vst [vmem:[#allocation3 + $0x60] sm:$0xff] %v3549
        %3582 = vst [vmem:[#allocation3 + $0x68] sm:$0xff] %v3550
        %3583 = vst [vmem:[#allocation3 + $0x70] sm:$0xff] %v3551
        %3584 = vst [vmem:[#allocation3 + $0x78] sm:$0xff] %v3552
        %3585 = vst [vmem:[#allocation3 + $0x80] sm:$0xff] %v3553
        %3586 = vst [vmem:[#allocation3 + $0x88] sm:$0xff] %v3554
        %3587 = vst [vmem:[#allocation3 + $0x90] sm:$0xff] %v3555
        %3588 = vst [vmem:[#allocation3 + $0x98] sm:$0xff] %v3556
        %3589 = vst [vmem:[#allocation3 + $0xa0] sm:$0xff] %v3557
        %3590 = vst [vmem:[#allocation3 + $0xa8] sm:$0xff] %v3558
        %3591 = vst [vmem:[#allocation3 + $0xb0] sm:$0xff] %v3559
        %3592 = vst [vmem:[#allocation3 + $0xb8] sm:$0xff] %v3560
        %3593 = vst [vmem:[#allocation3 + $0xc0] sm:$0xff] %v3561
        %3594 = vst [vmem:[#allocation3 + $0xc8] sm:$0xff] %v3562
        %3595 = vst [vmem:[#allocation3 + $0xd0] sm:$0xff] %v3563
        %3596 = vst [vmem:[#allocation3 + $0xd8] sm:$0xff] %v3564
        %3597 = vst [vmem:[#allocation3 + $0xe0] sm:$0xff] %v3565
        %3598 = vst [vmem:[#allocation3 + $0xe8] sm:$0xff] %v3566
        %3599 = vst [vmem:[#allocation3 + $0xf0] sm:$0xff] %v3567
        %3600 = vst [vmem:[#allocation3 + $0xf8] sm:$0xff] %v3568
        %v3601 = vld [vmem:[%s953 + $0x10] sm:$0xff]
        %v3602 = vld [vmem:[%s953 + $0x18] sm:$0xff]
        %v3603 = vld [vmem:[%s953 + $0x20] sm:$0xff]
        %v3604 = vld [vmem:[%s953 + $0x28] sm:$0xff]
        %v3605 = vld [vmem:[%s953 + $0x30] sm:$0xff]
        %v3606 = vld [vmem:[%s953 + $0x38] sm:$0xff]
        %v3607 = vld [vmem:[%s953 + $0x40] sm:$0xff]
        %v3608 = vld [vmem:[%s953 + $0x48] sm:$0xff]
        %v3609 = vld [vmem:[%s953 + $0x50] sm:$0xff]
        %v3610 = vld [vmem:[%s953 + $0x58] sm:$0xff]
        %v3611 = vld [vmem:[%s953 + $0x60] sm:$0xff]
        %v3612 = vld [vmem:[%s953 + $0x68] sm:$0xff]
        %v3613 = vld [vmem:[%s953 + $0x70] sm:$0xff]
        %v3614 = vld [vmem:[%s953 + $0x78] sm:$0xff]
        %v3615 = vld [vmem:[%s953 + $0x80] sm:$0xff]
        %v3616 = vld [vmem:[%s953 + $0x88] sm:$0xff]
        %s3617 = scalar_lea.vmem %s219, 112
        %v3618 = vld [vmem:[%s3617] sm:$0xf]
        %v3619 = vld [vmem:[%s3617 + $0x4] sm:$0xf]
        %v3620 = vld [vmem:[%s3617 + $0x8] sm:$0xf]
        %v3621 = vld [vmem:[%s3617 + $0xc] sm:$0xf]
        %v3626 = vunpack.c.l.b16 %v3618
        %v3627 = vunpack.c.l.b16 %v3619
        %v3628 = vunpack.c.l.b16 %v3620
        %v3629 = vunpack.c.l.b16 %v3621
        %v3630 = vpack.c.b16 %v3627, %v3626
        %v3631 = vpack.c.b16 %v3629, %v3628
        %v3635 = vsel %vm373, %v3601, 0
        %v3638 = vsel %vm373, %v3602, 0
        %v3641 = vsel %vm373, %v3603, 0
        %v3644 = vsel %vm373, %v3604, 0
        %v3647 = vsel %vm373, %v3605, 0
        %v3650 = vsel %vm373, %v3606, 0
        %v3653 = vsel %vm373, %v3607, 0
        %v3656 = vsel %vm373, %v3608, 0
        %v3659 = vsel %vm373, %v3609, 0
        %v3662 = vsel %vm373, %v3610, 0
        %v3665 = vsel %vm373, %v3611, 0
        %v3668 = vsel %vm373, %v3612, 0
        %v3671 = vsel %vm373, %v3613, 0
        %v3674 = vsel %vm373, %v3614, 0
        %v3677 = vsel %vm373, %v3615, 0
        %v3680 = vsel %vm373, %v3616, 0
        %3682 = vmatprep.subr.bf16.mxu0 0
        %3683 = vmatpush1.bf16.msra.mxu0 %v3630
        %3684 = vmatprep.subr.bf16.mxu0 0
        %3685 = vmatpush1.bf16.msra.mxu0 %v3631
        %3686 = vmatprep.subr.bf16.mxu0 0
        %3687 = vmatpush1.bf16.msra.mxu0 0
        %3688 = vmatprep.subr.bf16.mxu0 0
        %3689 = vmatpush1.bf16.msra.mxu0 0
        %3690 = vmatprep.subr.bf16.mxu0 0
        %3691 = vmatpush1.bf16.msra.mxu0 0
        %3692 = vmatprep.subr.bf16.mxu0 0
        %3693 = vmatpush1.bf16.msra.mxu0 0
        %3694 = vmatprep.subr.bf16.mxu0 0
        %3695 = vmatpush1.bf16.msra.mxu0 0
        %3696 = vmatprep.subr.bf16.mxu0 0
        %3697 = vmatpush1.bf16.msra.mxu0 0
        %3698 = vmatprep.subr.bf16.mxu0 0
        %3699 = vmatpush1.bf16.msra.mxu0 0
        %3700 = vmatprep.subr.bf16.mxu0 0
        %3701 = vmatpush1.bf16.msra.mxu0 0
        %3702 = vmatprep.subr.bf16.mxu0 0
        %3703 = vmatpush1.bf16.msra.mxu0 0
        %3704 = vmatprep.subr.bf16.mxu0 0
        %3705 = vmatpush1.bf16.msra.mxu0 0
        %3706 = vmatprep.subr.bf16.mxu0 0
        %3707 = vmatpush1.bf16.msra.mxu0 0
        %3708 = vmatprep.subr.bf16.mxu0 0
        %3709 = vmatpush1.bf16.msra.mxu0 0
        %3710 = vmatprep.subr.bf16.mxu0 0
        %3711 = vmatpush1.bf16.msra.mxu0 0
        %3712 = vmatprep.subr.bf16.mxu0 0
        %3713 = vmatpush1.bf16.msra.mxu0 0
        %3714 = vmatprep.mubr.bf16.mxu0 0
        %3715 = vmatmul.mubr.bf16.gmra.mrb[0].mxu0 %v3635
        %v3716 = vpop.f32.mrb[0].mxu0
        %v3717 = vadd.f32 0.0, %v3716
        %v3718 = vpop.f32.mrb[0].mxu0
        %v3719 = vpop.f32.mrb[0].mxu0
        %v3720 = vadd.f32 0.0, %v3719
        %v3721 = vpop.f32.mrb[0].mxu0
        %3722 = vmatprep.mubr.bf16.mxu0 0
        %3723 = vmatmul.mubr.bf16.gmra.mrb[0].mxu0 %v3638
        %v3724 = vpop.f32.mrb[0].mxu0
        %v3725 = vadd.f32 0.0, %v3724
        %v3726 = vpop.f32.mrb[0].mxu0
        %v3727 = vpop.f32.mrb[0].mxu0
        %v3728 = vadd.f32 0.0, %v3727
        %v3729 = vpop.f32.mrb[0].mxu0
        %3730 = vmatprep.mubr.bf16.mxu0 0
        %3731 = vmatmul.mubr.bf16.gmra.mrb[0].mxu0 %v3641
        %v3732 = vpop.f32.mrb[0].mxu0
        %v3733 = vadd.f32 0.0, %v3732
        %v3734 = vpop.f32.mrb[0].mxu0
        %v3735 = vpop.f32.mrb[0].mxu0
        %v3736 = vadd.f32 0.0, %v3735
        %v3737 = vpop.f32.mrb[0].mxu0
        %3738 = vmatprep.mubr.bf16.mxu0 0
        %3739 = vmatmul.mubr.bf16.gmra.mrb[0].mxu0 %v3644
        %v3740 = vpop.f32.mrb[0].mxu0
        %v3741 = vadd.f32 0.0, %v3740
        %v3742 = vpop.f32.mrb[0].mxu0
        %v3743 = vpop.f32.mrb[0].mxu0
        %v3744 = vadd.f32 0.0, %v3743
        %v3745 = vpop.f32.mrb[0].mxu0
        %3746 = vmatprep.mubr.bf16.mxu0 0
        %3747 = vmatmul.mubr.bf16.gmra.mrb[0].mxu0 %v3647
        %v3748 = vpop.f32.mrb[0].mxu0
        %v3749 = vadd.f32 0.0, %v3748
        %v3750 = vpop.f32.mrb[0].mxu0
        %v3751 = vpop.f32.mrb[0].mxu0
        %v3752 = vadd.f32 0.0, %v3751
        %v3753 = vpop.f32.mrb[0].mxu0
        %3754 = vmatprep.mubr.bf16.mxu0 0
        %3755 = vmatmul.mubr.bf16.gmra.mrb[0].mxu0 %v3650
        %v3756 = vpop.f32.mrb[0].mxu0
        %v3757 = vadd.f32 0.0, %v3756
        %v3758 = vpop.f32.mrb[0].mxu0
        %v3759 = vpop.f32.mrb[0].mxu0
        %v3760 = vadd.f32 0.0, %v3759
        %v3761 = vpop.f32.mrb[0].mxu0
        %3762 = vmatprep.mubr.bf16.mxu0 0
        %3763 = vmatmul.mubr.bf16.gmra.mrb[0].mxu0 %v3653
        %v3764 = vpop.f32.mrb[0].mxu0
        %v3765 = vadd.f32 0.0, %v3764
        %v3766 = vpop.f32.mrb[0].mxu0
        %v3767 = vpop.f32.mrb[0].mxu0
        %v3768 = vadd.f32 0.0, %v3767
        %v3769 = vpop.f32.mrb[0].mxu0
        %3770 = vmatprep.mubr.bf16.mxu0 0
        %3771 = vmatmul.mubr.bf16.gmra.mrb[0].mxu0 %v3656
        %v3772 = vpop.f32.mrb[0].mxu0
        %v3773 = vadd.f32 0.0, %v3772
        %v3774 = vpop.f32.mrb[0].mxu0
        %v3775 = vpop.f32.mrb[0].mxu0
        %v3776 = vadd.f32 0.0, %v3775
        %v3777 = vpop.f32.mrb[0].mxu0
        %3778 = vmatprep.mubr.bf16.mxu0 0
        %3779 = vmatmul.mubr.bf16.gmra.mrb[0].mxu0 %v3659
        %v3780 = vpop.f32.mrb[0].mxu0
        %v3781 = vadd.f32 0.0, %v3780
        %v3782 = vpop.f32.mrb[0].mxu0
        %v3783 = vpop.f32.mrb[0].mxu0
        %v3784 = vadd.f32 0.0, %v3783
        %v3785 = vpop.f32.mrb[0].mxu0
        %3786 = vmatprep.mubr.bf16.mxu0 0
        %3787 = vmatmul.mubr.bf16.gmra.mrb[0].mxu0 %v3662
        %v3788 = vpop.f32.mrb[0].mxu0
        %v3789 = vadd.f32 0.0, %v3788
        %v3790 = vpop.f32.mrb[0].mxu0
        %v3791 = vpop.f32.mrb[0].mxu0
        %v3792 = vadd.f32 0.0, %v3791
        %v3793 = vpop.f32.mrb[0].mxu0
        %3794 = vmatprep.mubr.bf16.mxu0 0
        %3795 = vmatmul.mubr.bf16.gmra.mrb[0].mxu0 %v3665
        %v3796 = vpop.f32.mrb[0].mxu0
        %v3797 = vadd.f32 0.0, %v3796
        %v3798 = vpop.f32.mrb[0].mxu0
        %v3799 = vpop.f32.mrb[0].mxu0
        %v3800 = vadd.f32 0.0, %v3799
        %v3801 = vpop.f32.mrb[0].mxu0
        %3802 = vmatprep.mubr.bf16.mxu0 0
        %3803 = vmatmul.mubr.bf16.gmra.mrb[0].mxu0 %v3668
        %v3804 = vpop.f32.mrb[0].mxu0
        %v3805 = vadd.f32 0.0, %v3804
        %v3806 = vpop.f32.mrb[0].mxu0
        %v3807 = vpop.f32.mrb[0].mxu0
        %v3808 = vadd.f32 0.0, %v3807
        %v3809 = vpop.f32.mrb[0].mxu0
        %3810 = vmatprep.mubr.bf16.mxu0 0
        %3811 = vmatmul.mubr.bf16.gmra.mrb[0].mxu0 %v3671
        %v3812 = vpop.f32.mrb[0].mxu0
        %v3813 = vadd.f32 0.0, %v3812
        %v3814 = vpop.f32.mrb[0].mxu0
        %v3815 = vpop.f32.mrb[0].mxu0
        %v3816 = vadd.f32 0.0, %v3815
        %v3817 = vpop.f32.mrb[0].mxu0
        %3818 = vmatprep.mubr.bf16.mxu0 0
        %3819 = vmatmul.mubr.bf16.gmra.mrb[0].mxu0 %v3674
        %v3820 = vpop.f32.mrb[0].mxu0
        %v3821 = vadd.f32 0.0, %v3820
        %v3822 = vpop.f32.mrb[0].mxu0
        %v3823 = vpop.f32.mrb[0].mxu0
        %v3824 = vadd.f32 0.0, %v3823
        %v3825 = vpop.f32.mrb[0].mxu0
        %3826 = vmatprep.mubr.bf16.mxu0 0
        %3827 = vmatmul.mubr.bf16.gmra.mrb[0].mxu0 %v3677
        %v3828 = vpop.f32.mrb[0].mxu0
        %v3829 = vadd.f32 0.0, %v3828
        %v3830 = vpop.f32.mrb[0].mxu0
        %v3831 = vpop.f32.mrb[0].mxu0
        %v3832 = vadd.f32 0.0, %v3831
        %v3833 = vpop.f32.mrb[0].mxu0
        %3834 = vmatprep.mubr.bf16.mxu0 0
        %3835 = vmatmul.mubr.bf16.gmra.mrb[0].mxu0 %v3680
        %v3836 = vpop.f32.mrb[0].mxu0
        %v3837 = vadd.f32 0.0, %v3836
        %v3838 = vpop.f32.mrb[0].mxu0
        %v3839 = vpop.f32.mrb[0].mxu0
        %v3840 = vadd.f32 0.0, %v3839
        %v3841 = vpop.f32.mrb[0].mxu0
        %3842 = vdwg.mxu0
        %v3843 = vld [vmem:[#allocation3] sm:$0xff]
        %v3844 = vld [vmem:[#allocation3 + $0x8] sm:$0xff]
        %v3845 = vld [vmem:[#allocation3 + $0x10] sm:$0xff]
        %v3846 = vld [vmem:[#allocation3 + $0x18] sm:$0xff]
        %v3847 = vld [vmem:[#allocation3 + $0x20] sm:$0xff]
        %v3848 = vld [vmem:[#allocation3 + $0x28] sm:$0xff]
        %v3849 = vld [vmem:[#allocation3 + $0x30] sm:$0xff]
        %v3850 = vld [vmem:[#allocation3 + $0x38] sm:$0xff]
        %v3851 = vld [vmem:[#allocation3 + $0x40] sm:$0xff]
        %v3852 = vld [vmem:[#allocation3 + $0x48] sm:$0xff]
        %v3853 = vld [vmem:[#allocation3 + $0x50] sm:$0xff]
        %v3854 = vld [vmem:[#allocation3 + $0x58] sm:$0xff]
        %v3855 = vld [vmem:[#allocation3 + $0x60] sm:$0xff]
        %v3856 = vld [vmem:[#allocation3 + $0x68] sm:$0xff]
        %v3857 = vld [vmem:[#allocation3 + $0x70] sm:$0xff]
        %v3858 = vld [vmem:[#allocation3 + $0x78] sm:$0xff]
        %v3859 = vld [vmem:[#allocation3 + $0x80] sm:$0xff]
        %v3860 = vld [vmem:[#allocation3 + $0x88] sm:$0xff]
        %v3861 = vld [vmem:[#allocation3 + $0x90] sm:$0xff]
        %v3862 = vld [vmem:[#allocation3 + $0x98] sm:$0xff]
        %v3863 = vld [vmem:[#allocation3 + $0xa0] sm:$0xff]
        %v3864 = vld [vmem:[#allocation3 + $0xa8] sm:$0xff]
        %v3865 = vld [vmem:[#allocation3 + $0xb0] sm:$0xff]
        %v3866 = vld [vmem:[#allocation3 + $0xb8] sm:$0xff]
        %v3867 = vld [vmem:[#allocation3 + $0xc0] sm:$0xff]
        %v3868 = vld [vmem:[#allocation3 + $0xc8] sm:$0xff]
        %v3869 = vld [vmem:[#allocation3 + $0xd0] sm:$0xff]
        %v3870 = vld [vmem:[#allocation3 + $0xd8] sm:$0xff]
        %v3871 = vld [vmem:[#allocation3 + $0xe0] sm:$0xff]
        %v3872 = vld [vmem:[#allocation3 + $0xe8] sm:$0xff]
        %v3873 = vld [vmem:[#allocation3 + $0xf0] sm:$0xff]
        %v3874 = vld [vmem:[#allocation3 + $0xf8] sm:$0xff]
        %v3875 = vadd.f32 %v3843, %v3717
        %v3876 = vadd.f32 %v3844, %v3720
        %v3877 = vadd.f32 %v3845, %v3725
        %v3878 = vadd.f32 %v3846, %v3728
        %v3879 = vadd.f32 %v3847, %v3733
        %v3880 = vadd.f32 %v3848, %v3736
        %v3881 = vadd.f32 %v3849, %v3741
        %v3882 = vadd.f32 %v3850, %v3744
        %v3883 = vadd.f32 %v3851, %v3749
        %v3884 = vadd.f32 %v3852, %v3752
        %v3885 = vadd.f32 %v3853, %v3757
        %v3886 = vadd.f32 %v3854, %v3760
        %v3887 = vadd.f32 %v3855, %v3765
        %v3888 = vadd.f32 %v3856, %v3768
        %v3889 = vadd.f32 %v3857, %v3773
        %v3890 = vadd.f32 %v3858, %v3776
        %v3891 = vadd.f32 %v3859, %v3781
        %v3892 = vadd.f32 %v3860, %v3784
        %v3893 = vadd.f32 %v3861, %v3789
        %v3894 = vadd.f32 %v3862, %v3792
        %v3895 = vadd.f32 %v3863, %v3797
        %v3896 = vadd.f32 %v3864, %v3800
        %v3897 = vadd.f32 %v3865, %v3805
        %v3898 = vadd.f32 %v3866, %v3808
        %v3899 = vadd.f32 %v3867, %v3813
        %v3900 = vadd.f32 %v3868, %v3816
        %v3901 = vadd.f32 %v3869, %v3821
        %v3902 = vadd.f32 %v3870, %v3824
        %v3903 = vadd.f32 %v3871, %v3829
        %v3904 = vadd.f32 %v3872, %v3832
        %v3905 = vadd.f32 %v3873, %v3837
        %v3906 = vadd.f32 %v3874, %v3840
        %3907 = vst [vmem:[#allocation3] sm:$0xff] %v3875
        %3908 = vst [vmem:[#allocation3 + $0x8] sm:$0xff] %v3876
        %3909 = vst [vmem:[#allocation3 + $0x10] sm:$0xff] %v3877
        %3910 = vst [vmem:[#allocation3 + $0x18] sm:$0xff] %v3878
        %3911 = vst [vmem:[#allocation3 + $0x20] sm:$0xff] %v3879
        %3912 = vst [vmem:[#allocation3 + $0x28] sm:$0xff] %v3880
        %3913 = vst [vmem:[#allocation3 + $0x30] sm:$0xff] %v3881
        %3914 = vst [vmem:[#allocation3 + $0x38] sm:$0xff] %v3882
        %3915 = vst [vmem:[#allocation3 + $0x40] sm:$0xff] %v3883
        %3916 = vst [vmem:[#allocation3 + $0x48] sm:$0xff] %v3884
        %3917 = vst [vmem:[#allocation3 + $0x50] sm:$0xff] %v3885
        %3918 = vst [vmem:[#allocation3 + $0x58] sm:$0xff] %v3886
        %3919 = vst [vmem:[#allocation3 + $0x60] sm:$0xff] %v3887
        %3920 = vst [vmem:[#allocation3 + $0x68] sm:$0xff] %v3888
        %3921 = vst [vmem:[#allocation3 + $0x70] sm:$0xff] %v3889
        %3922 = vst [vmem:[#allocation3 + $0x78] sm:$0xff] %v3890
        %3923 = vst [vmem:[#allocation3 + $0x80] sm:$0xff] %v3891
        %3924 = vst [vmem:[#allocation3 + $0x88] sm:$0xff] %v3892
        %3925 = vst [vmem:[#allocation3 + $0x90] sm:$0xff] %v3893
        %3926 = vst [vmem:[#allocation3 + $0x98] sm:$0xff] %v3894
        %3927 = vst [vmem:[#allocation3 + $0xa0] sm:$0xff] %v3895
        %3928 = vst [vmem:[#allocation3 + $0xa8] sm:$0xff] %v3896
        %3929 = vst [vmem:[#allocation3 + $0xb0] sm:$0xff] %v3897
        %3930 = vst [vmem:[#allocation3 + $0xb8] sm:$0xff] %v3898
        %3931 = vst [vmem:[#allocation3 + $0xc0] sm:$0xff] %v3899
        %3932 = vst [vmem:[#allocation3 + $0xc8] sm:$0xff] %v3900
        %3933 = vst [vmem:[#allocation3 + $0xd0] sm:$0xff] %v3901
        %3934 = vst [vmem:[#allocation3 + $0xd8] sm:$0xff] %v3902
        %3935 = vst [vmem:[#allocation3 + $0xe0] sm:$0xff] %v3903
        %3936 = vst [vmem:[#allocation3 + $0xe8] sm:$0xff] %v3904
        %3937 = vst [vmem:[#allocation3 + $0xf0] sm:$0xff] %v3905
        %3938 = vst [vmem:[#allocation3 + $0xf8] sm:$0xff] %v3906
        %v3939 = vld [vmem:[%s1281 + $0x10] sm:$0xff]
        %v3940 = vld [vmem:[%s1281 + $0x18] sm:$0xff]
        %v3941 = vld [vmem:[%s1281 + $0x20] sm:$0xff]
        %v3942 = vld [vmem:[%s1281 + $0x28] sm:$0xff]
        %v3943 = vld [vmem:[%s1281 + $0x30] sm:$0xff]
        %v3944 = vld [vmem:[%s1281 + $0x38] sm:$0xff]
        %v3945 = vld [vmem:[%s1281 + $0x40] sm:$0xff]
        %v3946 = vld [vmem:[%s1281 + $0x48] sm:$0xff]
        %v3947 = vld [vmem:[%s1281 + $0x50] sm:$0xff]
        %v3948 = vld [vmem:[%s1281 + $0x58] sm:$0xff]
        %v3949 = vld [vmem:[%s1281 + $0x60] sm:$0xff]
        %v3950 = vld [vmem:[%s1281 + $0x68] sm:$0xff]
        %v3951 = vld [vmem:[%s1281 + $0x70] sm:$0xff]
        %v3952 = vld [vmem:[%s1281 + $0x78] sm:$0xff]
        %v3953 = vld [vmem:[%s1281 + $0x80] sm:$0xff]
        %v3954 = vld [vmem:[%s1281 + $0x88] sm:$0xff]
        %s3955 = scalar_lea.vmem %s219, 128
        %v3956 = vld [vmem:[%s3955] sm:$0xf]
        %v3957 = vld [vmem:[%s3955 + $0x4] sm:$0xf]
        %v3958 = vld [vmem:[%s3955 + $0x8] sm:$0xf]
        %v3959 = vld [vmem:[%s3955 + $0xc] sm:$0xf]
        %v3964 = vunpack.c.l.b16 %v3956
        %v3965 = vunpack.c.l.b16 %v3957
        %v3966 = vunpack.c.l.b16 %v3958
        %v3967 = vunpack.c.l.b16 %v3959
        %v3968 = vpack.c.b16 %v3965, %v3964
        %v3969 = vpack.c.b16 %v3967, %v3966
        %v3973 = vsel %vm373, %v3939, 0
        %v3976 = vsel %vm373, %v3940, 0
        %v3979 = vsel %vm373, %v3941, 0
        %v3982 = vsel %vm373, %v3942, 0
        %v3985 = vsel %vm373, %v3943, 0
        %v3988 = vsel %vm373, %v3944, 0
        %v3991 = vsel %vm373, %v3945, 0
        %v3994 = vsel %vm373, %v3946, 0
        %v3997 = vsel %vm373, %v3947, 0
        %v4000 = vsel %vm373, %v3948, 0
        %v4003 = vsel %vm373, %v3949, 0
        %v4006 = vsel %vm373, %v3950, 0
        %v4009 = vsel %vm373, %v3951, 0
        %v4012 = vsel %vm373, %v3952, 0
        %v4015 = vsel %vm373, %v3953, 0
        %v4018 = vsel %vm373, %v3954, 0
        %4020 = vmatprep.subr.bf16.mxu0 0
        %4021 = vmatpush1.bf16.msra.mxu0 %v3968
        %4022 = vmatprep.subr.bf16.mxu0 0
        %4023 = vmatpush1.bf16.msra.mxu0 %v3969
        %4024 = vmatprep.subr.bf16.mxu0 0
        %4025 = vmatpush1.bf16.msra.mxu0 0
        %4026 = vmatprep.subr.bf16.mxu0 0
        %4027 = vmatpush1.bf16.msra.mxu0 0
        %4028 = vmatprep.subr.bf16.mxu0 0
        %4029 = vmatpush1.bf16.msra.mxu0 0
        %4030 = vmatprep.subr.bf16.mxu0 0
        %4031 = vmatpush1.bf16.msra.mxu0 0
        %4032 = vmatprep.subr.bf16.mxu0 0
        %4033 = vmatpush1.bf16.msra.mxu0 0
        %4034 = vmatprep.subr.bf16.mxu0 0
        %4035 = vmatpush1.bf16.msra.mxu0 0
        %4036 = vmatprep.subr.bf16.mxu0 0
        %4037 = vmatpush1.bf16.msra.mxu0 0
        %4038 = vmatprep.subr.bf16.mxu0 0
        %4039 = vmatpush1.bf16.msra.mxu0 0
        %4040 = vmatprep.subr.bf16.mxu0 0
        %4041 = vmatpush1.bf16.msra.mxu0 0
        %4042 = vmatprep.subr.bf16.mxu0 0
        %4043 = vmatpush1.bf16.msra.mxu0 0
        %4044 = vmatprep.subr.bf16.mxu0 0
        %4045 = vmatpush1.bf16.msra.mxu0 0
        %4046 = vmatprep.subr.bf16.mxu0 0
        %4047 = vmatpush1.bf16.msra.mxu0 0
        %4048 = vmatprep.subr.bf16.mxu0 0
        %4049 = vmatpush1.bf16.msra.mxu0 0
        %4050 = vmatprep.subr.bf16.mxu0 0
        %4051 = vmatpush1.bf16.msra.mxu0 0
        %4052 = vmatprep.mubr.bf16.mxu0 0
        %4053 = vmatmul.mubr.bf16.gmra.mrb[0].mxu0 %v3973
        %v4054 = vpop.f32.mrb[0].mxu0
        %v4055 = vadd.f32 0.0, %v4054
        %v4056 = vpop.f32.mrb[0].mxu0
        %v4057 = vpop.f32.mrb[0].mxu0
        %v4058 = vadd.f32 0.0, %v4057
        %v4059 = vpop.f32.mrb[0].mxu0
        %4060 = vmatprep.mubr.bf16.mxu0 0
        %4061 = vmatmul.mubr.bf16.gmra.mrb[0].mxu0 %v3976
        %v4062 = vpop.f32.mrb[0].mxu0
        %v4063 = vadd.f32 0.0, %v4062
        %v4064 = vpop.f32.mrb[0].mxu0
        %v4065 = vpop.f32.mrb[0].mxu0
        %v4066 = vadd.f32 0.0, %v4065
        %v4067 = vpop.f32.mrb[0].mxu0
        %4068 = vmatprep.mubr.bf16.mxu0 0
        %4069 = vmatmul.mubr.bf16.gmra.mrb[0].mxu0 %v3979
        %v4070 = vpop.f32.mrb[0].mxu0
        %v4071 = vadd.f32 0.0, %v4070
        %v4072 = vpop.f32.mrb[0].mxu0
        %v4073 = vpop.f32.mrb[0].mxu0
        %v4074 = vadd.f32 0.0, %v4073
        %v4075 = vpop.f32.mrb[0].mxu0
        %4076 = vmatprep.mubr.bf16.mxu0 0
        %4077 = vmatmul.mubr.bf16.gmra.mrb[0].mxu0 %v3982
        %v4078 = vpop.f32.mrb[0].mxu0
        %v4079 = vadd.f32 0.0, %v4078
        %v4080 = vpop.f32.mrb[0].mxu0
        %v4081 = vpop.f32.mrb[0].mxu0
        %v4082 = vadd.f32 0.0, %v4081
        %v4083 = vpop.f32.mrb[0].mxu0
        %4084 = vmatprep.mubr.bf16.mxu0 0
        %4085 = vmatmul.mubr.bf16.gmra.mrb[0].mxu0 %v3985
        %v4086 = vpop.f32.mrb[0].mxu0
        %v4087 = vadd.f32 0.0, %v4086
        %v4088 = vpop.f32.mrb[0].mxu0
        %v4089 = vpop.f32.mrb[0].mxu0
        %v4090 = vadd.f32 0.0, %v4089
        %v4091 = vpop.f32.mrb[0].mxu0
        %4092 = vmatprep.mubr.bf16.mxu0 0
        %4093 = vmatmul.mubr.bf16.gmra.mrb[0].mxu0 %v3988
        %v4094 = vpop.f32.mrb[0].mxu0
        %v4095 = vadd.f32 0.0, %v4094
        %v4096 = vpop.f32.mrb[0].mxu0
        %v4097 = vpop.f32.mrb[0].mxu0
        %v4098 = vadd.f32 0.0, %v4097
        %v4099 = vpop.f32.mrb[0].mxu0
        %4100 = vmatprep.mubr.bf16.mxu0 0
        %4101 = vmatmul.mubr.bf16.gmra.mrb[0].mxu0 %v3991
        %v4102 = vpop.f32.mrb[0].mxu0
        %v4103 = vadd.f32 0.0, %v4102
        %v4104 = vpop.f32.mrb[0].mxu0
        %v4105 = vpop.f32.mrb[0].mxu0
        %v4106 = vadd.f32 0.0, %v4105
        %v4107 = vpop.f32.mrb[0].mxu0
        %4108 = vmatprep.mubr.bf16.mxu0 0
        %4109 = vmatmul.mubr.bf16.gmra.mrb[0].mxu0 %v3994
        %v4110 = vpop.f32.mrb[0].mxu0
        %v4111 = vadd.f32 0.0, %v4110
        %v4112 = vpop.f32.mrb[0].mxu0
        %v4113 = vpop.f32.mrb[0].mxu0
        %v4114 = vadd.f32 0.0, %v4113
        %v4115 = vpop.f32.mrb[0].mxu0
        %4116 = vmatprep.mubr.bf16.mxu0 0
        %4117 = vmatmul.mubr.bf16.gmra.mrb[0].mxu0 %v3997
        %v4118 = vpop.f32.mrb[0].mxu0
        %v4119 = vadd.f32 0.0, %v4118
        %v4120 = vpop.f32.mrb[0].mxu0
        %v4121 = vpop.f32.mrb[0].mxu0
        %v4122 = vadd.f32 0.0, %v4121
        %v4123 = vpop.f32.mrb[0].mxu0
        %4124 = vmatprep.mubr.bf16.mxu0 0
        %4125 = vmatmul.mubr.bf16.gmra.mrb[0].mxu0 %v4000
        %v4126 = vpop.f32.mrb[0].mxu0
        %v4127 = vadd.f32 0.0, %v4126
        %v4128 = vpop.f32.mrb[0].mxu0
        %v4129 = vpop.f32.mrb[0].mxu0
        %v4130 = vadd.f32 0.0, %v4129
        %v4131 = vpop.f32.mrb[0].mxu0
        %4132 = vmatprep.mubr.bf16.mxu0 0
        %4133 = vmatmul.mubr.bf16.gmra.mrb[0].mxu0 %v4003
        %v4134 = vpop.f32.mrb[0].mxu0
        %v4135 = vadd.f32 0.0, %v4134
        %v4136 = vpop.f32.mrb[0].mxu0
        %v4137 = vpop.f32.mrb[0].mxu0
        %v4138 = vadd.f32 0.0, %v4137
        %v4139 = vpop.f32.mrb[0].mxu0
        %4140 = vmatprep.mubr.bf16.mxu0 0
        %4141 = vmatmul.mubr.bf16.gmra.mrb[0].mxu0 %v4006
        %v4142 = vpop.f32.mrb[0].mxu0
        %v4143 = vadd.f32 0.0, %v4142
        %v4144 = vpop.f32.mrb[0].mxu0
        %v4145 = vpop.f32.mrb[0].mxu0
        %v4146 = vadd.f32 0.0, %v4145
        %v4147 = vpop.f32.mrb[0].mxu0
        %4148 = vmatprep.mubr.bf16.mxu0 0
        %4149 = vmatmul.mubr.bf16.gmra.mrb[0].mxu0 %v4009
        %v4150 = vpop.f32.mrb[0].mxu0
        %v4151 = vadd.f32 0.0, %v4150
        %v4152 = vpop.f32.mrb[0].mxu0
        %v4153 = vpop.f32.mrb[0].mxu0
        %v4154 = vadd.f32 0.0, %v4153
        %v4155 = vpop.f32.mrb[0].mxu0
        %4156 = vmatprep.mubr.bf16.mxu0 0
        %4157 = vmatmul.mubr.bf16.gmra.mrb[0].mxu0 %v4012
        %v4158 = vpop.f32.mrb[0].mxu0
        %v4159 = vadd.f32 0.0, %v4158
        %v4160 = vpop.f32.mrb[0].mxu0
        %v4161 = vpop.f32.mrb[0].mxu0
        %v4162 = vadd.f32 0.0, %v4161
        %v4163 = vpop.f32.mrb[0].mxu0
        %4164 = vmatprep.mubr.bf16.mxu0 0
        %4165 = vmatmul.mubr.bf16.gmra.mrb[0].mxu0 %v4015
        %v4166 = vpop.f32.mrb[0].mxu0
        %v4167 = vadd.f32 0.0, %v4166
        %v4168 = vpop.f32.mrb[0].mxu0
        %v4169 = vpop.f32.mrb[0].mxu0
        %v4170 = vadd.f32 0.0, %v4169
        %v4171 = vpop.f32.mrb[0].mxu0
        %4172 = vmatprep.mubr.bf16.mxu0 0
        %4173 = vmatmul.mubr.bf16.gmra.mrb[0].mxu0 %v4018
        %v4174 = vpop.f32.mrb[0].mxu0
        %v4175 = vadd.f32 0.0, %v4174
        %v4176 = vpop.f32.mrb[0].mxu0
        %v4177 = vpop.f32.mrb[0].mxu0
        %v4178 = vadd.f32 0.0, %v4177
        %v4179 = vpop.f32.mrb[0].mxu0
        %4180 = vdwg.mxu0
        %v4181 = vld [vmem:[#allocation3] sm:$0xff]
        %v4182 = vld [vmem:[#allocation3 + $0x8] sm:$0xff]
        %v4183 = vld [vmem:[#allocation3 + $0x10] sm:$0xff]
        %v4184 = vld [vmem:[#allocation3 + $0x18] sm:$0xff]
        %v4185 = vld [vmem:[#allocation3 + $0x20] sm:$0xff]
        %v4186 = vld [vmem:[#allocation3 + $0x28] sm:$0xff]
        %v4187 = vld [vmem:[#allocation3 + $0x30] sm:$0xff]
        %v4188 = vld [vmem:[#allocation3 + $0x38] sm:$0xff]
        %v4189 = vld [vmem:[#allocation3 + $0x40] sm:$0xff]
        %v4190 = vld [vmem:[#allocation3 + $0x48] sm:$0xff]
        %v4191 = vld [vmem:[#allocation3 + $0x50] sm:$0xff]
        %v4192 = vld [vmem:[#allocation3 + $0x58] sm:$0xff]
        %v4193 = vld [vmem:[#allocation3 + $0x60] sm:$0xff]
        %v4194 = vld [vmem:[#allocation3 + $0x68] sm:$0xff]
        %v4195 = vld [vmem:[#allocation3 + $0x70] sm:$0xff]
        %v4196 = vld [vmem:[#allocation3 + $0x78] sm:$0xff]
        %v4197 = vld [vmem:[#allocation3 + $0x80] sm:$0xff]
        %v4198 = vld [vmem:[#allocation3 + $0x88] sm:$0xff]
        %v4199 = vld [vmem:[#allocation3 + $0x90] sm:$0xff]
        %v4200 = vld [vmem:[#allocation3 + $0x98] sm:$0xff]
        %v4201 = vld [vmem:[#allocation3 + $0xa0] sm:$0xff]
        %v4202 = vld [vmem:[#allocation3 + $0xa8] sm:$0xff]
        %v4203 = vld [vmem:[#allocation3 + $0xb0] sm:$0xff]
        %v4204 = vld [vmem:[#allocation3 + $0xb8] sm:$0xff]
        %v4205 = vld [vmem:[#allocation3 + $0xc0] sm:$0xff]
        %v4206 = vld [vmem:[#allocation3 + $0xc8] sm:$0xff]
        %v4207 = vld [vmem:[#allocation3 + $0xd0] sm:$0xff]
        %v4208 = vld [vmem:[#allocation3 + $0xd8] sm:$0xff]
        %v4209 = vld [vmem:[#allocation3 + $0xe0] sm:$0xff]
        %v4210 = vld [vmem:[#allocation3 + $0xe8] sm:$0xff]
        %v4211 = vld [vmem:[#allocation3 + $0xf0] sm:$0xff]
        %v4212 = vld [vmem:[#allocation3 + $0xf8] sm:$0xff]
        %v4213 = vadd.f32 %v4181, %v4055
        %v4214 = vadd.f32 %v4182, %v4058
        %v4215 = vadd.f32 %v4183, %v4063
        %v4216 = vadd.f32 %v4184, %v4066
        %v4217 = vadd.f32 %v4185, %v4071
        %v4218 = vadd.f32 %v4186, %v4074
        %v4219 = vadd.f32 %v4187, %v4079
        %v4220 = vadd.f32 %v4188, %v4082
        %v4221 = vadd.f32 %v4189, %v4087
        %v4222 = vadd.f32 %v4190, %v4090
        %v4223 = vadd.f32 %v4191, %v4095
        %v4224 = vadd.f32 %v4192, %v4098
        %v4225 = vadd.f32 %v4193, %v4103
        %v4226 = vadd.f32 %v4194, %v4106
        %v4227 = vadd.f32 %v4195, %v4111
        %v4228 = vadd.f32 %v4196, %v4114
        %v4229 = vadd.f32 %v4197, %v4119
        %v4230 = vadd.f32 %v4198, %v4122
        %v4231 = vadd.f32 %v4199, %v4127
        %v4232 = vadd.f32 %v4200, %v4130
        %v4233 = vadd.f32 %v4201, %v4135
        %v4234 = vadd.f32 %v4202, %v4138
        %v4235 = vadd.f32 %v4203, %v4143
        %v4236 = vadd.f32 %v4204, %v4146
        %v4237 = vadd.f32 %v4205, %v4151
        %v4238 = vadd.f32 %v4206, %v4154
        %v4239 = vadd.f32 %v4207, %v4159
        %v4240 = vadd.f32 %v4208, %v4162
        %v4241 = vadd.f32 %v4209, %v4167
        %v4242 = vadd.f32 %v4210, %v4170
        %v4243 = vadd.f32 %v4211, %v4175
        %v4244 = vadd.f32 %v4212, %v4178
        %4245 = vst [vmem:[#allocation3] sm:$0xff] %v4213
        %4246 = vst [vmem:[#allocation3 + $0x8] sm:$0xff] %v4214
        %4247 = vst [vmem:[#allocation3 + $0x10] sm:$0xff] %v4215
        %4248 = vst [vmem:[#allocation3 + $0x18] sm:$0xff] %v4216
        %4249 = vst [vmem:[#allocation3 + $0x20] sm:$0xff] %v4217
        %4250 = vst [vmem:[#allocation3 + $0x28] sm:$0xff] %v4218
        %4251 = vst [vmem:[#allocation3 + $0x30] sm:$0xff] %v4219
        %4252 = vst [vmem:[#allocation3 + $0x38] sm:$0xff] %v4220
        %4253 = vst [vmem:[#allocation3 + $0x40] sm:$0xff] %v4221
        %4254 = vst [vmem:[#allocation3 + $0x48] sm:$0xff] %v4222
        %4255 = vst [vmem:[#allocation3 + $0x50] sm:$0xff] %v4223
        %4256 = vst [vmem:[#allocation3 + $0x58] sm:$0xff] %v4224
        %4257 = vst [vmem:[#allocation3 + $0x60] sm:$0xff] %v4225
        %4258 = vst [vmem:[#allocation3 + $0x68] sm:$0xff] %v4226
        %4259 = vst [vmem:[#allocation3 + $0x70] sm:$0xff] %v4227
        %4260 = vst [vmem:[#allocation3 + $0x78] sm:$0xff] %v4228
        %4261 = vst [vmem:[#allocation3 + $0x80] sm:$0xff] %v4229
        %4262 = vst [vmem:[#allocation3 + $0x88] sm:$0xff] %v4230
        %4263 = vst [vmem:[#allocation3 + $0x90] sm:$0xff] %v4231
        %4264 = vst [vmem:[#allocation3 + $0x98] sm:$0xff] %v4232
        %4265 = vst [vmem:[#allocation3 + $0xa0] sm:$0xff] %v4233
        %4266 = vst [vmem:[#allocation3 + $0xa8] sm:$0xff] %v4234
        %4267 = vst [vmem:[#allocation3 + $0xb0] sm:$0xff] %v4235
        %4268 = vst [vmem:[#allocation3 + $0xb8] sm:$0xff] %v4236
        %4269 = vst [vmem:[#allocation3 + $0xc0] sm:$0xff] %v4237
        %4270 = vst [vmem:[#allocation3 + $0xc8] sm:$0xff] %v4238
        %4271 = vst [vmem:[#allocation3 + $0xd0] sm:$0xff] %v4239
        %4272 = vst [vmem:[#allocation3 + $0xd8] sm:$0xff] %v4240
        %4273 = vst [vmem:[#allocation3 + $0xe0] sm:$0xff] %v4241
        %4274 = vst [vmem:[#allocation3 + $0xe8] sm:$0xff] %v4242
        %4275 = vst [vmem:[#allocation3 + $0xf0] sm:$0xff] %v4243
        %4276 = vst [vmem:[#allocation3 + $0xf8] sm:$0xff] %v4244
        %v4277 = vld [vmem:[#allocation3] sm:$0xff]
        %v4278 = vld [vmem:[#allocation3 + $0x8] sm:$0xff]
        %v4279 = vld [vmem:[#allocation3 + $0x10] sm:$0xff]
        %v4280 = vld [vmem:[#allocation3 + $0x18] sm:$0xff]
        %v4281 = vld [vmem:[#allocation3 + $0x20] sm:$0xff]
        %v4282 = vld [vmem:[#allocation3 + $0x28] sm:$0xff]
        %v4283 = vld [vmem:[#allocation3 + $0x30] sm:$0xff]
        %v4284 = vld [vmem:[#allocation3 + $0x38] sm:$0xff]
        %v4285 = vld [vmem:[#allocation3 + $0x40] sm:$0xff]
        %v4286 = vld [vmem:[#allocation3 + $0x48] sm:$0xff]
        %v4287 = vld [vmem:[#allocation3 + $0x50] sm:$0xff]
        %v4288 = vld [vmem:[#allocation3 + $0x58] sm:$0xff]
        %v4289 = vld [vmem:[#allocation3 + $0x60] sm:$0xff]
        %v4290 = vld [vmem:[#allocation3 + $0x68] sm:$0xff]
        %v4291 = vld [vmem:[#allocation3 + $0x70] sm:$0xff]
        %v4292 = vld [vmem:[#allocation3 + $0x78] sm:$0xff]
        %v4293 = vld [vmem:[#allocation3 + $0x80] sm:$0xff]
        %v4294 = vld [vmem:[#allocation3 + $0x88] sm:$0xff]
        %v4295 = vld [vmem:[#allocation3 + $0x90] sm:$0xff]
        %v4296 = vld [vmem:[#allocation3 + $0x98] sm:$0xff]
        %v4297 = vld [vmem:[#allocation3 + $0xa0] sm:$0xff]
        %v4298 = vld [vmem:[#allocation3 + $0xa8] sm:$0xff]
        %v4299 = vld [vmem:[#allocation3 + $0xb0] sm:$0xff]
        %v4300 = vld [vmem:[#allocation3 + $0xb8] sm:$0xff]
        %v4301 = vld [vmem:[#allocation3 + $0xc0] sm:$0xff]
        %v4302 = vld [vmem:[#allocation3 + $0xc8] sm:$0xff]
        %v4303 = vld [vmem:[#allocation3 + $0xd0] sm:$0xff]
        %v4304 = vld [vmem:[#allocation3 + $0xd8] sm:$0xff]
        %v4305 = vld [vmem:[#allocation3 + $0xe0] sm:$0xff]
        %v4306 = vld [vmem:[#allocation3 + $0xe8] sm:$0xff]
        %v4307 = vld [vmem:[#allocation3 + $0xf0] sm:$0xff]
        %v4308 = vld [vmem:[#allocation3 + $0xf8] sm:$0xff]
        %v4309 = vld [vmem:[%s222] sm:$0x1]
        %v4311 = vlaneseq
        %v4312 = vshrl.u32 %v4311, 7
        %v4313 = vsub.s32 0, %v4312
        %v4314 = vrot.slane %v4309, %v4313
        %v4316 = vadd.f32 %v4277, %v4314
        %v4317 = vadd.f32 %v4278, %v4314
        %v4318 = vadd.f32 %v4279, %v4314
        %v4319 = vadd.f32 %v4280, %v4314
        %v4320 = vadd.f32 %v4281, %v4314
        %v4321 = vadd.f32 %v4282, %v4314
        %v4322 = vadd.f32 %v4283, %v4314
        %v4323 = vadd.f32 %v4284, %v4314
        %v4324 = vadd.f32 %v4285, %v4314
        %v4325 = vadd.f32 %v4286, %v4314
        %v4326 = vadd.f32 %v4287, %v4314
        %v4327 = vadd.f32 %v4288, %v4314
        %v4328 = vadd.f32 %v4289, %v4314
        %v4329 = vadd.f32 %v4290, %v4314
        %v4330 = vadd.f32 %v4291, %v4314
        %v4331 = vadd.f32 %v4292, %v4314
        %v4332 = vadd.f32 %v4293, %v4314
        %v4333 = vadd.f32 %v4294, %v4314
        %v4334 = vadd.f32 %v4295, %v4314
        %v4335 = vadd.f32 %v4296, %v4314
        %v4336 = vadd.f32 %v4297, %v4314
        %v4337 = vadd.f32 %v4298, %v4314
        %v4338 = vadd.f32 %v4299, %v4314
        %v4339 = vadd.f32 %v4300, %v4314
        %v4340 = vadd.f32 %v4301, %v4314
        %v4341 = vadd.f32 %v4302, %v4314
        %v4342 = vadd.f32 %v4303, %v4314
        %v4343 = vadd.f32 %v4304, %v4314
        %v4344 = vadd.f32 %v4305, %v4314
        %v4345 = vadd.f32 %v4306, %v4314
        %v4346 = vadd.f32 %v4307, %v4314
        %v4347 = vadd.f32 %v4308, %v4314
        %v4348 = vmax.f32 %v4316, 0.0
        %v4349 = vmax.f32 %v4317, 0.0
        %v4350 = vmax.f32 %v4318, 0.0
        %v4351 = vmax.f32 %v4319, 0.0
        %v4352 = vmax.f32 %v4320, 0.0
        %v4353 = vmax.f32 %v4321, 0.0
        %v4354 = vmax.f32 %v4322, 0.0
        %v4355 = vmax.f32 %v4323, 0.0
        %v4356 = vmax.f32 %v4324, 0.0
        %v4357 = vmax.f32 %v4325, 0.0
        %v4358 = vmax.f32 %v4326, 0.0
        %v4359 = vmax.f32 %v4327, 0.0
        %v4360 = vmax.f32 %v4328, 0.0
        %v4361 = vmax.f32 %v4329, 0.0
        %v4362 = vmax.f32 %v4330, 0.0
        %v4363 = vmax.f32 %v4331, 0.0
        %v4364 = vmax.f32 %v4332, 0.0
        %v4365 = vmax.f32 %v4333, 0.0
        %v4366 = vmax.f32 %v4334, 0.0
        %v4367 = vmax.f32 %v4335, 0.0
        %v4368 = vmax.f32 %v4336, 0.0
        %v4369 = vmax.f32 %v4337, 0.0
        %v4370 = vmax.f32 %v4338, 0.0
        %v4371 = vmax.f32 %v4339, 0.0
        %v4372 = vmax.f32 %v4340, 0.0
        %v4373 = vmax.f32 %v4341, 0.0
        %v4374 = vmax.f32 %v4342, 0.0
        %v4375 = vmax.f32 %v4343, 0.0
        %v4376 = vmax.f32 %v4344, 0.0
        %v4377 = vmax.f32 %v4345, 0.0
        %v4378 = vmax.f32 %v4346, 0.0
        %v4379 = vmax.f32 %v4347, 0.0
        %v4380 = vpack.c.bf16 %v4349, %v4348
        %v4381 = vpack.c.bf16 %v4351, %v4350
        %v4382 = vpack.c.bf16 %v4353, %v4352
        %v4383 = vpack.c.bf16 %v4355, %v4354
        %v4384 = vpack.c.bf16 %v4357, %v4356
        %v4385 = vpack.c.bf16 %v4359, %v4358
        %v4386 = vpack.c.bf16 %v4361, %v4360
        %v4387 = vpack.c.bf16 %v4363, %v4362
        %v4388 = vpack.c.bf16 %v4365, %v4364
        %v4389 = vpack.c.bf16 %v4367, %v4366
        %v4390 = vpack.c.bf16 %v4369, %v4368
        %v4391 = vpack.c.bf16 %v4371, %v4370
        %v4392 = vpack.c.bf16 %v4373, %v4372
        %v4393 = vpack.c.bf16 %v4375, %v4374
        %v4394 = vpack.c.bf16 %v4377, %v4376
        %v4395 = vpack.c.bf16 %v4379, %v4378
        %v4412 = vunpack.c.l.b16 %v4380
        %v4413 = vunpack.c.h.b16 %v4380
        %v4414 = vunpack.c.l.b16 %v4381
        %v4415 = vunpack.c.h.b16 %v4381
        %v4416 = vunpack.c.l.b16 %v4382
        %v4417 = vunpack.c.h.b16 %v4382
        %v4418 = vunpack.c.l.b16 %v4383
        %v4419 = vunpack.c.h.b16 %v4383
        %v4420 = vunpack.c.l.b16 %v4384
        %v4421 = vunpack.c.h.b16 %v4384
        %v4422 = vunpack.c.l.b16 %v4385
        %v4423 = vunpack.c.h.b16 %v4385
        %v4424 = vunpack.c.l.b16 %v4386
        %v4425 = vunpack.c.h.b16 %v4386
        %v4426 = vunpack.c.l.b16 %v4387
        %v4427 = vunpack.c.h.b16 %v4387
        %v4428 = vunpack.c.l.b16 %v4388
        %v4429 = vunpack.c.h.b16 %v4388
        %v4430 = vunpack.c.l.b16 %v4389
        %v4431 = vunpack.c.h.b16 %v4389
        %v4432 = vunpack.c.l.b16 %v4390
        %v4433 = vunpack.c.h.b16 %v4390
        %v4434 = vunpack.c.l.b16 %v4391
        %v4435 = vunpack.c.h.b16 %v4391
        %v4436 = vunpack.c.l.b16 %v4392
        %v4437 = vunpack.c.h.b16 %v4392
        %v4438 = vunpack.c.l.b16 %v4393
        %v4439 = vunpack.c.h.b16 %v4393
        %v4440 = vunpack.c.l.b16 %v4394
        %v4441 = vunpack.c.h.b16 %v4394
        %v4442 = vunpack.c.l.b16 %v4395
        %v4443 = vunpack.c.h.b16 %v4395
        %v4444 = vpack.c.b16 %v4412, %v4412
        %v4445 = vpack.c.b16 %v4413, %v4413
        %v4446 = vpack.c.b16 %v4414, %v4414
        %v4447 = vpack.c.b16 %v4415, %v4415
        %v4448 = vpack.c.b16 %v4416, %v4416
        %v4449 = vpack.c.b16 %v4417, %v4417
        %v4450 = vpack.c.b16 %v4418, %v4418
        %v4451 = vpack.c.b16 %v4419, %v4419
        %v4452 = vpack.c.b16 %v4420, %v4420
        %v4453 = vpack.c.b16 %v4421, %v4421
        %v4454 = vpack.c.b16 %v4422, %v4422
        %v4455 = vpack.c.b16 %v4423, %v4423
        %v4456 = vpack.c.b16 %v4424, %v4424
        %v4457 = vpack.c.b16 %v4425, %v4425
        %v4458 = vpack.c.b16 %v4426, %v4426
        %v4459 = vpack.c.b16 %v4427, %v4427
        %v4460 = vpack.c.b16 %v4428, %v4428
        %v4461 = vpack.c.b16 %v4429, %v4429
        %v4462 = vpack.c.b16 %v4430, %v4430
        %v4463 = vpack.c.b16 %v4431, %v4431
        %v4464 = vpack.c.b16 %v4432, %v4432
        %v4465 = vpack.c.b16 %v4433, %v4433
        %v4466 = vpack.c.b16 %v4434, %v4434
        %v4467 = vpack.c.b16 %v4435, %v4435
        %v4468 = vpack.c.b16 %v4436, %v4436
        %v4469 = vpack.c.b16 %v4437, %v4437
        %v4470 = vpack.c.b16 %v4438, %v4438
        %v4471 = vpack.c.b16 %v4439, %v4439
        %v4472 = vpack.c.b16 %v4440, %v4440
        %v4473 = vpack.c.b16 %v4441, %v4441
        %v4474 = vpack.c.b16 %v4442, %v4442
        %v4475 = vpack.c.b16 %v4443, %v4443
        %4508 = vst [vmem:[%s210] sm:$0xf] %v4444
        %4509 = vst [vmem:[%s210 + $0x4] sm:$0xf] %v4445
        %4510 = vst [vmem:[%s210 + $0x8] sm:$0xf] %v4446
        %4511 = vst [vmem:[%s210 + $0xc] sm:$0xf] %v4447
        %4512 = vst [vmem:[%s210 + $0x10] sm:$0xf] %v4448
        %4513 = vst [vmem:[%s210 + $0x14] sm:$0xf] %v4449
        %4514 = vst [vmem:[%s210 + $0x18] sm:$0xf] %v4450
        %4515 = vst [vmem:[%s210 + $0x1c] sm:$0xf] %v4451
        %4516 = vst [vmem:[%s210 + $0x20] sm:$0xf] %v4452
        %4517 = vst [vmem:[%s210 + $0x24] sm:$0xf] %v4453
        %4518 = vst [vmem:[%s210 + $0x28] sm:$0xf] %v4454
        %4519 = vst [vmem:[%s210 + $0x2c] sm:$0xf] %v4455
        %4520 = vst [vmem:[%s210 + $0x30] sm:$0xf] %v4456
        %4521 = vst [vmem:[%s210 + $0x34] sm:$0xf] %v4457
        %4522 = vst [vmem:[%s210 + $0x38] sm:$0xf] %v4458
        %4523 = vst [vmem:[%s210 + $0x3c] sm:$0xf] %v4459
        %4524 = vst [vmem:[%s210 + $0x40] sm:$0xf] %v4460
        %4525 = vst [vmem:[%s210 + $0x44] sm:$0xf] %v4461
        %4526 = vst [vmem:[%s210 + $0x48] sm:$0xf] %v4462
        %4527 = vst [vmem:[%s210 + $0x4c] sm:$0xf] %v4463
        %4528 = vst [vmem:[%s210 + $0x50] sm:$0xf] %v4464
        %4529 = vst [vmem:[%s210 + $0x54] sm:$0xf] %v4465
        %4530 = vst [vmem:[%s210 + $0x58] sm:$0xf] %v4466
        %4531 = vst [vmem:[%s210 + $0x5c] sm:$0xf] %v4467
        %4532 = vst [vmem:[%s210 + $0x60] sm:$0xf] %v4468
        %4533 = vst [vmem:[%s210 + $0x64] sm:$0xf] %v4469
        %4534 = vst [vmem:[%s210 + $0x68] sm:$0xf] %v4470
        %4535 = vst [vmem:[%s210 + $0x6c] sm:$0xf] %v4471
        %4536 = vst [vmem:[%s210 + $0x70] sm:$0xf] %v4472
        %4537 = vst [vmem:[%s210 + $0x74] sm:$0xf] %v4473
        %4538 = vst [vmem:[%s210 + $0x78] sm:$0xf] %v4474
        %4539 = vst [vmem:[%s210 + $0x7c] sm:$0xf] %v4475
        %s4540 = sand.u32 %s126, 1
        %s4541 = scalar_lea.sflag [#allocation5], %s4540
        %s4542 = sand.u32 %s126, 1
        %s4543 = smul.addr %s4542, 128
        %s4544 = scalar_lea.vmem [#allocation4], %s4543
        // Predicated region
        $region33: #{tpu_custom_call.1} parent=31 // pred_check
          %p4545 = pneg %p136
        $region34: #{tpu_custom_call.1} parent=31 // pred_check_branch
          %4547 = sbr.rel (%p4545) target = $region36
        $region35: #{tpu_custom_call.1} parent=31 // pred_region
          %s4548 = smul.u32 32, %s24
          %s4550 = ssub.s32 2048, 2048
          %4551 = vsyncadd %s4541, %s4550
          %s4552 = sadd.s32 %s22, %s4548
          %s4553 = smul.addr %s23, 32
          %s4554 = sadd.s32 %s4552, %s4553
          %s4555 = smul.addr %s4554, 64
          %s4556 = scalar_lea.hbm %s3, %s4555
          %s4557 = sshll.u32 %s4544, 4
          %s4558 = int_to_ptr.vmem [resolvable:$true] %s4557
          %4563 = dma.vmem_to_hbm [thread:$0]  %s4558, 2048, %s4556, %s4541, 64, 64, 4
        $region36: #{tpu_custom_call.1} parent=31 // pred_fallthru
          _
      $region32: #{tpu_custom_call.1} parent=5 // pred_fallthru
        _
      %p4564 = scmp.le.s32.totalorder 2, %s12
      // Predicated region
      $region37: #{tpu_custom_call.1} parent=5 // pred_check
        %p4565 = pneg %p4564
      $region38: #{tpu_custom_call.1} parent=5 // pred_check_branch
        %4567 = sbr.rel (%p4565) target = $region40
      $region39: #{tpu_custom_call.1} parent=5 // pred_region
        %s4568 = ssub.s32 %s12, 2
        // Predicated region
        $region41: #{tpu_custom_call.1} parent=39 // pred_check
          %p4569 = pneg %p142
        $region42: #{tpu_custom_call.1} parent=39 // pred_check_branch
          %4571 = sbr.rel (%p4569) target = $region44
        $region43: #{tpu_custom_call.1} parent=39 // pred_region
          %s4572 = sand.u32 %s127, 1
          %s4573 = scalar_lea.sflag [#allocation5], %s4572
          %s4574 = sand.u32 %s127, 1
          %s4575 = smul.addr %s4574, 128
          %s4576 = scalar_lea.vmem [#allocation4], %s4575
          %4577 = dma.done %s4573, 2048
        $region44: #{tpu_custom_call.1} parent=39 // pred_fallthru
          _
      $region40: #{tpu_custom_call.1} parent=5 // pred_fallthru
        _
    $region6: #{tpu_custom_call.1} parent=1 // loop_footer
      %s16 = sadd.s32 1, %s12
    $region7: #{tpu_custom_call.1} parent=1 // loop_footer_branch
      %11 = sbr.rel target = $region3
    $region8: #{tpu_custom_call.1} parent=1 // loop_exit
      _
    %4578 = vsyncpa [#allocation5], 1
    %s4579 = scalar_lea.sflag [#allocation5], 1
    %4580 = vsyncpa %s4579, 1

</llo_original>
